<compile_context>
chip_gen: v6e
topology: v6e:2x2x1
jax: 0.10.0
libtpu: 0.0.40
codegen_flags: <defaults>
</compile_context>

<pallas_src>
import jax
import jax.numpy as jnp
from jax import lax
from jax.experimental import pallas as pl
from jax.experimental.pallas import tpu as pltpu


# ---------------------------------------------------------------------------
# Fused kernel: maxpool2x2 -> conv3x3+BN+ReLU -> conv3x3+BN+ReLU
# ---------------------------------------------------------------------------
def down_fused_kernel(x_ref, w1_ref, s1_ref, b1_ref, w2_ref, s2_ref, b2_ref,
                      o_ref, xp1_ref, xp2_ref, acc1_ref, acc2_ref):
    # x_ref  : (1, Ho, 2, Wo, 2, Cin)  pooling windows pre-exposed (free regroup)
    # w*_ref : (3, 3, Cin, Cout)       HWIO weights
    # s*/b*  : (1, C)                  folded BN scale / shift (incl. conv bias)
    # o_ref  : (1, Ho, Wo, Cout)
    # xp*_ref: zero-padded conv inputs held in VMEM scratch
    # acc*_ref: f32 conv accumulators in VMEM scratch
    _, Ho, _, Wo, _, Cin = x_ref.shape
    Cmid = w1_ref.shape[-1]
    Cout = w2_ref.shape[-1]

    # ---- 2x2 max-pool on the already-loaded block (VPU) --------------------
    v = x_ref[0]                                    # (Ho, 2, Wo, 2, Cin)
    m = jnp.maximum(v[:, 0], v[:, 1])               # (Ho, Wo, 2, Cin)
    pooled = jnp.maximum(m[:, :, 0], m[:, :, 1])    # (Ho, Wo, Cin)

    def conv3x3_acc(xp_ref, w_ref, acc_ref, cin):
        # 3x3 "same" conv as 9 shifted MXU matmuls accumulated in VMEM scratch.
        acc_ref[...] = jnp.zeros_like(acc_ref)
        for ky in range(3):
            for kx in range(3):
                tap = xp_ref[ky:ky + Ho, kx:kx + Wo, :].reshape(Ho * Wo, cin)
                acc_ref[...] += jnp.dot(tap, w_ref[ky, kx],
                                        preferred_element_type=jnp.float32)
        return acc_ref[...]

    # ---- conv1 + BN + ReLU (zero-pad in VMEM scratch, not in HBM) ----------
    xp1_ref[...] = jnp.zeros_like(xp1_ref)
    xp1_ref[1:Ho + 1, 1:Wo + 1, :] = pooled
    y1 = conv3x3_acc(xp1_ref, w1_ref, acc1_ref, Cin)
    y1 = jnp.maximum(y1 * s1_ref[...] + b1_ref[...], 0.0)        # (Ho*Wo, Cmid)

    # ---- conv2 + BN + ReLU (mid activation never leaves VMEM) --------------
    xp2_ref[...] = jnp.zeros_like(xp2_ref)
    xp2_ref[1:Ho + 1, 1:Wo + 1, :] = y1.reshape(Ho, Wo, Cmid)
    y2 = conv3x3_acc(xp2_ref, w2_ref, acc2_ref, Cmid)
    y2 = jnp.maximum(y2 * s2_ref[...] + b2_ref[...], 0.0)        # (Ho*Wo, Cout)

    o_ref[0] = y2.reshape(Ho, Wo, Cout).astype(o_ref.dtype)


# ---------------------------------------------------------------------------
# Wrapper
# ---------------------------------------------------------------------------
def down_forward(x_nchw, params):
    """Pallas implementation of Down.forward. Input/output are NCHW."""
    N, Cin, H, W = x_nchw.shape
    assert H % 2 == 0 and W % 2 == 0, "even spatial dims expected for MaxPool2d(2)"
    Ho, Wo = H // 2, W // 2
    Cmid = params["w1"].shape[-1]
    Cout = params["w2"].shape[-1]

    # NCHW -> NHWC, then a free row-major regrouping (no data movement) that
    # exposes the 2x2 pooling windows as separate dims for the in-kernel pool.
    x = jnp.transpose(x_nchw, (0, 2, 3, 1)).reshape(N, Ho, 2, Wo, 2, Cin)

    out = pl.pallas_call(
        down_fused_kernel,
        out_shape=jax.ShapeDtypeStruct((N, Ho, Wo, Cout), jnp.float32),
        grid_spec=pltpu.PrefetchScalarGridSpec(
            num_scalar_prefetch=0,
            grid=(N,),
            in_specs=[
                pl.BlockSpec((1, Ho, 2, Wo, 2, Cin),
                             lambda n: (n, 0, 0, 0, 0, 0)),
                pl.BlockSpec((3, 3, Cin, Cmid), lambda n: (0, 0, 0, 0)),
                pl.BlockSpec((1, Cmid), lambda n: (0, 0)),
                pl.BlockSpec((1, Cmid), lambda n: (0, 0)),
                pl.BlockSpec((3, 3, Cmid, Cout), lambda n: (0, 0, 0, 0)),
                pl.BlockSpec((1, Cout), lambda n: (0, 0)),
                pl.BlockSpec((1, Cout), lambda n: (0, 0)),
            ],
            out_specs=pl.BlockSpec((1, Ho, Wo, Cout), lambda n: (n, 0, 0, 0)),
            scratch_shapes=[
                pltpu.VMEM((Ho + 2, Wo + 2, Cin), jnp.float32),   # padded pool
                pltpu.VMEM((Ho + 2, Wo + 2, Cmid), jnp.float32),  # padded mid
                pltpu.VMEM((Ho * Wo, Cmid), jnp.float32),         # conv1 acc
                pltpu.VMEM((Ho * Wo, Cout), jnp.float32),         # conv2 acc
            ],
        ),
        compiler_params=pltpu.CompilerParams(
            dimension_semantics=("parallel",),        # 2 TCs on v7x
            vmem_limit_bytes=32 * 1024 * 1024,        # safe on v5e/v6e/v7x
        ),
    )(x, params["w1"], params["scale1"], params["shift1"],
      params["w2"], params["scale2"], params["shift2"])

    return jnp.transpose(out, (0, 3, 1, 2))           # NHWC -> NCHW


# ---------------------------------------------------------------------------
# Parameters (conv weights + eval-mode BN folded to scale/shift)
# ---------------------------------------------------------------------------
def make_params(key, in_channels, out_channels):
    mid_channels = out_channels
    k1, k2, k3, k4 = jax.random.split(key, 4)
    eps = 1e-5

    def conv_bn(kw, kb, cin, cout):
        w = 0.1 * jax.random.normal(kw, (3, 3, cin, cout), jnp.float32)  # HWIO
        b = 0.1 * jax.random.normal(kb, (cout,), jnp.float32)
        gamma = jnp.ones((cout,), jnp.float32)
        beta = jnp.zeros((cout,), jnp.float32)
        running_mean = jnp.zeros((cout,), jnp.float32)
        running_var = jnp.ones((cout,), jnp.float32)
        scale = gamma / jnp.sqrt(running_var + eps)
        shift = beta + (b - running_mean) * scale
        return w, scale.reshape(1, cout), shift.reshape(1, cout)

    w1, s1, sh1 = conv_bn(k1, k2, in_channels, mid_channels)
    w2, s2, sh2 = conv_bn(k3, k4, mid_channels, out_channels)
    return dict(w1=w1, scale1=s1, shift1=sh1, w2=w2, scale2=s2, shift2=sh2)


# ---------------------------------------------------------------------------
# Pure-JAX reference for correctness checking
# ---------------------------------------------------------------------------
def ref_forward(x_nchw, params):
    x = jnp.transpose(x_nchw, (0, 2, 3, 1))
    x = lax.reduce_window(x, -jnp.inf, lax.max,
                          (1, 2, 2, 1), (1, 2, 2, 1), "VALID")

    def cbr(x, w, scale, shift):
        y = lax.conv_general_dilated(
            x, w, window_strides=(1, 1), padding="SAME",
            dimension_numbers=("NHWC", "HWIO", "NHWC"))
        return jnp.maximum(y * scale + shift, 0.0)

    x = cbr(x, params["w1"], params["scale1"], params["shift1"])
    x = cbr(x, params["w2"], params["scale2"], params["shift2"])
    return jnp.transpose(x, (0, 3, 1, 2))


if __name__ == "__main__":
    in_channels, out_channels = 4, 8
    key = jax.random.PRNGKey(0)
    kx, kp = jax.random.split(key)
    x = jax.random.normal(kx, (2, in_channels, 16, 16), jnp.float32)  # NCHW
    params = make_params(kp, in_channels, out_channels)

    out = down_forward(x, params)
    out = jax.block_until_ready(out)

    ref = ref_forward(x, params)
    assert out.shape == (2, out_channels, 8, 8), out.shape
    assert jnp.max(jnp.abs(out - ref)) < 1e-4, float(jnp.max(jnp.abs(out - ref)))

    print("KERNEL_OK")
</pallas_src>

<mosaic_0001>
module attributes {stable_mosaic.version = 11 : i64} {
  func.func @down_fused_kernel(%arg0: i32, %arg1: memref<1x8x2x8x2x4xf32, #tpu.memory_space<vmem>>, %arg2: memref<3x3x4x8xf32, #tpu.memory_space<vmem>>, %arg3: memref<1x8xf32, #tpu.memory_space<vmem>>, %arg4: memref<1x8xf32, #tpu.memory_space<vmem>>, %arg5: memref<3x3x8x8xf32, #tpu.memory_space<vmem>>, %arg6: memref<1x8xf32, #tpu.memory_space<vmem>>, %arg7: memref<1x8xf32, #tpu.memory_space<vmem>>, %arg8: memref<1x8x8x8xf32, #tpu.memory_space<vmem>>, %arg9: memref<10x10x4xf32, #tpu.memory_space<vmem>>, %arg10: memref<10x10x8xf32, #tpu.memory_space<vmem>>, %arg11: memref<64x8xf32, #tpu.memory_space<vmem>>, %arg12: memref<64x8xf32, #tpu.memory_space<vmem>>) attributes {dimension_semantics = [#tpu.dimension_semantics<parallel>], iteration_bounds = array<i64: 2>, scalar_prefetch = 0 : i64, scratch_operands = 4 : i64, tpu.core_type = #tpu.core_type<tc>, window_params = [{transform_indices = @transform_0, window_bounds = array<i64: 1, 8, 2, 8, 2, 4>}, {pipeline_mode = #tpu.pipeline_mode<synchronous>, transform_indices = @transform_1, window_bounds = array<i64: 3, 3, 4, 8>}, {pipeline_mode = #tpu.pipeline_mode<synchronous>, transform_indices = @transform_2, window_bounds = array<i64: 1, 8>}, {pipeline_mode = #tpu.pipeline_mode<synchronous>, transform_indices = @transform_3, window_bounds = array<i64: 1, 8>}, {pipeline_mode = #tpu.pipeline_mode<synchronous>, transform_indices = @transform_4, window_bounds = array<i64: 3, 3, 8, 8>}, {pipeline_mode = #tpu.pipeline_mode<synchronous>, transform_indices = @transform_5, window_bounds = array<i64: 1, 8>}, {pipeline_mode = #tpu.pipeline_mode<synchronous>, transform_indices = @transform_6, window_bounds = array<i64: 1, 8>}, {transform_indices = @transform_7, window_bounds = array<i64: 1, 8, 8, 8>}]} {
    %c0 = arith.constant 0 : index
    %c0_0 = arith.constant 0 : index
    %c0_1 = arith.constant 0 : index
    %c0_2 = arith.constant 0 : index
    %c0_3 = arith.constant 0 : index
    %c0_4 = arith.constant 0 : index
    %0 = vector.load %arg1[%c0, %c0_0, %c0_1, %c0_2, %c0_3, %c0_4] : memref<1x8x2x8x2x4xf32, #tpu.memory_space<vmem>>, vector<1x8x2x8x2x4xf32>
    %1 = vector.shape_cast %0 : vector<1x8x2x8x2x4xf32> to vector<8x2x8x2x4xf32>
    %2 = vector.extract_strided_slice %1 {offsets = [0, 0, 0, 0, 0], sizes = [8, 1, 8, 2, 4], strides = [1, 1, 1, 1, 1]} : vector<8x2x8x2x4xf32> to vector<8x1x8x2x4xf32>
    %3 = vector.shape_cast %2 : vector<8x1x8x2x4xf32> to vector<8x8x2x4xf32>
    %4 = vector.extract_strided_slice %1 {offsets = [0, 1, 0, 0, 0], sizes = [8, 1, 8, 2, 4], strides = [1, 1, 1, 1, 1]} : vector<8x2x8x2x4xf32> to vector<8x1x8x2x4xf32>
    %5 = vector.shape_cast %4 : vector<8x1x8x2x4xf32> to vector<8x8x2x4xf32>
    %6 = arith.maximumf %3, %5 : vector<8x8x2x4xf32>
    %7 = vector.extract_strided_slice %6 {offsets = [0, 0, 0, 0], sizes = [8, 8, 1, 4], strides = [1, 1, 1, 1]} : vector<8x8x2x4xf32> to vector<8x8x1x4xf32>
    %8 = vector.shape_cast %7 : vector<8x8x1x4xf32> to vector<8x8x4xf32>
    %9 = vector.extract_strided_slice %6 {offsets = [0, 0, 1, 0], sizes = [8, 8, 1, 4], strides = [1, 1, 1, 1]} : vector<8x8x2x4xf32> to vector<8x8x1x4xf32>
    %10 = vector.shape_cast %9 : vector<8x8x1x4xf32> to vector<8x8x4xf32>
    %11 = arith.maximumf %8, %10 : vector<8x8x4xf32>
    %cst = arith.constant 0.000000e+00 : f32
    %12 = vector.broadcast %cst : f32 to vector<10x10x4xf32>
    %c0_5 = arith.constant 0 : index
    %c0_6 = arith.constant 0 : index
    %c0_7 = arith.constant 0 : index
    %13 = vector.load %arg9[%c0_5, %c0_6, %c0_7] : memref<10x10x4xf32, #tpu.memory_space<vmem>>, vector<10x10x4xf32>
    tpu.vector_store %arg9[%c0_5, %c0_6, %c0_7], %12 {strides = array<i32>} : memref<10x10x4xf32, #tpu.memory_space<vmem>>, vector<10x10x4xf32>,
    %c1 = arith.constant 1 : index
    %c1_8 = arith.constant 1 : index
    %c0_9 = arith.constant 0 : index
    %14 = vector.load %arg9[%c1, %c1_8, %c0_9] : memref<10x10x4xf32, #tpu.memory_space<vmem>>, vector<8x8x4xf32>
    tpu.vector_store %arg9[%c1, %c1_8, %c0_9], %11 {strides = array<i32>} : memref<10x10x4xf32, #tpu.memory_space<vmem>>, vector<8x8x4xf32>,
    %cst_10 = arith.constant 0.000000e+00 : f32
    %15 = vector.broadcast %cst_10 : f32 to vector<64x8xf32>
    %c0_11 = arith.constant 0 : index
    %c0_12 = arith.constant 0 : index
    %16 = vector.load %arg11[%c0_11, %c0_12] : memref<64x8xf32, #tpu.memory_space<vmem>>, vector<64x8xf32>
    tpu.vector_store %arg11[%c0_11, %c0_12], %15 {strides = array<i32>} : memref<64x8xf32, #tpu.memory_space<vmem>>, vector<64x8xf32>,
    %c0_13 = arith.constant 0 : index
    %c0_14 = arith.constant 0 : index
    %c0_15 = arith.constant 0 : index
    %17 = vector.load %arg9[%c0_13, %c0_14, %c0_15] : memref<10x10x4xf32, #tpu.memory_space<vmem>>, vector<8x8x4xf32>
    %18 = vector.shape_cast %17 : vector<8x8x4xf32> to vector<64x4xf32>
    %c0_16 = arith.constant 0 : index
    %c0_17 = arith.constant 0 : index
    %19 = vector.load %arg11[%c0_16, %c0_17] : memref<64x8xf32, #tpu.memory_space<vmem>>, vector<64x8xf32>
    %c0_18 = arith.constant 0 : index
    %c0_19 = arith.constant 0 : index
    %c0_20 = arith.constant 0 : index
    %c0_21 = arith.constant 0 : index
    %20 = vector.load %arg2[%c0_18, %c0_19, %c0_20, %c0_21] : memref<3x3x4x8xf32, #tpu.memory_space<vmem>>, vector<1x1x4x8xf32>
    %21 = vector.shape_cast %20 : vector<1x1x4x8xf32> to vector<4x8xf32>
    %cst_22 = arith.constant dense<0.000000e+00> : vector<64x8xf32>
    %22 = tpu.matmul %18, %21, %cst_22 {dimension_numbers = #tpu.dot_dimension_numbers<[1], [0], [0], [1], [0, 0, 1, 1], [], []>} : vector<64x4xf32>, vector<4x8xf32>, vector<64x8xf32> -> vector<64x8xf32>
    %23 = arith.addf %19, %22 : vector<64x8xf32>
    %c0_23 = arith.constant 0 : index
    %c0_24 = arith.constant 0 : index
    %24 = vector.load %arg11[%c0_23, %c0_24] : memref<64x8xf32, #tpu.memory_space<vmem>>, vector<64x8xf32>
    tpu.vector_store %arg11[%c0_23, %c0_24], %23 {strides = array<i32>} : memref<64x8xf32, #tpu.memory_space<vmem>>, vector<64x8xf32>,
    %c0_25 = arith.constant 0 : index
    %c1_26 = arith.constant 1 : index
    %c0_27 = arith.constant 0 : index
    %25 = vector.load %arg9[%c0_25, %c1_26, %c0_27] : memref<10x10x4xf32, #tpu.memory_space<vmem>>, vector<8x8x4xf32>
    %26 = vector.shape_cast %25 : vector<8x8x4xf32> to vector<64x4xf32>
    %c0_28 = arith.constant 0 : index
    %c0_29 = arith.constant 0 : index
    %27 = vector.load %arg11[%c0_28, %c0_29] : memref<64x8xf32, #tpu.memory_space<vmem>>, vector<64x8xf32>
    %c0_30 = arith.constant 0 : index
    %c1_31 = arith.constant 1 : index
    %c0_32 = arith.constant 0 : index
    %c0_33 = arith.constant 0 : index
    %28 = vector.load %arg2[%c0_30, %c1_31, %c0_32, %c0_33] : memref<3x3x4x8xf32, #tpu.memory_space<vmem>>, vector<1x1x4x8xf32>
    %29 = vector.shape_cast %28 : vector<1x1x4x8xf32> to vector<4x8xf32>
    %cst_34 = arith.constant dense<0.000000e+00> : vector<64x8xf32>
    %30 = tpu.matmul %26, %29, %cst_34 {dimension_numbers = #tpu.dot_dimension_numbers<[1], [0], [0], [1], [0, 0, 1, 1], [], []>} : vector<64x4xf32>, vector<4x8xf32>, vector<64x8xf32> -> vector<64x8xf32>
    %31 = arith.addf %27, %30 : vector<64x8xf32>
    %c0_35 = arith.constant 0 : index
    %c0_36 = arith.constant 0 : index
    %32 = vector.load %arg11[%c0_35, %c0_36] : memref<64x8xf32, #tpu.memory_space<vmem>>, vector<64x8xf32>
    tpu.vector_store %arg11[%c0_35, %c0_36], %31 {strides = array<i32>} : memref<64x8xf32, #tpu.memory_space<vmem>>, vector<64x8xf32>,
    %c0_37 = arith.constant 0 : index
    %c2 = arith.constant 2 : index
    %c0_38 = arith.constant 0 : index
    %33 = vector.load %arg9[%c0_37, %c2, %c0_38] : memref<10x10x4xf32, #tpu.memory_space<vmem>>, vector<8x8x4xf32>
    %34 = vector.shape_cast %33 : vector<8x8x4xf32> to vector<64x4xf32>
    %c0_39 = arith.constant 0 : index
    %c0_40 = arith.constant 0 : index
    %35 = vector.load %arg11[%c0_39, %c0_40] : memref<64x8xf32, #tpu.memory_space<vmem>>, vector<64x8xf32>
    %c0_41 = arith.constant 0 : index
    %c2_42 = arith.constant 2 : index
    %c0_43 = arith.constant 0 : index
    %c0_44 = arith.constant 0 : index
    %36 = vector.load %arg2[%c0_41, %c2_42, %c0_43, %c0_44] : memref<3x3x4x8xf32, #tpu.memory_space<vmem>>, vector<1x1x4x8xf32>
    %37 = vector.shape_cast %36 : vector<1x1x4x8xf32> to vector<4x8xf32>
    %cst_45 = arith.constant dense<0.000000e+00> : vector<64x8xf32>
    %38 = tpu.matmul %34, %37, %cst_45 {dimension_numbers = #tpu.dot_dimension_numbers<[1], [0], [0], [1], [0, 0, 1, 1], [], []>} : vector<64x4xf32>, vector<4x8xf32>, vector<64x8xf32> -> vector<64x8xf32>
    %39 = arith.addf %35, %38 : vector<64x8xf32>
    %c0_46 = arith.constant 0 : index
    %c0_47 = arith.constant 0 : index
    %40 = vector.load %arg11[%c0_46, %c0_47] : memref<64x8xf32, #tpu.memory_space<vmem>>, vector<64x8xf32>
    tpu.vector_store %arg11[%c0_46, %c0_47], %39 {strides = array<i32>} : memref<64x8xf32, #tpu.memory_space<vmem>>, vector<64x8xf32>,
    %c1_48 = arith.constant 1 : index
    %c0_49 = arith.constant 0 : index
    %c0_50 = arith.constant 0 : index
    %41 = vector.load %arg9[%c1_48, %c0_49, %c0_50] : memref<10x10x4xf32, #tpu.memory_space<vmem>>, vector<8x8x4xf32>
    %42 = vector.shape_cast %41 : vector<8x8x4xf32> to vector<64x4xf32>
    %c0_51 = arith.constant 0 : index
    %c0_52 = arith.constant 0 : index
    %43 = vector.load %arg11[%c0_51, %c0_52] : memref<64x8xf32, #tpu.memory_space<vmem>>, vector<64x8xf32>
    %c1_53 = arith.constant 1 : index
    %c0_54 = arith.constant 0 : index
    %c0_55 = arith.constant 0 : index
    %c0_56 = arith.constant 0 : index
    %44 = vector.load %arg2[%c1_53, %c0_54, %c0_55, %c0_56] : memref<3x3x4x8xf32, #tpu.memory_space<vmem>>, vector<1x1x4x8xf32>
    %45 = vector.shape_cast %44 : vector<1x1x4x8xf32> to vector<4x8xf32>
    %cst_57 = arith.constant dense<0.000000e+00> : vector<64x8xf32>
    %46 = tpu.matmul %42, %45, %cst_57 {dimension_numbers = #tpu.dot_dimension_numbers<[1], [0], [0], [1], [0, 0, 1, 1], [], []>} : vector<64x4xf32>, vector<4x8xf32>, vector<64x8xf32> -> vector<64x8xf32>
    %47 = arith.addf %43, %46 : vector<64x8xf32>
    %c0_58 = arith.constant 0 : index
    %c0_59 = arith.constant 0 : index
    %48 = vector.load %arg11[%c0_58, %c0_59] : memref<64x8xf32, #tpu.memory_space<vmem>>, vector<64x8xf32>
    tpu.vector_store %arg11[%c0_58, %c0_59], %47 {strides = array<i32>} : memref<64x8xf32, #tpu.memory_space<vmem>>, vector<64x8xf32>,
    %c1_60 = arith.constant 1 : index
    %c1_61 = arith.constant 1 : index
    %c0_62 = arith.constant 0 : index
    %49 = vector.load %arg9[%c1_60, %c1_61, %c0_62] : memref<10x10x4xf32, #tpu.memory_space<vmem>>, vector<8x8x4xf32>
    %50 = vector.shape_cast %49 : vector<8x8x4xf32> to vector<64x4xf32>
    %c0_63 = arith.constant 0 : index
    %c0_64 = arith.constant 0 : index
    %51 = vector.load %arg11[%c0_63, %c0_64] : memref<64x8xf32, #tpu.memory_space<vmem>>, vector<64x8xf32>
    %c1_65 = arith.constant 1 : index
    %c1_66 = arith.constant 1 : index
    %c0_67 = arith.constant 0 : index
    %c0_68 = arith.constant 0 : index
    %52 = vector.load %arg2[%c1_65, %c1_66, %c0_67, %c0_68] : memref<3x3x4x8xf32, #tpu.memory_space<vmem>>, vector<1x1x4x8xf32>
    %53 = vector.shape_cast %52 : vector<1x1x4x8xf32> to vector<4x8xf32>
    %cst_69 = arith.constant dense<0.000000e+00> : vector<64x8xf32>
    %54 = tpu.matmul %50, %53, %cst_69 {dimension_numbers = #tpu.dot_dimension_numbers<[1], [0], [0], [1], [0, 0, 1, 1], [], []>} : vector<64x4xf32>, vector<4x8xf32>, vector<64x8xf32> -> vector<64x8xf32>
    %55 = arith.addf %51, %54 : vector<64x8xf32>
    %c0_70 = arith.constant 0 : index
    %c0_71 = arith.constant 0 : index
    %56 = vector.load %arg11[%c0_70, %c0_71] : memref<64x8xf32, #tpu.memory_space<vmem>>, vector<64x8xf32>
    tpu.vector_store %arg11[%c0_70, %c0_71], %55 {strides = array<i32>} : memref<64x8xf32, #tpu.memory_space<vmem>>, vector<64x8xf32>,
    %c1_72 = arith.constant 1 : index
    %c2_73 = arith.constant 2 : index
    %c0_74 = arith.constant 0 : index
    %57 = vector.load %arg9[%c1_72, %c2_73, %c0_74] : memref<10x10x4xf32, #tpu.memory_space<vmem>>, vector<8x8x4xf32>
    %58 = vector.shape_cast %57 : vector<8x8x4xf32> to vector<64x4xf32>
    %c0_75 = arith.constant 0 : index
    %c0_76 = arith.constant 0 : index
    %59 = vector.load %arg11[%c0_75, %c0_76] : memref<64x8xf32, #tpu.memory_space<vmem>>, vector<64x8xf32>
    %c1_77 = arith.constant 1 : index
    %c2_78 = arith.constant 2 : index
    %c0_79 = arith.constant 0 : index
    %c0_80 = arith.constant 0 : index
    %60 = vector.load %arg2[%c1_77, %c2_78, %c0_79, %c0_80] : memref<3x3x4x8xf32, #tpu.memory_space<vmem>>, vector<1x1x4x8xf32>
    %61 = vector.shape_cast %60 : vector<1x1x4x8xf32> to vector<4x8xf32>
    %cst_81 = arith.constant dense<0.000000e+00> : vector<64x8xf32>
    %62 = tpu.matmul %58, %61, %cst_81 {dimension_numbers = #tpu.dot_dimension_numbers<[1], [0], [0], [1], [0, 0, 1, 1], [], []>} : vector<64x4xf32>, vector<4x8xf32>, vector<64x8xf32> -> vector<64x8xf32>
    %63 = arith.addf %59, %62 : vector<64x8xf32>
    %c0_82 = arith.constant 0 : index
    %c0_83 = arith.constant 0 : index
    %64 = vector.load %arg11[%c0_82, %c0_83] : memref<64x8xf32, #tpu.memory_space<vmem>>, vector<64x8xf32>
    tpu.vector_store %arg11[%c0_82, %c0_83], %63 {strides = array<i32>} : memref<64x8xf32, #tpu.memory_space<vmem>>, vector<64x8xf32>,
    %c2_84 = arith.constant 2 : index
    %c0_85 = arith.constant 0 : index
    %c0_86 = arith.constant 0 : index
    %65 = vector.load %arg9[%c2_84, %c0_85, %c0_86] : memref<10x10x4xf32, #tpu.memory_space<vmem>>, vector<8x8x4xf32>
    %66 = vector.shape_cast %65 : vector<8x8x4xf32> to vector<64x4xf32>
    %c0_87 = arith.constant 0 : index
    %c0_88 = arith.constant 0 : index
    %67 = vector.load %arg11[%c0_87, %c0_88] : memref<64x8xf32, #tpu.memory_space<vmem>>, vector<64x8xf32>
    %c2_89 = arith.constant 2 : index
    %c0_90 = arith.constant 0 : index
    %c0_91 = arith.constant 0 : index
    %c0_92 = arith.constant 0 : index
    %68 = vector.load %arg2[%c2_89, %c0_90, %c0_91, %c0_92] : memref<3x3x4x8xf32, #tpu.memory_space<vmem>>, vector<1x1x4x8xf32>
    %69 = vector.shape_cast %68 : vector<1x1x4x8xf32> to vector<4x8xf32>
    %cst_93 = arith.constant dense<0.000000e+00> : vector<64x8xf32>
    %70 = tpu.matmul %66, %69, %cst_93 {dimension_numbers = #tpu.dot_dimension_numbers<[1], [0], [0], [1], [0, 0, 1, 1], [], []>} : vector<64x4xf32>, vector<4x8xf32>, vector<64x8xf32> -> vector<64x8xf32>
    %71 = arith.addf %67, %70 : vector<64x8xf32>
    %c0_94 = arith.constant 0 : index
    %c0_95 = arith.constant 0 : index
    %72 = vector.load %arg11[%c0_94, %c0_95] : memref<64x8xf32, #tpu.memory_space<vmem>>, vector<64x8xf32>
    tpu.vector_store %arg11[%c0_94, %c0_95], %71 {strides = array<i32>} : memref<64x8xf32, #tpu.memory_space<vmem>>, vector<64x8xf32>,
    %c2_96 = arith.constant 2 : index
    %c1_97 = arith.constant 1 : index
    %c0_98 = arith.constant 0 : index
    %73 = vector.load %arg9[%c2_96, %c1_97, %c0_98] : memref<10x10x4xf32, #tpu.memory_space<vmem>>, vector<8x8x4xf32>
    %74 = vector.shape_cast %73 : vector<8x8x4xf32> to vector<64x4xf32>
    %c0_99 = arith.constant 0 : index
    %c0_100 = arith.constant 0 : index
    %75 = vector.load %arg11[%c0_99, %c0_100] : memref<64x8xf32, #tpu.memory_space<vmem>>, vector<64x8xf32>
    %c2_101 = arith.constant 2 : index
    %c1_102 = arith.constant 1 : index
    %c0_103 = arith.constant 0 : index
    %c0_104 = arith.constant 0 : index
    %76 = vector.load %arg2[%c2_101, %c1_102, %c0_103, %c0_104] : memref<3x3x4x8xf32, #tpu.memory_space<vmem>>, vector<1x1x4x8xf32>
    %77 = vector.shape_cast %76 : vector<1x1x4x8xf32> to vector<4x8xf32>
    %cst_105 = arith.constant dense<0.000000e+00> : vector<64x8xf32>
    %78 = tpu.matmul %74, %77, %cst_105 {dimension_numbers = #tpu.dot_dimension_numbers<[1], [0], [0], [1], [0, 0, 1, 1], [], []>} : vector<64x4xf32>, vector<4x8xf32>, vector<64x8xf32> -> vector<64x8xf32>
    %79 = arith.addf %75, %78 : vector<64x8xf32>
    %c0_106 = arith.constant 0 : index
    %c0_107 = arith.constant 0 : index
    %80 = vector.load %arg11[%c0_106, %c0_107] : memref<64x8xf32, #tpu.memory_space<vmem>>, vector<64x8xf32>
    tpu.vector_store %arg11[%c0_106, %c0_107], %79 {strides = array<i32>} : memref<64x8xf32, #tpu.memory_space<vmem>>, vector<64x8xf32>,
    %c2_108 = arith.constant 2 : index
    %c2_109 = arith.constant 2 : index
    %c0_110 = arith.constant 0 : index
    %81 = vector.load %arg9[%c2_108, %c2_109, %c0_110] : memref<10x10x4xf32, #tpu.memory_space<vmem>>, vector<8x8x4xf32>
    %82 = vector.shape_cast %81 : vector<8x8x4xf32> to vector<64x4xf32>
    %c0_111 = arith.constant 0 : index
    %c0_112 = arith.constant 0 : index
    %83 = vector.load %arg11[%c0_111, %c0_112] : memref<64x8xf32, #tpu.memory_space<vmem>>, vector<64x8xf32>
    %c2_113 = arith.constant 2 : index
    %c2_114 = arith.constant 2 : index
    %c0_115 = arith.constant 0 : index
    %c0_116 = arith.constant 0 : index
    %84 = vector.load %arg2[%c2_113, %c2_114, %c0_115, %c0_116] : memref<3x3x4x8xf32, #tpu.memory_space<vmem>>, vector<1x1x4x8xf32>
    %85 = vector.shape_cast %84 : vector<1x1x4x8xf32> to vector<4x8xf32>
    %cst_117 = arith.constant dense<0.000000e+00> : vector<64x8xf32>
    %86 = tpu.matmul %82, %85, %cst_117 {dimension_numbers = #tpu.dot_dimension_numbers<[1], [0], [0], [1], [0, 0, 1, 1], [], []>} : vector<64x4xf32>, vector<4x8xf32>, vector<64x8xf32> -> vector<64x8xf32>
    %87 = arith.addf %83, %86 : vector<64x8xf32>
    %c0_118 = arith.constant 0 : index
    %c0_119 = arith.constant 0 : index
    %88 = vector.load %arg11[%c0_118, %c0_119] : memref<64x8xf32, #tpu.memory_space<vmem>>, vector<64x8xf32>
    tpu.vector_store %arg11[%c0_118, %c0_119], %87 {strides = array<i32>} : memref<64x8xf32, #tpu.memory_space<vmem>>, vector<64x8xf32>,
    %c0_120 = arith.constant 0 : index
    %c0_121 = arith.constant 0 : index
    %89 = vector.load %arg11[%c0_120, %c0_121] : memref<64x8xf32, #tpu.memory_space<vmem>>, vector<64x8xf32>
    %c0_122 = arith.constant 0 : index
    %c0_123 = arith.constant 0 : index
    %90 = vector.load %arg3[%c0_122, %c0_123] : memref<1x8xf32, #tpu.memory_space<vmem>>, vector<1x8xf32>
    %91 = vector.broadcast %90 : vector<1x8xf32> to vector<64x8xf32>
    %92 = arith.mulf %89, %91 : vector<64x8xf32>
    %c0_124 = arith.constant 0 : index
    %c0_125 = arith.constant 0 : index
    %93 = vector.load %arg4[%c0_124, %c0_125] : memref<1x8xf32, #tpu.memory_space<vmem>>, vector<1x8xf32>
    %94 = vector.broadcast %93 : vector<1x8xf32> to vector<64x8xf32>
    %95 = arith.addf %92, %94 : vector<64x8xf32>
    %cst_126 = arith.constant 0.000000e+00 : f32
    %96 = vector.broadcast %cst_126 : f32 to vector<64x8xf32>
    %97 = arith.maximumf %95, %96 : vector<64x8xf32>
    %cst_127 = arith.constant 0.000000e+00 : f32
    %98 = vector.broadcast %cst_127 : f32 to vector<10x10x8xf32>
    %c0_128 = arith.constant 0 : index
    %c0_129 = arith.constant 0 : index
    %c0_130 = arith.constant 0 : index
    %99 = vector.load %arg10[%c0_128, %c0_129, %c0_130] : memref<10x10x8xf32, #tpu.memory_space<vmem>>, vector<10x10x8xf32>
    tpu.vector_store %arg10[%c0_128, %c0_129, %c0_130], %98 {strides = array<i32>} : memref<10x10x8xf32, #tpu.memory_space<vmem>>, vector<10x10x8xf32>,
    %100 = vector.shape_cast %97 : vector<64x8xf32> to vector<8x8x8xf32>
    %c1_131 = arith.constant 1 : index
    %c1_132 = arith.constant 1 : index
    %c0_133 = arith.constant 0 : index
    %101 = vector.load %arg10[%c1_131, %c1_132, %c0_133] : memref<10x10x8xf32, #tpu.memory_space<vmem>>, vector<8x8x8xf32>
    tpu.vector_store %arg10[%c1_131, %c1_132, %c0_133], %100 {strides = array<i32>} : memref<10x10x8xf32, #tpu.memory_space<vmem>>, vector<8x8x8xf32>,
    %cst_134 = arith.constant 0.000000e+00 : f32
    %102 = vector.broadcast %cst_134 : f32 to vector<64x8xf32>
    %c0_135 = arith.constant 0 : index
    %c0_136 = arith.constant 0 : index
    %103 = vector.load %arg12[%c0_135, %c0_136] : memref<64x8xf32, #tpu.memory_space<vmem>>, vector<64x8xf32>
    tpu.vector_store %arg12[%c0_135, %c0_136], %102 {strides = array<i32>} : memref<64x8xf32, #tpu.memory_space<vmem>>, vector<64x8xf32>,
    %c0_137 = arith.constant 0 : index
    %c0_138 = arith.constant 0 : index
    %c0_139 = arith.constant 0 : index
    %104 = vector.load %arg10[%c0_137, %c0_138, %c0_139] : memref<10x10x8xf32, #tpu.memory_space<vmem>>, vector<8x8x8xf32>
    %105 = vector.shape_cast %104 : vector<8x8x8xf32> to vector<64x8xf32>
    %c0_140 = arith.constant 0 : index
    %c0_141 = arith.constant 0 : index
    %106 = vector.load %arg12[%c0_140, %c0_141] : memref<64x8xf32, #tpu.memory_space<vmem>>, vector<64x8xf32>
    %c0_142 = arith.constant 0 : index
    %c0_143 = arith.constant 0 : index
    %c0_144 = arith.constant 0 : index
    %c0_145 = arith.constant 0 : index
    %107 = vector.load %arg5[%c0_142, %c0_143, %c0_144, %c0_145] : memref<3x3x8x8xf32, #tpu.memory_space<vmem>>, vector<1x1x8x8xf32>
    %108 = vector.shape_cast %107 : vector<1x1x8x8xf32> to vector<8x8xf32>
    %cst_146 = arith.constant dense<0.000000e+00> : vector<64x8xf32>
    %109 = tpu.matmul %105, %108, %cst_146 {dimension_numbers = #tpu.dot_dimension_numbers<[1], [0], [0], [1], [0, 0, 1, 1], [], []>} : vector<64x8xf32>, vector<8x8xf32>, vector<64x8xf32> -> vector<64x8xf32>
    %110 = arith.addf %106, %109 : vector<64x8xf32>
    %c0_147 = arith.constant 0 : index
    %c0_148 = arith.constant 0 : index
    %111 = vector.load %arg12[%c0_147, %c0_148] : memref<64x8xf32, #tpu.memory_space<vmem>>, vector<64x8xf32>
    tpu.vector_store %arg12[%c0_147, %c0_148], %110 {strides = array<i32>} : memref<64x8xf32, #tpu.memory_space<vmem>>, vector<64x8xf32>,
    %c0_149 = arith.constant 0 : index
    %c1_150 = arith.constant 1 : index
    %c0_151 = arith.constant 0 : index
    %112 = vector.load %arg10[%c0_149, %c1_150, %c0_151] : memref<10x10x8xf32, #tpu.memory_space<vmem>>, vector<8x8x8xf32>
    %113 = vector.shape_cast %112 : vector<8x8x8xf32> to vector<64x8xf32>
    %c0_152 = arith.constant 0 : index
    %c0_153 = arith.constant 0 : index
    %114 = vector.load %arg12[%c0_152, %c0_153] : memref<64x8xf32, #tpu.memory_space<vmem>>, vector<64x8xf32>
    %c0_154 = arith.constant 0 : index
    %c1_155 = arith.constant 1 : index
    %c0_156 = arith.constant 0 : index
    %c0_157 = arith.constant 0 : index
    %115 = vector.load %arg5[%c0_154, %c1_155, %c0_156, %c0_157] : memref<3x3x8x8xf32, #tpu.memory_space<vmem>>, vector<1x1x8x8xf32>
    %116 = vector.shape_cast %115 : vector<1x1x8x8xf32> to vector<8x8xf32>
    %cst_158 = arith.constant dense<0.000000e+00> : vector<64x8xf32>
    %117 = tpu.matmul %113, %116, %cst_158 {dimension_numbers = #tpu.dot_dimension_numbers<[1], [0], [0], [1], [0, 0, 1, 1], [], []>} : vector<64x8xf32>, vector<8x8xf32>, vector<64x8xf32> -> vector<64x8xf32>
    %118 = arith.addf %114, %117 : vector<64x8xf32>
    %c0_159 = arith.constant 0 : index
    %c0_160 = arith.constant 0 : index
    %119 = vector.load %arg12[%c0_159, %c0_160] : memref<64x8xf32, #tpu.memory_space<vmem>>, vector<64x8xf32>
    tpu.vector_store %arg12[%c0_159, %c0_160], %118 {strides = array<i32>} : memref<64x8xf32, #tpu.memory_space<vmem>>, vector<64x8xf32>,
    %c0_161 = arith.constant 0 : index
    %c2_162 = arith.constant 2 : index
    %c0_163 = arith.constant 0 : index
    %120 = vector.load %arg10[%c0_161, %c2_162, %c0_163] : memref<10x10x8xf32, #tpu.memory_space<vmem>>, vector<8x8x8xf32>
    %121 = vector.shape_cast %120 : vector<8x8x8xf32> to vector<64x8xf32>
    %c0_164 = arith.constant 0 : index
    %c0_165 = arith.constant 0 : index
    %122 = vector.load %arg12[%c0_164, %c0_165] : memref<64x8xf32, #tpu.memory_space<vmem>>, vector<64x8xf32>
    %c0_166 = arith.constant 0 : index
    %c2_167 = arith.constant 2 : index
    %c0_168 = arith.constant 0 : index
    %c0_169 = arith.constant 0 : index
    %123 = vector.load %arg5[%c0_166, %c2_167, %c0_168, %c0_169] : memref<3x3x8x8xf32, #tpu.memory_space<vmem>>, vector<1x1x8x8xf32>
    %124 = vector.shape_cast %123 : vector<1x1x8x8xf32> to vector<8x8xf32>
    %cst_170 = arith.constant dense<0.000000e+00> : vector<64x8xf32>
    %125 = tpu.matmul %121, %124, %cst_170 {dimension_numbers = #tpu.dot_dimension_numbers<[1], [0], [0], [1], [0, 0, 1, 1], [], []>} : vector<64x8xf32>, vector<8x8xf32>, vector<64x8xf32> -> vector<64x8xf32>
    %126 = arith.addf %122, %125 : vector<64x8xf32>
    %c0_171 = arith.constant 0 : index
    %c0_172 = arith.constant 0 : index
    %127 = vector.load %arg12[%c0_171, %c0_172] : memref<64x8xf32, #tpu.memory_space<vmem>>, vector<64x8xf32>
    tpu.vector_store %arg12[%c0_171, %c0_172], %126 {strides = array<i32>} : memref<64x8xf32, #tpu.memory_space<vmem>>, vector<64x8xf32>,
    %c1_173 = arith.constant 1 : index
    %c0_174 = arith.constant 0 : index
    %c0_175 = arith.constant 0 : index
    %128 = vector.load %arg10[%c1_173, %c0_174, %c0_175] : memref<10x10x8xf32, #tpu.memory_space<vmem>>, vector<8x8x8xf32>
    %129 = vector.shape_cast %128 : vector<8x8x8xf32> to vector<64x8xf32>
    %c0_176 = arith.constant 0 : index
    %c0_177 = arith.constant 0 : index
    %130 = vector.load %arg12[%c0_176, %c0_177] : memref<64x8xf32, #tpu.memory_space<vmem>>, vector<64x8xf32>
    %c1_178 = arith.constant 1 : index
    %c0_179 = arith.constant 0 : index
    %c0_180 = arith.constant 0 : index
    %c0_181 = arith.constant 0 : index
    %131 = vector.load %arg5[%c1_178, %c0_179, %c0_180, %c0_181] : memref<3x3x8x8xf32, #tpu.memory_space<vmem>>, vector<1x1x8x8xf32>
    %132 = vector.shape_cast %131 : vector<1x1x8x8xf32> to vector<8x8xf32>
    %cst_182 = arith.constant dense<0.000000e+00> : vector<64x8xf32>
    %133 = tpu.matmul %129, %132, %cst_182 {dimension_numbers = #tpu.dot_dimension_numbers<[1], [0], [0], [1], [0, 0, 1, 1], [], []>} : vector<64x8xf32>, vector<8x8xf32>, vector<64x8xf32> -> vector<64x8xf32>
    %134 = arith.addf %130, %133 : vector<64x8xf32>
    %c0_183 = arith.constant 0 : index
    %c0_184 = arith.constant 0 : index
    %135 = vector.load %arg12[%c0_183, %c0_184] : memref<64x8xf32, #tpu.memory_space<vmem>>, vector<64x8xf32>
    tpu.vector_store %arg12[%c0_183, %c0_184], %134 {strides = array<i32>} : memref<64x8xf32, #tpu.memory_space<vmem>>, vector<64x8xf32>,
    %c1_185 = arith.constant 1 : index
    %c1_186 = arith.constant 1 : index
    %c0_187 = arith.constant 0 : index
    %136 = vector.load %arg10[%c1_185, %c1_186, %c0_187] : memref<10x10x8xf32, #tpu.memory_space<vmem>>, vector<8x8x8xf32>
    %137 = vector.shape_cast %136 : vector<8x8x8xf32> to vector<64x8xf32>
    %c0_188 = arith.constant 0 : index
    %c0_189 = arith.constant 0 : index
    %138 = vector.load %arg12[%c0_188, %c0_189] : memref<64x8xf32, #tpu.memory_space<vmem>>, vector<64x8xf32>
    %c1_190 = arith.constant 1 : index
    %c1_191 = arith.constant 1 : index
    %c0_192 = arith.constant 0 : index
    %c0_193 = arith.constant 0 : index
    %139 = vector.load %arg5[%c1_190, %c1_191, %c0_192, %c0_193] : memref<3x3x8x8xf32, #tpu.memory_space<vmem>>, vector<1x1x8x8xf32>
    %140 = vector.shape_cast %139 : vector<1x1x8x8xf32> to vector<8x8xf32>
    %cst_194 = arith.constant dense<0.000000e+00> : vector<64x8xf32>
    %141 = tpu.matmul %137, %140, %cst_194 {dimension_numbers = #tpu.dot_dimension_numbers<[1], [0], [0], [1], [0, 0, 1, 1], [], []>} : vector<64x8xf32>, vector<8x8xf32>, vector<64x8xf32> -> vector<64x8xf32>
    %142 = arith.addf %138, %141 : vector<64x8xf32>
    %c0_195 = arith.constant 0 : index
    %c0_196 = arith.constant 0 : index
    %143 = vector.load %arg12[%c0_195, %c0_196] : memref<64x8xf32, #tpu.memory_space<vmem>>, vector<64x8xf32>
    tpu.vector_store %arg12[%c0_195, %c0_196], %142 {strides = array<i32>} : memref<64x8xf32, #tpu.memory_space<vmem>>, vector<64x8xf32>,
    %c1_197 = arith.constant 1 : index
    %c2_198 = arith.constant 2 : index
    %c0_199 = arith.constant 0 : index
    %144 = vector.load %arg10[%c1_197, %c2_198, %c0_199] : memref<10x10x8xf32, #tpu.memory_space<vmem>>, vector<8x8x8xf32>
    %145 = vector.shape_cast %144 : vector<8x8x8xf32> to vector<64x8xf32>
    %c0_200 = arith.constant 0 : index
    %c0_201 = arith.constant 0 : index
    %146 = vector.load %arg12[%c0_200, %c0_201] : memref<64x8xf32, #tpu.memory_space<vmem>>, vector<64x8xf32>
    %c1_202 = arith.constant 1 : index
    %c2_203 = arith.constant 2 : index
    %c0_204 = arith.constant 0 : index
    %c0_205 = arith.constant 0 : index
    %147 = vector.load %arg5[%c1_202, %c2_203, %c0_204, %c0_205] : memref<3x3x8x8xf32, #tpu.memory_space<vmem>>, vector<1x1x8x8xf32>
    %148 = vector.shape_cast %147 : vector<1x1x8x8xf32> to vector<8x8xf32>
    %cst_206 = arith.constant dense<0.000000e+00> : vector<64x8xf32>
    %149 = tpu.matmul %145, %148, %cst_206 {dimension_numbers = #tpu.dot_dimension_numbers<[1], [0], [0], [1], [0, 0, 1, 1], [], []>} : vector<64x8xf32>, vector<8x8xf32>, vector<64x8xf32> -> vector<64x8xf32>
    %150 = arith.addf %146, %149 : vector<64x8xf32>
    %c0_207 = arith.constant 0 : index
    %c0_208 = arith.constant 0 : index
    %151 = vector.load %arg12[%c0_207, %c0_208] : memref<64x8xf32, #tpu.memory_space<vmem>>, vector<64x8xf32>
    tpu.vector_store %arg12[%c0_207, %c0_208], %150 {strides = array<i32>} : memref<64x8xf32, #tpu.memory_space<vmem>>, vector<64x8xf32>,
    %c2_209 = arith.constant 2 : index
    %c0_210 = arith.constant 0 : index
    %c0_211 = arith.constant 0 : index
    %152 = vector.load %arg10[%c2_209, %c0_210, %c0_211] : memref<10x10x8xf32, #tpu.memory_space<vmem>>, vector<8x8x8xf32>
    %153 = vector.shape_cast %152 : vector<8x8x8xf32> to vector<64x8xf32>
    %c0_212 = arith.constant 0 : index
    %c0_213 = arith.constant 0 : index
    %154 = vector.load %arg12[%c0_212, %c0_213] : memref<64x8xf32, #tpu.memory_space<vmem>>, vector<64x8xf32>
    %c2_214 = arith.constant 2 : index
    %c0_215 = arith.constant 0 : index
    %c0_216 = arith.constant 0 : index
    %c0_217 = arith.constant 0 : index
    %155 = vector.load %arg5[%c2_214, %c0_215, %c0_216, %c0_217] : memref<3x3x8x8xf32, #tpu.memory_space<vmem>>, vector<1x1x8x8xf32>
    %156 = vector.shape_cast %155 : vector<1x1x8x8xf32> to vector<8x8xf32>
    %cst_218 = arith.constant dense<0.000000e+00> : vector<64x8xf32>
    %157 = tpu.matmul %153, %156, %cst_218 {dimension_numbers = #tpu.dot_dimension_numbers<[1], [0], [0], [1], [0, 0, 1, 1], [], []>} : vector<64x8xf32>, vector<8x8xf32>, vector<64x8xf32> -> vector<64x8xf32>
    %158 = arith.addf %154, %157 : vector<64x8xf32>
    %c0_219 = arith.constant 0 : index
    %c0_220 = arith.constant 0 : index
    %159 = vector.load %arg12[%c0_219, %c0_220] : memref<64x8xf32, #tpu.memory_space<vmem>>, vector<64x8xf32>
    tpu.vector_store %arg12[%c0_219, %c0_220], %158 {strides = array<i32>} : memref<64x8xf32, #tpu.memory_space<vmem>>, vector<64x8xf32>,
    %c2_221 = arith.constant 2 : index
    %c1_222 = arith.constant 1 : index
    %c0_223 = arith.constant 0 : index
    %160 = vector.load %arg10[%c2_221, %c1_222, %c0_223] : memref<10x10x8xf32, #tpu.memory_space<vmem>>, vector<8x8x8xf32>
    %161 = vector.shape_cast %160 : vector<8x8x8xf32> to vector<64x8xf32>
    %c0_224 = arith.constant 0 : index
    %c0_225 = arith.constant 0 : index
    %162 = vector.load %arg12[%c0_224, %c0_225] : memref<64x8xf32, #tpu.memory_space<vmem>>, vector<64x8xf32>
    %c2_226 = arith.constant 2 : index
    %c1_227 = arith.constant 1 : index
    %c0_228 = arith.constant 0 : index
    %c0_229 = arith.constant 0 : index
    %163 = vector.load %arg5[%c2_226, %c1_227, %c0_228, %c0_229] : memref<3x3x8x8xf32, #tpu.memory_space<vmem>>, vector<1x1x8x8xf32>
    %164 = vector.shape_cast %163 : vector<1x1x8x8xf32> to vector<8x8xf32>
    %cst_230 = arith.constant dense<0.000000e+00> : vector<64x8xf32>
    %165 = tpu.matmul %161, %164, %cst_230 {dimension_numbers = #tpu.dot_dimension_numbers<[1], [0], [0], [1], [0, 0, 1, 1], [], []>} : vector<64x8xf32>, vector<8x8xf32>, vector<64x8xf32> -> vector<64x8xf32>
    %166 = arith.addf %162, %165 : vector<64x8xf32>
    %c0_231 = arith.constant 0 : index
    %c0_232 = arith.constant 0 : index
    %167 = vector.load %arg12[%c0_231, %c0_232] : memref<64x8xf32, #tpu.memory_space<vmem>>, vector<64x8xf32>
    tpu.vector_store %arg12[%c0_231, %c0_232], %166 {strides = array<i32>} : memref<64x8xf32, #tpu.memory_space<vmem>>, vector<64x8xf32>,
    %c2_233 = arith.constant 2 : index
    %c2_234 = arith.constant 2 : index
    %c0_235 = arith.constant 0 : index
    %168 = vector.load %arg10[%c2_233, %c2_234, %c0_235] : memref<10x10x8xf32, #tpu.memory_space<vmem>>, vector<8x8x8xf32>
    %169 = vector.shape_cast %168 : vector<8x8x8xf32> to vector<64x8xf32>
    %c0_236 = arith.constant 0 : index
    %c0_237 = arith.constant 0 : index
    %170 = vector.load %arg12[%c0_236, %c0_237] : memref<64x8xf32, #tpu.memory_space<vmem>>, vector<64x8xf32>
    %c2_238 = arith.constant 2 : index
    %c2_239 = arith.constant 2 : index
    %c0_240 = arith.constant 0 : index
    %c0_241 = arith.constant 0 : index
    %171 = vector.load %arg5[%c2_238, %c2_239, %c0_240, %c0_241] : memref<3x3x8x8xf32, #tpu.memory_space<vmem>>, vector<1x1x8x8xf32>
    %172 = vector.shape_cast %171 : vector<1x1x8x8xf32> to vector<8x8xf32>
    %cst_242 = arith.constant dense<0.000000e+00> : vector<64x8xf32>
    %173 = tpu.matmul %169, %172, %cst_242 {dimension_numbers = #tpu.dot_dimension_numbers<[1], [0], [0], [1], [0, 0, 1, 1], [], []>} : vector<64x8xf32>, vector<8x8xf32>, vector<64x8xf32> -> vector<64x8xf32>
    %174 = arith.addf %170, %173 : vector<64x8xf32>
    %c0_243 = arith.constant 0 : index
    %c0_244 = arith.constant 0 : index
    %175 = vector.load %arg12[%c0_243, %c0_244] : memref<64x8xf32, #tpu.memory_space<vmem>>, vector<64x8xf32>
    tpu.vector_store %arg12[%c0_243, %c0_244], %174 {strides = array<i32>} : memref<64x8xf32, #tpu.memory_space<vmem>>, vector<64x8xf32>,
    %c0_245 = arith.constant 0 : index
    %c0_246 = arith.constant 0 : index
    %176 = vector.load %arg12[%c0_245, %c0_246] : memref<64x8xf32, #tpu.memory_space<vmem>>, vector<64x8xf32>
    %c0_247 = arith.constant 0 : index
    %c0_248 = arith.constant 0 : index
    %177 = vector.load %arg6[%c0_247, %c0_248] : memref<1x8xf32, #tpu.memory_space<vmem>>, vector<1x8xf32>
    %178 = vector.broadcast %177 : vector<1x8xf32> to vector<64x8xf32>
    %179 = arith.mulf %176, %178 : vector<64x8xf32>
    %c0_249 = arith.constant 0 : index
    %c0_250 = arith.constant 0 : index
    %180 = vector.load %arg7[%c0_249, %c0_250] : memref<1x8xf32, #tpu.memory_space<vmem>>, vector<1x8xf32>
    %181 = vector.broadcast %180 : vector<1x8xf32> to vector<64x8xf32>
    %182 = arith.addf %179, %181 : vector<64x8xf32>
    %cst_251 = arith.constant 0.000000e+00 : f32
    %183 = vector.broadcast %cst_251 : f32 to vector<64x8xf32>
    %184 = arith.maximumf %182, %183 : vector<64x8xf32>
    %185 = vector.shape_cast %184 : vector<64x8xf32> to vector<8x8x8xf32>
    %c0_252 = arith.constant 0 : index
    %c0_253 = arith.constant 0 : index
    %c0_254 = arith.constant 0 : index
    %c0_255 = arith.constant 0 : index
    %186 = vector.load %arg8[%c0_252, %c0_253, %c0_254, %c0_255] : memref<1x8x8x8xf32, #tpu.memory_space<vmem>>, vector<1x8x8x8xf32>
    %187 = vector.shape_cast %186 : vector<1x8x8x8xf32> to vector<8x8x8xf32>
    %188 = vector.shape_cast %185 : vector<8x8x8xf32> to vector<1x8x8x8xf32>
    tpu.vector_store %arg8[%c0_252, %c0_253, %c0_254, %c0_255], %188 {strides = array<i32>} : memref<1x8x8x8xf32, #tpu.memory_space<vmem>>, vector<1x8x8x8xf32>,
    return
  }
  func.func @transform_0(%arg0: i32) -> (i32, i32, i32, i32, i32, i32) {
    %c0_i32 = arith.constant 0 : i32
    %c0_i32_0 = arith.constant 0 : i32
    %c0_i32_1 = arith.constant 0 : i32
    %c0_i32_2 = arith.constant 0 : i32
    %c0_i32_3 = arith.constant 0 : i32
    %c0_i32_4 = arith.constant 0 : i32
    return %arg0, %c0_i32, %c0_i32_0, %c0_i32_1, %c0_i32_2, %c0_i32_3 : i32, i32, i32, i32, i32, i32
  }
  func.func @transform_1(%arg0: i32) -> (i32, i32, i32, i32) {
    %c0_i32 = arith.constant 0 : i32
    %c0_i32_0 = arith.constant 0 : i32
    %c0_i32_1 = arith.constant 0 : i32
    %c0_i32_2 = arith.constant 0 : i32
    %c0_i32_3 = arith.constant 0 : i32
    return %c0_i32, %c0_i32_0, %c0_i32_1, %c0_i32_2 : i32, i32, i32, i32
  }
  func.func @transform_2(%arg0: i32) -> (i32, i32) {
    %c0_i32 = arith.constant 0 : i32
    %c0_i32_0 = arith.constant 0 : i32
    %c0_i32_1 = arith.constant 0 : i32
    return %c0_i32, %c0_i32_0 : i32, i32
  }
  func.func @transform_3(%arg0: i32) -> (i32, i32) {
    %c0_i32 = arith.constant 0 : i32
    %c0_i32_0 = arith.constant 0 : i32
    %c0_i32_1 = arith.constant 0 : i32
    return %c0_i32, %c0_i32_0 : i32, i32
  }
  func.func @transform_4(%arg0: i32) -> (i32, i32, i32, i32) {
    %c0_i32 = arith.constant 0 : i32
    %c0_i32_0 = arith.constant 0 : i32
    %c0_i32_1 = arith.constant 0 : i32
    %c0_i32_2 = arith.constant 0 : i32
    %c0_i32_3 = arith.constant 0 : i32
    return %c0_i32, %c0_i32_0, %c0_i32_1, %c0_i32_2 : i32, i32, i32, i32
  }
  func.func @transform_5(%arg0: i32) -> (i32, i32) {
    %c0_i32 = arith.constant 0 : i32
    %c0_i32_0 = arith.constant 0 : i32
    %c0_i32_1 = arith.constant 0 : i32
    return %c0_i32, %c0_i32_0 : i32, i32
  }
  func.func @transform_6(%arg0: i32) -> (i32, i32) {
    %c0_i32 = arith.constant 0 : i32
    %c0_i32_0 = arith.constant 0 : i32
    %c0_i32_1 = arith.constant 0 : i32
    return %c0_i32, %c0_i32_0 : i32, i32
  }
  func.func @transform_7(%arg0: i32) -> (i32, i32, i32, i32) {
    %c0_i32 = arith.constant 0 : i32
    %c0_i32_0 = arith.constant 0 : i32
    %c0_i32_1 = arith.constant 0 : i32
    %c0_i32_2 = arith.constant 0 : i32
    return %arg0, %c0_i32, %c0_i32_0, %c0_i32_1 : i32, i32, i32, i32
  }
}

</mosaic_0001>

<llo_original>
// kernel: tpu_custom_call.1
$region0: #{tpu_custom_call.1}
  #allocation0 [shape = 'u32[]', space=smem, size = 0x4, offset = 0x4, fixed_abs, tag = 'smem constant byte address 0x4 - core index']
  #allocation1 [shape = 'u32[144,128]{1,0:T(1,128)}', space=vmem, size = 0x12000, scoped, tag = 'internal scratch']
  #allocation2 [shape = 'f32[10,10,4]{2,1,0:T(8,128)}', space=vmem, size = 0x14000, scoped, tag = 'scratch operand']
  #allocation3 [shape = 'f32[10,10,8]{2,1,0:T(8,128)}', space=vmem, size = 0x14000, scoped, tag = 'scratch operand']
  #allocation4 [shape = 'f32[64,8]{1,0:T(8,128)}', space=vmem, size = 0x8000, scoped, tag = 'scratch operand']
  #allocation5 [shape = 'f32[64,8]{1,0:T(8,128)}', space=vmem, size = 0x8000, scoped, tag = 'scratch operand']
  %s0 = inlined_call_operand.vmem [shape: f32[2,8,2,8,2,4], index: 0, kind: input, shape index: {}]
  %s1 = inlined_call_operand.vmem [shape: f32[3,3,4,8], index: 1, kind: input, shape index: {}]
  %s2 = inlined_call_operand.vmem [shape: f32[1,8], index: 2, kind: input, shape index: {}]
  %s3 = inlined_call_operand.vmem [shape: f32[1,8], index: 3, kind: input, shape index: {}]
  %s4 = inlined_call_operand.vmem [shape: f32[3,3,8,8], index: 4, kind: input, shape index: {}]
  %s5 = inlined_call_operand.vmem [shape: f32[1,8], index: 5, kind: input, shape index: {}]
  %s6 = inlined_call_operand.vmem [shape: f32[1,8], index: 6, kind: input, shape index: {}]
  %s7 = inlined_call_operand.hbm [shape: f32[2,8,8,8], index: 7, kind: output, shape index: {}]
  %s8 = sld [smem:[#allocation0]]
  $region61: #{tpu_custom_call.1} parent=0
    _
  %s10 = ssub.s32 1, %s8
  %s11 = scalar_select 0, %s10, %s8
  $region1: #{tpu_custom_call.1} parent=0
    #allocation6 [shape = 'u8[65536]{0}', space=vmem, size = 0x10000, scoped, tag = 'output window, operand 0']
    #allocation7 [shape = 's32[2]{0}', space=sflag, size = 0x8, scoped, tag = 'scoped memory for tpu_custom_call.1']
    %12 = vsyncpa [#allocation7], 0
    %s13 = scalar_lea.sflag [#allocation7], 1
    %14 = vsyncpa %s13, 0
    loop: start=0, step=1, limit=4
    $region2: #{tpu_custom_call.1} parent=1 // loop_pre_header
      _
    $region3: #{tpu_custom_call.1} parent=1 // loop_header
      %s16 = sphi 0, %s20
      %p17 = scmp.ge.s32.totalorder %s16, 4
      %s26 = sphi 0, %s28
      %s29 = sphi 0, %s26
      %s30 = sphi 0, %s29
      %s46 = sphi 0, %s30
      %s50 = sphi 0, %s50
      %s52 = sphi 0, %s50
      %s53 = sphi 0, %s52
      %s67 = sphi 0, %s53
      %s71 = sphi 0, %s71
      %s73 = sphi 0, %s71
      %s74 = sphi 0, %s73
      %s88 = sphi 0, %s74
      %s92 = sphi 0, %s92
      %s94 = sphi 0, %s92
      %s95 = sphi 0, %s94
      %s109 = sphi 0, %s95
      %s113 = sphi 0, %s113
      %s115 = sphi 0, %s113
      %s116 = sphi 0, %s115
      %s130 = sphi 0, %s116
      %s134 = sphi 0, %s134
      %s136 = sphi 0, %s134
      %s137 = sphi 0, %s136
      %s151 = sphi 0, %s137
      %s155 = sphi 0, %s155
      %s157 = sphi 0, %s155
      %s158 = sphi 0, %s157
      %s172 = sphi 0, %s158
      %s178 = sphi 0, %s180
      %s181 = sphi 0, %s178
      %s182 = sphi 0, %s181
      %s198 = sphi 0, %s182
    $region4: #{tpu_custom_call.1} parent=1 // loop_header_branch
      %19 = sbr.rel (%p17) target = $region8
    $region5: #{tpu_custom_call.1} parent=1 // loop_body
      %s21 = ssub.s32 %s16, 1
      %s22 = ssub.s32 %s16, 2
      %s23 = sadd.s32 %s16, 1
      %s24 = ssub.s32 %s16, %s23
      %p25 = scmp.eq.s32.totalorder %s24, 0
      %s27 = sadd.s32 %s26, 1
      %s28 = scalar_select %p25, %s26, %s27
      %p31 = pneg %p25
      %p32 = scmp.eq.s32.totalorder %s16, 1
      %p33 = por %p31, %p32
      %p34 = scmp.ne.s32.totalorder %s26, %s29
      %p35 = scmp.eq.s32.totalorder %s16, 0
      %p36 = por %p34, %p35
      %p37 = scmp.ne.s32.totalorder %s26, %s29
      %p38 = scmp.eq.s32.totalorder %s21, 1
      %p39 = por %p37, %p38
      %p40 = scmp.ne.s32.totalorder %s29, %s30
      %p41 = scmp.eq.s32.totalorder %s21, 0
      %p42 = por %p40, %p41
      %p43 = scmp.ne.s32.totalorder %s29, %s30
      %p44 = scmp.eq.s32.totalorder %s22, 1
      %p45 = por %p43, %p44
      %p47 = scmp.ne.s32.totalorder %s30, %s46
      %p48 = scmp.eq.s32.totalorder %s22, 0
      %p49 = por %p47, %p48
      %s51 = sadd.s32 %s50, 1
      %p54 = scmp.eq.s32.totalorder %s16, 1
      %p55 = scmp.ne.s32.totalorder %s50, %s52
      %p56 = scmp.eq.s32.totalorder %s16, 0
      %p57 = por %p55, %p56
      %p58 = scmp.ne.s32.totalorder %s50, %s52
      %p59 = scmp.eq.s32.totalorder %s21, 1
      %p60 = por %p58, %p59
      %p61 = scmp.ne.s32.totalorder %s52, %s53
      %p62 = scmp.eq.s32.totalorder %s21, 0
      %p63 = por %p61, %p62
      %p64 = scmp.ne.s32.totalorder %s52, %s53
      %p65 = scmp.eq.s32.totalorder %s22, 1
      %p66 = por %p64, %p65
      %p68 = scmp.ne.s32.totalorder %s53, %s67
      %p69 = scmp.eq.s32.totalorder %s22, 0
      %p70 = por %p68, %p69
      %s72 = sadd.s32 %s71, 1
      %p75 = scmp.eq.s32.totalorder %s16, 1
      %p76 = scmp.ne.s32.totalorder %s71, %s73
      %p77 = scmp.eq.s32.totalorder %s16, 0
      %p78 = por %p76, %p77
      %p79 = scmp.ne.s32.totalorder %s71, %s73
      %p80 = scmp.eq.s32.totalorder %s21, 1
      %p81 = por %p79, %p80
      %p82 = scmp.ne.s32.totalorder %s73, %s74
      %p83 = scmp.eq.s32.totalorder %s21, 0
      %p84 = por %p82, %p83
      %p85 = scmp.ne.s32.totalorder %s73, %s74
      %p86 = scmp.eq.s32.totalorder %s22, 1
      %p87 = por %p85, %p86
      %p89 = scmp.ne.s32.totalorder %s74, %s88
      %p90 = scmp.eq.s32.totalorder %s22, 0
      %p91 = por %p89, %p90
      %s93 = sadd.s32 %s92, 1
      %p96 = scmp.eq.s32.totalorder %s16, 1
      %p97 = scmp.ne.s32.totalorder %s92, %s94
      %p98 = scmp.eq.s32.totalorder %s16, 0
      %p99 = por %p97, %p98
      %p100 = scmp.ne.s32.totalorder %s92, %s94
      %p101 = scmp.eq.s32.totalorder %s21, 1
      %p102 = por %p100, %p101
      %p103 = scmp.ne.s32.totalorder %s94, %s95
      %p104 = scmp.eq.s32.totalorder %s21, 0
      %p105 = por %p103, %p104
      %p106 = scmp.ne.s32.totalorder %s94, %s95
      %p107 = scmp.eq.s32.totalorder %s22, 1
      %p108 = por %p106, %p107
      %p110 = scmp.ne.s32.totalorder %s95, %s109
      %p111 = scmp.eq.s32.totalorder %s22, 0
      %p112 = por %p110, %p111
      %s114 = sadd.s32 %s113, 1
      %p117 = scmp.eq.s32.totalorder %s16, 1
      %p118 = scmp.ne.s32.totalorder %s113, %s115
      %p119 = scmp.eq.s32.totalorder %s16, 0
      %p120 = por %p118, %p119
      %p121 = scmp.ne.s32.totalorder %s113, %s115
      %p122 = scmp.eq.s32.totalorder %s21, 1
      %p123 = por %p121, %p122
      %p124 = scmp.ne.s32.totalorder %s115, %s116
      %p125 = scmp.eq.s32.totalorder %s21, 0
      %p126 = por %p124, %p125
      %p127 = scmp.ne.s32.totalorder %s115, %s116
      %p128 = scmp.eq.s32.totalorder %s22, 1
      %p129 = por %p127, %p128
      %p131 = scmp.ne.s32.totalorder %s116, %s130
      %p132 = scmp.eq.s32.totalorder %s22, 0
      %p133 = por %p131, %p132
      %s135 = sadd.s32 %s134, 1
      %p138 = scmp.eq.s32.totalorder %s16, 1
      %p139 = scmp.ne.s32.totalorder %s134, %s136
      %p140 = scmp.eq.s32.totalorder %s16, 0
      %p141 = por %p139, %p140
      %p142 = scmp.ne.s32.totalorder %s134, %s136
      %p143 = scmp.eq.s32.totalorder %s21, 1
      %p144 = por %p142, %p143
      %p145 = scmp.ne.s32.totalorder %s136, %s137
      %p146 = scmp.eq.s32.totalorder %s21, 0
      %p147 = por %p145, %p146
      %p148 = scmp.ne.s32.totalorder %s136, %s137
      %p149 = scmp.eq.s32.totalorder %s22, 1
      %p150 = por %p148, %p149
      %p152 = scmp.ne.s32.totalorder %s137, %s151
      %p153 = scmp.eq.s32.totalorder %s22, 0
      %p154 = por %p152, %p153
      %s156 = sadd.s32 %s155, 1
      %p159 = scmp.eq.s32.totalorder %s16, 1
      %p160 = scmp.ne.s32.totalorder %s155, %s157
      %p161 = scmp.eq.s32.totalorder %s16, 0
      %p162 = por %p160, %p161
      %p163 = scmp.ne.s32.totalorder %s155, %s157
      %p164 = scmp.eq.s32.totalorder %s21, 1
      %p165 = por %p163, %p164
      %p166 = scmp.ne.s32.totalorder %s157, %s158
      %p167 = scmp.eq.s32.totalorder %s21, 0
      %p168 = por %p166, %p167
      %p169 = scmp.ne.s32.totalorder %s157, %s158
      %p170 = scmp.eq.s32.totalorder %s22, 1
      %p171 = por %p169, %p170
      %p173 = scmp.ne.s32.totalorder %s158, %s172
      %p174 = scmp.eq.s32.totalorder %s22, 0
      %p175 = por %p173, %p174
      %s176 = ssub.s32 %s16, %s23
      %p177 = scmp.eq.s32.totalorder %s176, 0
      %s179 = sadd.s32 %s178, 1
      %s180 = scalar_select %p177, %s178, %s179
      %p183 = pneg %p177
      %p184 = scmp.eq.s32.totalorder %s16, 1
      %p185 = por %p183, %p184
      %p186 = scmp.ne.s32.totalorder %s178, %s181
      %p187 = scmp.eq.s32.totalorder %s16, 0
      %p188 = por %p186, %p187
      %p189 = scmp.ne.s32.totalorder %s178, %s181
      %p190 = scmp.eq.s32.totalorder %s21, 1
      %p191 = por %p189, %p190
      %p192 = scmp.ne.s32.totalorder %s181, %s182
      %p193 = scmp.eq.s32.totalorder %s21, 0
      %p194 = por %p192, %p193
      %p195 = scmp.ne.s32.totalorder %s181, %s182
      %p196 = scmp.eq.s32.totalorder %s22, 1
      %p197 = por %p195, %p196
      %p199 = scmp.ne.s32.totalorder %s182, %s198
      %p200 = scmp.eq.s32.totalorder %s22, 0
      %p201 = por %p199, %p200
      %p202 = scmp.le.s32.totalorder 1, %s16
      %p203 = scmp.lt.s32.totalorder %s16, 3
      %p204 = pnand %p202, %p203
      %p205 = pneg %p204
      // Predicated region
      $region9: #{tpu_custom_call.1} parent=5 // pred_check
        _
      $region10: #{tpu_custom_call.1} parent=5 // pred_check_branch
        %207 = sbr.rel (%p204) target = $region12
      $region11: #{tpu_custom_call.1} parent=5 // pred_region
        %s208 = ssub.s32 %s16, 1
        // Predicated region
        $region13: #{tpu_custom_call.1} parent=11 // pred_check
          %p209 = pneg %p63
        $region14: #{tpu_custom_call.1} parent=11 // pred_check_branch
          %211 = sbr.rel (%p209) target = $region16
        $region15: #{tpu_custom_call.1} parent=11 // pred_region
          _
        $region16: #{tpu_custom_call.1} parent=11 // pred_fallthru
          _
        // Predicated region
        $region17: #{tpu_custom_call.1} parent=11 // pred_check
          %p212 = pneg %p84
        $region18: #{tpu_custom_call.1} parent=11 // pred_check_branch
          %214 = sbr.rel (%p212) target = $region20
        $region19: #{tpu_custom_call.1} parent=11 // pred_region
          _
        $region20: #{tpu_custom_call.1} parent=11 // pred_fallthru
          _
        // Predicated region
        $region21: #{tpu_custom_call.1} parent=11 // pred_check
          %p215 = pneg %p105
        $region22: #{tpu_custom_call.1} parent=11 // pred_check_branch
          %217 = sbr.rel (%p215) target = $region24
        $region23: #{tpu_custom_call.1} parent=11 // pred_region
          _
        $region24: #{tpu_custom_call.1} parent=11 // pred_fallthru
          _
        // Predicated region
        $region25: #{tpu_custom_call.1} parent=11 // pred_check
          %p218 = pneg %p126
        $region26: #{tpu_custom_call.1} parent=11 // pred_check_branch
          %220 = sbr.rel (%p218) target = $region28
        $region27: #{tpu_custom_call.1} parent=11 // pred_region
          _
        $region28: #{tpu_custom_call.1} parent=11 // pred_fallthru
          _
        // Predicated region
        $region29: #{tpu_custom_call.1} parent=11 // pred_check
          %p221 = pneg %p147
        $region30: #{tpu_custom_call.1} parent=11 // pred_check_branch
          %223 = sbr.rel (%p221) target = $region32
        $region31: #{tpu_custom_call.1} parent=11 // pred_region
          _
        $region32: #{tpu_custom_call.1} parent=11 // pred_fallthru
          _
        // Predicated region
        $region33: #{tpu_custom_call.1} parent=11 // pred_check
          %p224 = pneg %p168
        $region34: #{tpu_custom_call.1} parent=11 // pred_check_branch
          %226 = sbr.rel (%p224) target = $region36
        $region35: #{tpu_custom_call.1} parent=11 // pred_region
          _
        $region36: #{tpu_custom_call.1} parent=11 // pred_fallthru
          _
      $region12: #{tpu_custom_call.1} parent=5 // pred_fallthru
        _
      %p227 = scmp.lt.s32.totalorder %s16, 2
      // Predicated region
      $region37: #{tpu_custom_call.1} parent=5 // pred_check
        %p228 = pneg %p227
      $region38: #{tpu_custom_call.1} parent=5 // pred_check_branch
        %230 = sbr.rel (%p228) target = $region40
      $region39: #{tpu_custom_call.1} parent=5 // pred_region
        // Predicated region
        $region41: #{tpu_custom_call.1} parent=39 // pred_check
          %p231 = pneg %p36
        $region42: #{tpu_custom_call.1} parent=39 // pred_check_branch
          %233 = sbr.rel (%p231) target = $region44
        $region43: #{tpu_custom_call.1} parent=39 // pred_region
          %p234 = scmp.lt.s32.totalorder %s16, 1
          %s235 = scalar_select %p234, %s16, 1
          %s236 = smul.addr %s235, 128
          %s237 = smul.addr %s236, 2
          %s238 = scalar_lea.vmem %s0, %s237
        $region44: #{tpu_custom_call.1} parent=39 // pred_fallthru
          _
      $region40: #{tpu_custom_call.1} parent=5 // pred_fallthru
        _
      %p239 = scmp.le.s32.totalorder 1, %s16
      %p240 = scmp.lt.s32.totalorder %s16, 3
      %p241 = pnand %p239, %p240
      %p242 = pneg %p241
      // Predicated region
      $region45: #{tpu_custom_call.1} parent=5 // pred_check
        _
      $region46: #{tpu_custom_call.1} parent=5 // pred_check_branch
        %244 = sbr.rel (%p241) target = $region48
      $region47: #{tpu_custom_call.1} parent=5 // pred_region
        %s245 = ssub.s32 %s16, 1
        %p246 = scmp.lt.s32.totalorder %s21, 1
        %s247 = scalar_select %p246, %s21, 1
        %s248 = smul.addr %s247, 128
        %s249 = smul.addr %s248, 2
        %s250 = scalar_lea.vmem %s0, %s249
        %p251 = pneg %p42
        %p252 = pneg %p39
        %p253 = pneg %p63
        %p254 = pneg %p60
        %p255 = pneg %p84
        %p256 = pneg %p81
        %p257 = pneg %p105
        %p258 = pneg %p102
        %p259 = pneg %p126
        %p260 = pneg %p123
        %p261 = pneg %p147
        %p262 = pneg %p144
        %p263 = pneg %p168
        %p264 = pneg %p165
        %p265 = pneg %p194
        %p266 = pneg %p191
        %s267 = sand.u32 %s181, 1
        %s268 = scalar_lea.sflag [#allocation7], %s267
        %s269 = sand.u32 %s181, 1
        %s270 = smul.addr %s269, 64
        %s271 = scalar_lea.vmem [#allocation6], %s270
        %p272 = scmp.lt.s32.totalorder %s21, 1
        %s273 = scalar_select %p272, %s21, 1
        %s274 = smul.addr %s273, 128
        %s275 = smul.addr %s274, 2
        %s276 = scalar_lea.vmem %s0, %s275
        %v277 = vld [vmem:[%s276] sm:$0x3]
        %v278 = vld [vmem:[%s276 + $0x2] sm:$0x3]
        %v279 = vld [vmem:[%s276 + $0x4] sm:$0x3]
        %v280 = vld [vmem:[%s276 + $0x6] sm:$0x3]
        %v281 = vld [vmem:[%s276 + $0x8] sm:$0x3]
        %v282 = vld [vmem:[%s276 + $0xa] sm:$0x3]
        %v283 = vld [vmem:[%s276 + $0xc] sm:$0x3]
        %v284 = vld [vmem:[%s276 + $0xe] sm:$0x3]
        %v285 = vld [vmem:[%s276 + $0x10] sm:$0x3]
        %v286 = vld [vmem:[%s276 + $0x12] sm:$0x3]
        %v287 = vld [vmem:[%s276 + $0x14] sm:$0x3]
        %v288 = vld [vmem:[%s276 + $0x16] sm:$0x3]
        %v289 = vld [vmem:[%s276 + $0x18] sm:$0x3]
        %v290 = vld [vmem:[%s276 + $0x1a] sm:$0x3]
        %v291 = vld [vmem:[%s276 + $0x1c] sm:$0x3]
        %v292 = vld [vmem:[%s276 + $0x1e] sm:$0x3]
        %v293 = vld [vmem:[%s276 + $0x20] sm:$0x3]
        %v294 = vld [vmem:[%s276 + $0x22] sm:$0x3]
        %v295 = vld [vmem:[%s276 + $0x24] sm:$0x3]
        %v296 = vld [vmem:[%s276 + $0x26] sm:$0x3]
        %v297 = vld [vmem:[%s276 + $0x28] sm:$0x3]
        %v298 = vld [vmem:[%s276 + $0x2a] sm:$0x3]
        %v299 = vld [vmem:[%s276 + $0x2c] sm:$0x3]
        %v300 = vld [vmem:[%s276 + $0x2e] sm:$0x3]
        %v301 = vld [vmem:[%s276 + $0x30] sm:$0x3]
        %v302 = vld [vmem:[%s276 + $0x32] sm:$0x3]
        %v303 = vld [vmem:[%s276 + $0x34] sm:$0x3]
        %v304 = vld [vmem:[%s276 + $0x36] sm:$0x3]
        %v305 = vld [vmem:[%s276 + $0x38] sm:$0x3]
        %v306 = vld [vmem:[%s276 + $0x3a] sm:$0x3]
        %v307 = vld [vmem:[%s276 + $0x3c] sm:$0x3]
        %v308 = vld [vmem:[%s276 + $0x3e] sm:$0x3]
        %v309 = vld [vmem:[%s276 + $0x40] sm:$0x3]
        %v310 = vld [vmem:[%s276 + $0x42] sm:$0x3]
        %v311 = vld [vmem:[%s276 + $0x44] sm:$0x3]
        %v312 = vld [vmem:[%s276 + $0x46] sm:$0x3]
        %v313 = vld [vmem:[%s276 + $0x48] sm:$0x3]
        %v314 = vld [vmem:[%s276 + $0x4a] sm:$0x3]
        %v315 = vld [vmem:[%s276 + $0x4c] sm:$0x3]
        %v316 = vld [vmem:[%s276 + $0x4e] sm:$0x3]
        %v317 = vld [vmem:[%s276 + $0x50] sm:$0x3]
        %v318 = vld [vmem:[%s276 + $0x52] sm:$0x3]
        %v319 = vld [vmem:[%s276 + $0x54] sm:$0x3]
        %v320 = vld [vmem:[%s276 + $0x56] sm:$0x3]
        %v321 = vld [vmem:[%s276 + $0x58] sm:$0x3]
        %v322 = vld [vmem:[%s276 + $0x5a] sm:$0x3]
        %v323 = vld [vmem:[%s276 + $0x5c] sm:$0x3]
        %v324 = vld [vmem:[%s276 + $0x5e] sm:$0x3]
        %v325 = vld [vmem:[%s276 + $0x60] sm:$0x3]
        %v326 = vld [vmem:[%s276 + $0x62] sm:$0x3]
        %v327 = vld [vmem:[%s276 + $0x64] sm:$0x3]
        %v328 = vld [vmem:[%s276 + $0x66] sm:$0x3]
        %v329 = vld [vmem:[%s276 + $0x68] sm:$0x3]
        %v330 = vld [vmem:[%s276 + $0x6a] sm:$0x3]
        %v331 = vld [vmem:[%s276 + $0x6c] sm:$0x3]
        %v332 = vld [vmem:[%s276 + $0x6e] sm:$0x3]
        %v333 = vld [vmem:[%s276 + $0x70] sm:$0x3]
        %v334 = vld [vmem:[%s276 + $0x72] sm:$0x3]
        %v335 = vld [vmem:[%s276 + $0x74] sm:$0x3]
        %v336 = vld [vmem:[%s276 + $0x76] sm:$0x3]
        %v337 = vld [vmem:[%s276 + $0x78] sm:$0x3]
        %v338 = vld [vmem:[%s276 + $0x7a] sm:$0x3]
        %v339 = vld [vmem:[%s276 + $0x7c] sm:$0x3]
        %v340 = vld [vmem:[%s276 + $0x7e] sm:$0x3]
        %v341 = vld [vmem:[%s276 + $0x80] sm:$0x3]
        %v342 = vld [vmem:[%s276 + $0x82] sm:$0x3]
        %v343 = vld [vmem:[%s276 + $0x84] sm:$0x3]
        %v344 = vld [vmem:[%s276 + $0x86] sm:$0x3]
        %v345 = vld [vmem:[%s276 + $0x88] sm:$0x3]
        %v346 = vld [vmem:[%s276 + $0x8a] sm:$0x3]
        %v347 = vld [vmem:[%s276 + $0x8c] sm:$0x3]
        %v348 = vld [vmem:[%s276 + $0x8e] sm:$0x3]
        %v349 = vld [vmem:[%s276 + $0x90] sm:$0x3]
        %v350 = vld [vmem:[%s276 + $0x92] sm:$0x3]
        %v351 = vld [vmem:[%s276 + $0x94] sm:$0x3]
        %v352 = vld [vmem:[%s276 + $0x96] sm:$0x3]
        %v353 = vld [vmem:[%s276 + $0x98] sm:$0x3]
        %v354 = vld [vmem:[%s276 + $0x9a] sm:$0x3]
        %v355 = vld [vmem:[%s276 + $0x9c] sm:$0x3]
        %v356 = vld [vmem:[%s276 + $0x9e] sm:$0x3]
        %v357 = vld [vmem:[%s276 + $0xa0] sm:$0x3]
        %v358 = vld [vmem:[%s276 + $0xa2] sm:$0x3]
        %v359 = vld [vmem:[%s276 + $0xa4] sm:$0x3]
        %v360 = vld [vmem:[%s276 + $0xa6] sm:$0x3]
        %v361 = vld [vmem:[%s276 + $0xa8] sm:$0x3]
        %v362 = vld [vmem:[%s276 + $0xaa] sm:$0x3]
        %v363 = vld [vmem:[%s276 + $0xac] sm:$0x3]
        %v364 = vld [vmem:[%s276 + $0xae] sm:$0x3]
        %v365 = vld [vmem:[%s276 + $0xb0] sm:$0x3]
        %v366 = vld [vmem:[%s276 + $0xb2] sm:$0x3]
        %v367 = vld [vmem:[%s276 + $0xb4] sm:$0x3]
        %v368 = vld [vmem:[%s276 + $0xb6] sm:$0x3]
        %v369 = vld [vmem:[%s276 + $0xb8] sm:$0x3]
        %v370 = vld [vmem:[%s276 + $0xba] sm:$0x3]
        %v371 = vld [vmem:[%s276 + $0xbc] sm:$0x3]
        %v372 = vld [vmem:[%s276 + $0xbe] sm:$0x3]
        %v373 = vld [vmem:[%s276 + $0xc0] sm:$0x3]
        %v374 = vld [vmem:[%s276 + $0xc2] sm:$0x3]
        %v375 = vld [vmem:[%s276 + $0xc4] sm:$0x3]
        %v376 = vld [vmem:[%s276 + $0xc6] sm:$0x3]
        %v377 = vld [vmem:[%s276 + $0xc8] sm:$0x3]
        %v378 = vld [vmem:[%s276 + $0xca] sm:$0x3]
        %v379 = vld [vmem:[%s276 + $0xcc] sm:$0x3]
        %v380 = vld [vmem:[%s276 + $0xce] sm:$0x3]
        %v381 = vld [vmem:[%s276 + $0xd0] sm:$0x3]
        %v382 = vld [vmem:[%s276 + $0xd2] sm:$0x3]
        %v383 = vld [vmem:[%s276 + $0xd4] sm:$0x3]
        %v384 = vld [vmem:[%s276 + $0xd6] sm:$0x3]
        %v385 = vld [vmem:[%s276 + $0xd8] sm:$0x3]
        %v386 = vld [vmem:[%s276 + $0xda] sm:$0x3]
        %v387 = vld [vmem:[%s276 + $0xdc] sm:$0x3]
        %v388 = vld [vmem:[%s276 + $0xde] sm:$0x3]
        %v389 = vld [vmem:[%s276 + $0xe0] sm:$0x3]
        %v390 = vld [vmem:[%s276 + $0xe2] sm:$0x3]
        %v391 = vld [vmem:[%s276 + $0xe4] sm:$0x3]
        %v392 = vld [vmem:[%s276 + $0xe6] sm:$0x3]
        %v393 = vld [vmem:[%s276 + $0xe8] sm:$0x3]
        %v394 = vld [vmem:[%s276 + $0xea] sm:$0x3]
        %v395 = vld [vmem:[%s276 + $0xec] sm:$0x3]
        %v396 = vld [vmem:[%s276 + $0xee] sm:$0x3]
        %v397 = vld [vmem:[%s276 + $0xf0] sm:$0x3]
        %v398 = vld [vmem:[%s276 + $0xf2] sm:$0x3]
        %v399 = vld [vmem:[%s276 + $0xf4] sm:$0x3]
        %v400 = vld [vmem:[%s276 + $0xf6] sm:$0x3]
        %v401 = vld [vmem:[%s276 + $0xf8] sm:$0x3]
        %v402 = vld [vmem:[%s276 + $0xfa] sm:$0x3]
        %v403 = vld [vmem:[%s276 + $0xfc] sm:$0x3]
        %v404 = vld [vmem:[%s276 + $0xfe] sm:$0x3]
        %v405 = vmax.f32 %v277, %v285
        %v406 = vmax.f32 %v278, %v286
        %v407 = vmax.f32 %v279, %v287
        %v408 = vmax.f32 %v280, %v288
        %v409 = vmax.f32 %v281, %v289
        %v410 = vmax.f32 %v282, %v290
        %v411 = vmax.f32 %v283, %v291
        %v412 = vmax.f32 %v284, %v292
        %v413 = vmax.f32 %v293, %v301
        %v414 = vmax.f32 %v294, %v302
        %v415 = vmax.f32 %v295, %v303
        %v416 = vmax.f32 %v296, %v304
        %v417 = vmax.f32 %v297, %v305
        %v418 = vmax.f32 %v298, %v306
        %v419 = vmax.f32 %v299, %v307
        %v420 = vmax.f32 %v300, %v308
        %v421 = vmax.f32 %v309, %v317
        %v422 = vmax.f32 %v310, %v318
        %v423 = vmax.f32 %v311, %v319
        %v424 = vmax.f32 %v312, %v320
        %v425 = vmax.f32 %v313, %v321
        %v426 = vmax.f32 %v314, %v322
        %v427 = vmax.f32 %v315, %v323
        %v428 = vmax.f32 %v316, %v324
        %v429 = vmax.f32 %v325, %v333
        %v430 = vmax.f32 %v326, %v334
        %v431 = vmax.f32 %v327, %v335
        %v432 = vmax.f32 %v328, %v336
        %v433 = vmax.f32 %v329, %v337
        %v434 = vmax.f32 %v330, %v338
        %v435 = vmax.f32 %v331, %v339
        %v436 = vmax.f32 %v332, %v340
        %v437 = vmax.f32 %v341, %v349
        %v438 = vmax.f32 %v342, %v350
        %v439 = vmax.f32 %v343, %v351
        %v440 = vmax.f32 %v344, %v352
        %v441 = vmax.f32 %v345, %v353
        %v442 = vmax.f32 %v346, %v354
        %v443 = vmax.f32 %v347, %v355
        %v444 = vmax.f32 %v348, %v356
        %v445 = vmax.f32 %v357, %v365
        %v446 = vmax.f32 %v358, %v366
        %v447 = vmax.f32 %v359, %v367
        %v448 = vmax.f32 %v360, %v368
        %v449 = vmax.f32 %v361, %v369
        %v450 = vmax.f32 %v362, %v370
        %v451 = vmax.f32 %v363, %v371
        %v452 = vmax.f32 %v364, %v372
        %v453 = vmax.f32 %v373, %v381
        %v454 = vmax.f32 %v374, %v382
        %v455 = vmax.f32 %v375, %v383
        %v456 = vmax.f32 %v376, %v384
        %v457 = vmax.f32 %v377, %v385
        %v458 = vmax.f32 %v378, %v386
        %v459 = vmax.f32 %v379, %v387
        %v460 = vmax.f32 %v380, %v388
        %v461 = vmax.f32 %v389, %v397
        %v462 = vmax.f32 %v390, %v398
        %v463 = vmax.f32 %v391, %v399
        %v464 = vmax.f32 %v392, %v400
        %v465 = vmax.f32 %v393, %v401
        %v466 = vmax.f32 %v394, %v402
        %v467 = vmax.f32 %v395, %v403
        %v468 = vmax.f32 %v396, %v404
        %v533 = vrot.slane %v405, 1
        %v534 = vrot.slane %v406, 1
        %v535 = vrot.slane %v407, 1
        %v536 = vrot.slane %v408, 1
        %v537 = vrot.slane %v409, 1
        %v538 = vrot.slane %v410, 1
        %v539 = vrot.slane %v411, 1
        %v540 = vrot.slane %v412, 1
        %v541 = vrot.slane %v413, 1
        %v542 = vrot.slane %v414, 1
        %v543 = vrot.slane %v415, 1
        %v544 = vrot.slane %v416, 1
        %v545 = vrot.slane %v417, 1
        %v546 = vrot.slane %v418, 1
        %v547 = vrot.slane %v419, 1
        %v548 = vrot.slane %v420, 1
        %v549 = vrot.slane %v421, 1
        %v550 = vrot.slane %v422, 1
        %v551 = vrot.slane %v423, 1
        %v552 = vrot.slane %v424, 1
        %v553 = vrot.slane %v425, 1
        %v554 = vrot.slane %v426, 1
        %v555 = vrot.slane %v427, 1
        %v556 = vrot.slane %v428, 1
        %v557 = vrot.slane %v429, 1
        %v558 = vrot.slane %v430, 1
        %v559 = vrot.slane %v431, 1
        %v560 = vrot.slane %v432, 1
        %v561 = vrot.slane %v433, 1
        %v562 = vrot.slane %v434, 1
        %v563 = vrot.slane %v435, 1
        %v564 = vrot.slane %v436, 1
        %v565 = vrot.slane %v437, 1
        %v566 = vrot.slane %v438, 1
        %v567 = vrot.slane %v439, 1
        %v568 = vrot.slane %v440, 1
        %v569 = vrot.slane %v441, 1
        %v570 = vrot.slane %v442, 1
        %v571 = vrot.slane %v443, 1
        %v572 = vrot.slane %v444, 1
        %v573 = vrot.slane %v445, 1
        %v574 = vrot.slane %v446, 1
        %v575 = vrot.slane %v447, 1
        %v576 = vrot.slane %v448, 1
        %v577 = vrot.slane %v449, 1
        %v578 = vrot.slane %v450, 1
        %v579 = vrot.slane %v451, 1
        %v580 = vrot.slane %v452, 1
        %v581 = vrot.slane %v453, 1
        %v582 = vrot.slane %v454, 1
        %v583 = vrot.slane %v455, 1
        %v584 = vrot.slane %v456, 1
        %v585 = vrot.slane %v457, 1
        %v586 = vrot.slane %v458, 1
        %v587 = vrot.slane %v459, 1
        %v588 = vrot.slane %v460, 1
        %v589 = vrot.slane %v461, 1
        %v590 = vrot.slane %v462, 1
        %v591 = vrot.slane %v463, 1
        %v592 = vrot.slane %v464, 1
        %v593 = vrot.slane %v465, 1
        %v594 = vrot.slane %v466, 1
        %v595 = vrot.slane %v467, 1
        %v596 = vrot.slane %v468, 1
        %v661 = vmax.f32 %v405, %v533
        %v662 = vmax.f32 %v406, %v534
        %v663 = vmax.f32 %v407, %v535
        %v664 = vmax.f32 %v408, %v536
        %v665 = vmax.f32 %v409, %v537
        %v666 = vmax.f32 %v410, %v538
        %v667 = vmax.f32 %v411, %v539
        %v668 = vmax.f32 %v412, %v540
        %v669 = vmax.f32 %v413, %v541
        %v670 = vmax.f32 %v414, %v542
        %v671 = vmax.f32 %v415, %v543
        %v672 = vmax.f32 %v416, %v544
        %v673 = vmax.f32 %v417, %v545
        %v674 = vmax.f32 %v418, %v546
        %v675 = vmax.f32 %v419, %v547
        %v676 = vmax.f32 %v420, %v548
        %v677 = vmax.f32 %v421, %v549
        %v678 = vmax.f32 %v422, %v550
        %v679 = vmax.f32 %v423, %v551
        %v680 = vmax.f32 %v424, %v552
        %v681 = vmax.f32 %v425, %v553
        %v682 = vmax.f32 %v426, %v554
        %v683 = vmax.f32 %v427, %v555
        %v684 = vmax.f32 %v428, %v556
        %v685 = vmax.f32 %v429, %v557
        %v686 = vmax.f32 %v430, %v558
        %v687 = vmax.f32 %v431, %v559
        %v688 = vmax.f32 %v432, %v560
        %v689 = vmax.f32 %v433, %v561
        %v690 = vmax.f32 %v434, %v562
        %v691 = vmax.f32 %v435, %v563
        %v692 = vmax.f32 %v436, %v564
        %v693 = vmax.f32 %v437, %v565
        %v694 = vmax.f32 %v438, %v566
        %v695 = vmax.f32 %v439, %v567
        %v696 = vmax.f32 %v440, %v568
        %v697 = vmax.f32 %v441, %v569
        %v698 = vmax.f32 %v442, %v570
        %v699 = vmax.f32 %v443, %v571
        %v700 = vmax.f32 %v444, %v572
        %v701 = vmax.f32 %v445, %v573
        %v702 = vmax.f32 %v446, %v574
        %v703 = vmax.f32 %v447, %v575
        %v704 = vmax.f32 %v448, %v576
        %v705 = vmax.f32 %v449, %v577
        %v706 = vmax.f32 %v450, %v578
        %v707 = vmax.f32 %v451, %v579
        %v708 = vmax.f32 %v452, %v580
        %v709 = vmax.f32 %v453, %v581
        %v710 = vmax.f32 %v454, %v582
        %v711 = vmax.f32 %v455, %v583
        %v712 = vmax.f32 %v456, %v584
        %v713 = vmax.f32 %v457, %v585
        %v714 = vmax.f32 %v458, %v586
        %v715 = vmax.f32 %v459, %v587
        %v716 = vmax.f32 %v460, %v588
        %v717 = vmax.f32 %v461, %v589
        %v718 = vmax.f32 %v462, %v590
        %v719 = vmax.f32 %v463, %v591
        %v720 = vmax.f32 %v464, %v592
        %v721 = vmax.f32 %v465, %v593
        %v722 = vmax.f32 %v466, %v594
        %v723 = vmax.f32 %v467, %v595
        %v724 = vmax.f32 %v468, %v596
        %vm725 = vcmask 31744
        %726 = vst.msk [vmem:[#allocation2] sm:$0xff] %vm725, 0.0
        %vm727 = vcmask 25600
        %728 = vst.msk [vmem:[#allocation2 + $0x8] sm:$0x3] %vm727, 0.0
        %729 = vst.msk [vmem:[#allocation2 + $0x10] sm:$0xff] %vm725, 0.0
        %730 = vst.msk [vmem:[#allocation2 + $0x18] sm:$0x3] %vm727, 0.0
        %731 = vst.msk [vmem:[#allocation2 + $0x20] sm:$0xff] %vm725, 0.0
        %732 = vst.msk [vmem:[#allocation2 + $0x28] sm:$0x3] %vm727, 0.0
        %733 = vst.msk [vmem:[#allocation2 + $0x30] sm:$0xff] %vm725, 0.0
        %734 = vst.msk [vmem:[#allocation2 + $0x38] sm:$0x3] %vm727, 0.0
        %735 = vst.msk [vmem:[#allocation2 + $0x40] sm:$0xff] %vm725, 0.0
        %736 = vst.msk [vmem:[#allocation2 + $0x48] sm:$0x3] %vm727, 0.0
        %737 = vst.msk [vmem:[#allocation2 + $0x50] sm:$0xff] %vm725, 0.0
        %738 = vst.msk [vmem:[#allocation2 + $0x58] sm:$0x3] %vm727, 0.0
        %739 = vst.msk [vmem:[#allocation2 + $0x60] sm:$0xff] %vm725, 0.0
        %740 = vst.msk [vmem:[#allocation2 + $0x68] sm:$0x3] %vm727, 0.0
        %741 = vst.msk [vmem:[#allocation2 + $0x70] sm:$0xff] %vm725, 0.0
        %742 = vst.msk [vmem:[#allocation2 + $0x78] sm:$0x3] %vm727, 0.0
        %743 = vst.msk [vmem:[#allocation2 + $0x80] sm:$0xff] %vm725, 0.0
        %744 = vst.msk [vmem:[#allocation2 + $0x88] sm:$0x3] %vm727, 0.0
        %745 = vst.msk [vmem:[#allocation2 + $0x90] sm:$0xff] %vm725, 0.0
        %746 = vst.msk [vmem:[#allocation2 + $0x98] sm:$0x3] %vm727, 0.0
        %v811 = vrot.slane %v662, 7
        %vm812 = vcmask 1041409
        %v813 = vsel %vm812, %v811, %v661
        %v814 = vrot.slane %v663, 6
        %vm815 = vcmask 1042434
        %v816 = vsel %vm815, %v814, %v813
        %v817 = vrot.slane %v664, 5
        %vm818 = vcmask 1043459
        %v819 = vsel %vm818, %v817, %v816
        %v820 = vrot.slane %v665, 4
        %vm821 = vcmask 1044484
        %v822 = vsel %vm821, %v820, %v819
        %v823 = vrot.slane %v666, 3
        %vm824 = vcmask 1045509
        %v825 = vsel %vm824, %v823, %v822
        %v826 = vrot.slane %v667, 2
        %vm827 = vcmask 1046534
        %v828 = vsel %vm827, %v826, %v825
        %v829 = vrot.slane %v668, 1
        %vm830 = vcmask 1047559
        %v831 = vsel %vm830, %v829, %v828
        %v832 = vrot.slane %v670, 7
        %v833 = vsel %vm812, %v832, %v669
        %v834 = vrot.slane %v671, 6
        %v835 = vsel %vm815, %v834, %v833
        %v836 = vrot.slane %v672, 5
        %v837 = vsel %vm818, %v836, %v835
        %v838 = vrot.slane %v673, 4
        %v839 = vsel %vm821, %v838, %v837
        %v840 = vrot.slane %v674, 3
        %v841 = vsel %vm824, %v840, %v839
        %v842 = vrot.slane %v675, 2
        %v843 = vsel %vm827, %v842, %v841
        %v844 = vrot.slane %v676, 1
        %v845 = vsel %vm830, %v844, %v843
        %v846 = vrot.slane %v678, 7
        %v847 = vsel %vm812, %v846, %v677
        %v848 = vrot.slane %v679, 6
        %v849 = vsel %vm815, %v848, %v847
        %v850 = vrot.slane %v680, 5
        %v851 = vsel %vm818, %v850, %v849
        %v852 = vrot.slane %v681, 4
        %v853 = vsel %vm821, %v852, %v851
        %v854 = vrot.slane %v682, 3
        %v855 = vsel %vm824, %v854, %v853
        %v856 = vrot.slane %v683, 2
        %v857 = vsel %vm827, %v856, %v855
        %v858 = vrot.slane %v684, 1
        %v859 = vsel %vm830, %v858, %v857
        %v860 = vrot.slane %v686, 7
        %v861 = vsel %vm812, %v860, %v685
        %v862 = vrot.slane %v687, 6
        %v863 = vsel %vm815, %v862, %v861
        %v864 = vrot.slane %v688, 5
        %v865 = vsel %vm818, %v864, %v863
        %v866 = vrot.slane %v689, 4
        %v867 = vsel %vm821, %v866, %v865
        %v868 = vrot.slane %v690, 3
        %v869 = vsel %vm824, %v868, %v867
        %v870 = vrot.slane %v691, 2
        %v871 = vsel %vm827, %v870, %v869
        %v872 = vrot.slane %v692, 1
        %v873 = vsel %vm830, %v872, %v871
        %v874 = vrot.slane %v694, 7
        %v875 = vsel %vm812, %v874, %v693
        %v876 = vrot.slane %v695, 6
        %v877 = vsel %vm815, %v876, %v875
        %v878 = vrot.slane %v696, 5
        %v879 = vsel %vm818, %v878, %v877
        %v880 = vrot.slane %v697, 4
        %v881 = vsel %vm821, %v880, %v879
        %v882 = vrot.slane %v698, 3
        %v883 = vsel %vm824, %v882, %v881
        %v884 = vrot.slane %v699, 2
        %v885 = vsel %vm827, %v884, %v883
        %v886 = vrot.slane %v700, 1
        %v887 = vsel %vm830, %v886, %v885
        %v888 = vrot.slane %v702, 7
        %v889 = vsel %vm812, %v888, %v701
        %v890 = vrot.slane %v703, 6
        %v891 = vsel %vm815, %v890, %v889
        %v892 = vrot.slane %v704, 5
        %v893 = vsel %vm818, %v892, %v891
        %v894 = vrot.slane %v705, 4
        %v895 = vsel %vm821, %v894, %v893
        %v896 = vrot.slane %v706, 3
        %v897 = vsel %vm824, %v896, %v895
        %v898 = vrot.slane %v707, 2
        %v899 = vsel %vm827, %v898, %v897
        %v900 = vrot.slane %v708, 1
        %v901 = vsel %vm830, %v900, %v899
        %v902 = vrot.slane %v710, 7
        %v903 = vsel %vm812, %v902, %v709
        %v904 = vrot.slane %v711, 6
        %v905 = vsel %vm815, %v904, %v903
        %v906 = vrot.slane %v712, 5
        %v907 = vsel %vm818, %v906, %v905
        %v908 = vrot.slane %v713, 4
        %v909 = vsel %vm821, %v908, %v907
        %v910 = vrot.slane %v714, 3
        %v911 = vsel %vm824, %v910, %v909
        %v912 = vrot.slane %v715, 2
        %v913 = vsel %vm827, %v912, %v911
        %v914 = vrot.slane %v716, 1
        %v915 = vsel %vm830, %v914, %v913
        %v916 = vrot.slane %v718, 7
        %v917 = vsel %vm812, %v916, %v717
        %v918 = vrot.slane %v719, 6
        %v919 = vsel %vm815, %v918, %v917
        %v920 = vrot.slane %v720, 5
        %v921 = vsel %vm818, %v920, %v919
        %v922 = vrot.slane %v721, 4
        %v923 = vsel %vm821, %v922, %v921
        %v924 = vrot.slane %v722, 3
        %v925 = vsel %vm824, %v924, %v923
        %v926 = vrot.slane %v723, 2
        %v927 = vsel %vm827, %v926, %v925
        %v928 = vrot.slane %v724, 1
        %v929 = vsel %vm830, %v928, %v927
        %s938 = scalar_lea.vmem [#allocation2], 16
        %939 = vst.msk [vmem:[%s938 + $0x1] sm:$0xff] %vm725, %v831
        %940 = vst.msk [vmem:[%s938 + $0x11] sm:$0xff] %vm725, %v845
        %941 = vst.msk [vmem:[%s938 + $0x21] sm:$0xff] %vm725, %v859
        %942 = vst.msk [vmem:[%s938 + $0x31] sm:$0xff] %vm725, %v873
        %943 = vst.msk [vmem:[%s938 + $0x41] sm:$0xff] %vm725, %v887
        %944 = vst.msk [vmem:[%s938 + $0x51] sm:$0xff] %vm725, %v901
        %945 = vst.msk [vmem:[%s938 + $0x61] sm:$0xff] %vm725, %v915
        %946 = vst.msk [vmem:[%s938 + $0x71] sm:$0xff] %vm725, %v929
        %vm947 = vcmask 64512
        %948 = vst.msk [vmem:[#allocation4] sm:$0xff] %vm947, 0.0
        %949 = vst.msk [vmem:[#allocation4 + $0x8] sm:$0xff] %vm947, 0.0
        %950 = vst.msk [vmem:[#allocation4 + $0x10] sm:$0xff] %vm947, 0.0
        %951 = vst.msk [vmem:[#allocation4 + $0x18] sm:$0xff] %vm947, 0.0
        %952 = vst.msk [vmem:[#allocation4 + $0x20] sm:$0xff] %vm947, 0.0
        %953 = vst.msk [vmem:[#allocation4 + $0x28] sm:$0xff] %vm947, 0.0
        %954 = vst.msk [vmem:[#allocation4 + $0x30] sm:$0xff] %vm947, 0.0
        %955 = vst.msk [vmem:[#allocation4 + $0x38] sm:$0xff] %vm947, 0.0
        %v956 = vld [vmem:[#allocation2] sm:$0xff]
        %v957 = vld [vmem:[#allocation2 + $0x10] sm:$0xff]
        %v958 = vld [vmem:[#allocation2 + $0x20] sm:$0xff]
        %v959 = vld [vmem:[#allocation2 + $0x30] sm:$0xff]
        %v960 = vld [vmem:[#allocation2 + $0x40] sm:$0xff]
        %v961 = vld [vmem:[#allocation2 + $0x50] sm:$0xff]
        %v962 = vld [vmem:[#allocation2 + $0x60] sm:$0xff]
        %v963 = vld [vmem:[#allocation2 + $0x70] sm:$0xff]
        %v964 = vld [vmem:[#allocation4] sm:$0xff]
        %v965 = vld [vmem:[#allocation4 + $0x8] sm:$0xff]
        %v966 = vld [vmem:[#allocation4 + $0x10] sm:$0xff]
        %v967 = vld [vmem:[#allocation4 + $0x18] sm:$0xff]
        %v968 = vld [vmem:[#allocation4 + $0x20] sm:$0xff]
        %v969 = vld [vmem:[#allocation4 + $0x28] sm:$0xff]
        %v970 = vld [vmem:[#allocation4 + $0x30] sm:$0xff]
        %v971 = vld [vmem:[#allocation4 + $0x38] sm:$0xff]
        %v972 = vld [vmem:[%s1] sm:$0xf]
        %v974 = vsel %vm725, %v956, 0
        %v977 = vsel %vm725, %v957, 0
        %v980 = vsel %vm725, %v958, 0
        %v983 = vsel %vm725, %v959, 0
        %v986 = vsel %vm725, %v960, 0
        %v989 = vsel %vm725, %v961, 0
        %v992 = vsel %vm725, %v962, 0
        %v995 = vsel %vm725, %v963, 0
        %vm997 = vcmask 1043456
        %v999 = vsel %vm997, %v972, 0
        %1001 = vmatprep.subr.mxu0 0.0
        %1002 = vmatpush1.msra.mxu0 0.0
        %1003 = vmatprep.subr.mxu0 0.0
        %1004 = vmatpush1.msra.mxu0 0.0
        %1005 = vmatprep.subr.mxu0 0.0
        %1006 = vmatpush1.msra.mxu0 0.0
        %1007 = vmatprep.subr.mxu0 0.0
        %1008 = vmatpush1.msra.mxu0 0.0
        %1009 = vmatprep.subr.mxu0 0.0
        %1010 = vmatpush1.msra.mxu0 0.0
        %1011 = vmatprep.subr.mxu0 0.0
        %1012 = vmatpush1.msra.mxu0 0.0
        %1013 = vmatprep.subr.mxu0 0.0
        %1014 = vmatpush1.msra.mxu0 0.0
        %1015 = vmatprep.subr.mxu0 0.0
        %1016 = vmatpush1.msra.mxu0 0.0
        %1017 = vmatprep.subr.mxu0 0.0
        %1018 = vmatpush1.msra.mxu0 0.0
        %1019 = vmatprep.subr.mxu0 0.0
        %1020 = vmatpush1.msra.mxu0 0.0
        %1021 = vmatprep.subr.mxu0 0.0
        %1022 = vmatpush1.msra.mxu0 0.0
        %1023 = vmatprep.subr.mxu0 0.0
        %1024 = vmatpush1.msra.mxu0 0.0
        %1025 = vmatprep.subr.mxu0 0.0
        %1026 = vmatpush1.msra.mxu0 0.0
        %1027 = vmatprep.subr.mxu0 0.0
        %1028 = vmatpush1.msra.mxu0 0.0
        %1029 = vmatprep.subr.mxu0 0.0
        %1030 = vmatpush1.msra.mxu0 0.0
        %1031 = vmatprep.subr.mxu0 0.0
        %1032 = vmatpush1.msra.mxu0 %v999
        %1033 = vmatprep.subr.mxu0 0.0
        %1034 = vmatpush2.msra.mxu0 0.0
        %1035 = vmatprep.subr.mxu0 0.0
        %1036 = vmatpush2.msra.mxu0 0.0
        %1037 = vmatprep.subr.mxu0 0.0
        %1038 = vmatpush2.msra.mxu0 0.0
        %1039 = vmatprep.subr.mxu0 0.0
        %1040 = vmatpush2.msra.mxu0 0.0
        %1041 = vmatprep.subr.mxu0 0.0
        %1042 = vmatpush2.msra.mxu0 0.0
        %1043 = vmatprep.subr.mxu0 0.0
        %1044 = vmatpush2.msra.mxu0 0.0
        %1045 = vmatprep.subr.mxu0 0.0
        %1046 = vmatpush2.msra.mxu0 0.0
        %1047 = vmatprep.subr.mxu0 0.0
        %1048 = vmatpush2.msra.mxu0 0.0
        %1049 = vmatprep.subr.mxu0 0.0
        %1050 = vmatpush2.msra.mxu0 0.0
        %1051 = vmatprep.subr.mxu0 0.0
        %1052 = vmatpush2.msra.mxu0 0.0
        %1053 = vmatprep.subr.mxu0 0.0
        %1054 = vmatpush2.msra.mxu0 0.0
        %1055 = vmatprep.subr.mxu0 0.0
        %1056 = vmatpush2.msra.mxu0 0.0
        %1057 = vmatprep.subr.mxu0 0.0
        %1058 = vmatpush2.msra.mxu0 0.0
        %1059 = vmatprep.subr.mxu0 0.0
        %1060 = vmatpush2.msra.mxu0 0.0
        %1061 = vmatprep.subr.mxu0 0.0
        %1062 = vmatpush2.msra.mxu0 0.0
        %1063 = vmatprep.subr.mxu0 0.0
        %1064 = vmatpush2.msra.mxu0 0.0
        %1065 = vmatprep.mubr.f32.mxu0 0.0
        %1066 = vmatmul.mubr.f32.gmra.mxu0 %v974
        %v1067 = vpop.f32.mrf.mxu0
        %v1068 = vadd.f32 0.0, %v1067
        %v1069 = vpop.f32.mrf.mxu0
        %1070 = vmatprep.mubr.f32.mxu0 0.0
        %1071 = vmatmul.mubr.f32.gmra.mxu0 %v977
        %v1072 = vpop.f32.mrf.mxu0
        %v1073 = vadd.f32 0.0, %v1072
        %v1074 = vpop.f32.mrf.mxu0
        %1075 = vmatprep.mubr.f32.mxu0 0.0
        %1076 = vmatmul.mubr.f32.gmra.mxu0 %v980
        %v1077 = vpop.f32.mrf.mxu0
        %v1078 = vadd.f32 0.0, %v1077
        %v1079 = vpop.f32.mrf.mxu0
        %1080 = vmatprep.mubr.f32.mxu0 0.0
        %1081 = vmatmul.mubr.f32.gmra.mxu0 %v983
        %v1082 = vpop.f32.mrf.mxu0
        %v1083 = vadd.f32 0.0, %v1082
        %v1084 = vpop.f32.mrf.mxu0
        %1085 = vmatprep.mubr.f32.mxu0 0.0
        %1086 = vmatmul.mubr.f32.gmra.mxu0 %v986
        %v1087 = vpop.f32.mrf.mxu0
        %v1088 = vadd.f32 0.0, %v1087
        %v1089 = vpop.f32.mrf.mxu0
        %1090 = vmatprep.mubr.f32.mxu0 0.0
        %1091 = vmatmul.mubr.f32.gmra.mxu0 %v989
        %v1092 = vpop.f32.mrf.mxu0
        %v1093 = vadd.f32 0.0, %v1092
        %v1094 = vpop.f32.mrf.mxu0
        %1095 = vmatprep.mubr.f32.mxu0 0.0
        %1096 = vmatmul.mubr.f32.gmra.mxu0 %v992
        %v1097 = vpop.f32.mrf.mxu0
        %v1098 = vadd.f32 0.0, %v1097
        %v1099 = vpop.f32.mrf.mxu0
        %1100 = vmatprep.mubr.f32.mxu0 0.0
        %1101 = vmatmul.mubr.f32.gmra.mxu0 %v995
        %v1102 = vpop.f32.mrf.mxu0
        %v1103 = vadd.f32 0.0, %v1102
        %v1104 = vpop.f32.mrf.mxu0
        %1105 = vdwg.mxu0
        %v1106 = vadd.f32 %v964, %v1068
        %v1107 = vadd.f32 %v965, %v1073
        %v1108 = vadd.f32 %v966, %v1078
        %v1109 = vadd.f32 %v967, %v1083
        %v1110 = vadd.f32 %v968, %v1088
        %v1111 = vadd.f32 %v969, %v1093
        %v1112 = vadd.f32 %v970, %v1098
        %v1113 = vadd.f32 %v971, %v1103
        %1114 = vst.msk [vmem:[#allocation4] sm:$0xff] %vm947, %v1106
        %1115 = vst.msk [vmem:[#allocation4 + $0x8] sm:$0xff] %vm947, %v1107
        %1116 = vst.msk [vmem:[#allocation4 + $0x10] sm:$0xff] %vm947, %v1108
        %1117 = vst.msk [vmem:[#allocation4 + $0x18] sm:$0xff] %vm947, %v1109
        %1118 = vst.msk [vmem:[#allocation4 + $0x20] sm:$0xff] %vm947, %v1110
        %1119 = vst.msk [vmem:[#allocation4 + $0x28] sm:$0xff] %vm947, %v1111
        %1120 = vst.msk [vmem:[#allocation4 + $0x30] sm:$0xff] %vm947, %v1112
        %1121 = vst.msk [vmem:[#allocation4 + $0x38] sm:$0xff] %vm947, %v1113
        %v1122 = vld [vmem:[#allocation2 + $0x1] sm:$0xff]
        %v1123 = vld [vmem:[#allocation2 + $0x11] sm:$0xff]
        %v1124 = vld [vmem:[#allocation2 + $0x21] sm:$0xff]
        %v1125 = vld [vmem:[#allocation2 + $0x31] sm:$0xff]
        %v1126 = vld [vmem:[#allocation2 + $0x41] sm:$0xff]
        %v1127 = vld [vmem:[#allocation2 + $0x51] sm:$0xff]
        %v1128 = vld [vmem:[#allocation2 + $0x61] sm:$0xff]
        %v1129 = vld [vmem:[#allocation2 + $0x71] sm:$0xff]
        %v1130 = vld [vmem:[#allocation4] sm:$0xff]
        %v1131 = vld [vmem:[#allocation4 + $0x8] sm:$0xff]
        %v1132 = vld [vmem:[#allocation4 + $0x10] sm:$0xff]
        %v1133 = vld [vmem:[#allocation4 + $0x18] sm:$0xff]
        %v1134 = vld [vmem:[#allocation4 + $0x20] sm:$0xff]
        %v1135 = vld [vmem:[#allocation4 + $0x28] sm:$0xff]
        %v1136 = vld [vmem:[#allocation4 + $0x30] sm:$0xff]
        %v1137 = vld [vmem:[#allocation4 + $0x38] sm:$0xff]
        %s1138 = scalar_lea.vmem %s1, 4
        %v1139 = vld [vmem:[%s1138] sm:$0xf]
        %v1141 = vsel %vm725, %v1122, 0
        %v1144 = vsel %vm725, %v1123, 0
        %v1147 = vsel %vm725, %v1124, 0
        %v1150 = vsel %vm725, %v1125, 0
        %v1153 = vsel %vm725, %v1126, 0
        %v1156 = vsel %vm725, %v1127, 0
        %v1159 = vsel %vm725, %v1128, 0
        %v1162 = vsel %vm725, %v1129, 0
        %v1165 = vsel %vm997, %v1139, 0
        %1167 = vmatprep.subr.mxu0 0.0
        %1168 = vmatpush1.msra.mxu0 0.0
        %1169 = vmatprep.subr.mxu0 0.0
        %1170 = vmatpush1.msra.mxu0 0.0
        %1171 = vmatprep.subr.mxu0 0.0
        %1172 = vmatpush1.msra.mxu0 0.0
        %1173 = vmatprep.subr.mxu0 0.0
        %1174 = vmatpush1.msra.mxu0 0.0
        %1175 = vmatprep.subr.mxu0 0.0
        %1176 = vmatpush1.msra.mxu0 0.0
        %1177 = vmatprep.subr.mxu0 0.0
        %1178 = vmatpush1.msra.mxu0 0.0
        %1179 = vmatprep.subr.mxu0 0.0
        %1180 = vmatpush1.msra.mxu0 0.0
        %1181 = vmatprep.subr.mxu0 0.0
        %1182 = vmatpush1.msra.mxu0 0.0
        %1183 = vmatprep.subr.mxu0 0.0
        %1184 = vmatpush1.msra.mxu0 0.0
        %1185 = vmatprep.subr.mxu0 0.0
        %1186 = vmatpush1.msra.mxu0 0.0
        %1187 = vmatprep.subr.mxu0 0.0
        %1188 = vmatpush1.msra.mxu0 0.0
        %1189 = vmatprep.subr.mxu0 0.0
        %1190 = vmatpush1.msra.mxu0 0.0
        %1191 = vmatprep.subr.mxu0 0.0
        %1192 = vmatpush1.msra.mxu0 0.0
        %1193 = vmatprep.subr.mxu0 0.0
        %1194 = vmatpush1.msra.mxu0 0.0
        %1195 = vmatprep.subr.mxu0 0.0
        %1196 = vmatpush1.msra.mxu0 0.0
        %1197 = vmatprep.subr.mxu0 0.0
        %1198 = vmatpush1.msra.mxu0 %v1165
        %1199 = vmatprep.subr.mxu0 0.0
        %1200 = vmatpush2.msra.mxu0 0.0
        %1201 = vmatprep.subr.mxu0 0.0
        %1202 = vmatpush2.msra.mxu0 0.0
        %1203 = vmatprep.subr.mxu0 0.0
        %1204 = vmatpush2.msra.mxu0 0.0
        %1205 = vmatprep.subr.mxu0 0.0
        %1206 = vmatpush2.msra.mxu0 0.0
        %1207 = vmatprep.subr.mxu0 0.0
        %1208 = vmatpush2.msra.mxu0 0.0
        %1209 = vmatprep.subr.mxu0 0.0
        %1210 = vmatpush2.msra.mxu0 0.0
        %1211 = vmatprep.subr.mxu0 0.0
        %1212 = vmatpush2.msra.mxu0 0.0
        %1213 = vmatprep.subr.mxu0 0.0
        %1214 = vmatpush2.msra.mxu0 0.0
        %1215 = vmatprep.subr.mxu0 0.0
        %1216 = vmatpush2.msra.mxu0 0.0
        %1217 = vmatprep.subr.mxu0 0.0
        %1218 = vmatpush2.msra.mxu0 0.0
        %1219 = vmatprep.subr.mxu0 0.0
        %1220 = vmatpush2.msra.mxu0 0.0
        %1221 = vmatprep.subr.mxu0 0.0
        %1222 = vmatpush2.msra.mxu0 0.0
        %1223 = vmatprep.subr.mxu0 0.0
        %1224 = vmatpush2.msra.mxu0 0.0
        %1225 = vmatprep.subr.mxu0 0.0
        %1226 = vmatpush2.msra.mxu0 0.0
        %1227 = vmatprep.subr.mxu0 0.0
        %1228 = vmatpush2.msra.mxu0 0.0
        %1229 = vmatprep.subr.mxu0 0.0
        %1230 = vmatpush2.msra.mxu0 0.0
        %1231 = vmatprep.mubr.f32.mxu0 0.0
        %1232 = vmatmul.mubr.f32.gmra.mxu0 %v1141
        %v1233 = vpop.f32.mrf.mxu0
        %v1234 = vadd.f32 0.0, %v1233
        %v1235 = vpop.f32.mrf.mxu0
        %1236 = vmatprep.mubr.f32.mxu0 0.0
        %1237 = vmatmul.mubr.f32.gmra.mxu0 %v1144
        %v1238 = vpop.f32.mrf.mxu0
        %v1239 = vadd.f32 0.0, %v1238
        %v1240 = vpop.f32.mrf.mxu0
        %1241 = vmatprep.mubr.f32.mxu0 0.0
        %1242 = vmatmul.mubr.f32.gmra.mxu0 %v1147
        %v1243 = vpop.f32.mrf.mxu0
        %v1244 = vadd.f32 0.0, %v1243
        %v1245 = vpop.f32.mrf.mxu0
        %1246 = vmatprep.mubr.f32.mxu0 0.0
        %1247 = vmatmul.mubr.f32.gmra.mxu0 %v1150
        %v1248 = vpop.f32.mrf.mxu0
        %v1249 = vadd.f32 0.0, %v1248
        %v1250 = vpop.f32.mrf.mxu0
        %1251 = vmatprep.mubr.f32.mxu0 0.0
        %1252 = vmatmul.mubr.f32.gmra.mxu0 %v1153
        %v1253 = vpop.f32.mrf.mxu0
        %v1254 = vadd.f32 0.0, %v1253
        %v1255 = vpop.f32.mrf.mxu0
        %1256 = vmatprep.mubr.f32.mxu0 0.0
        %1257 = vmatmul.mubr.f32.gmra.mxu0 %v1156
        %v1258 = vpop.f32.mrf.mxu0
        %v1259 = vadd.f32 0.0, %v1258
        %v1260 = vpop.f32.mrf.mxu0
        %1261 = vmatprep.mubr.f32.mxu0 0.0
        %1262 = vmatmul.mubr.f32.gmra.mxu0 %v1159
        %v1263 = vpop.f32.mrf.mxu0
        %v1264 = vadd.f32 0.0, %v1263
        %v1265 = vpop.f32.mrf.mxu0
        %1266 = vmatprep.mubr.f32.mxu0 0.0
        %1267 = vmatmul.mubr.f32.gmra.mxu0 %v1162
        %v1268 = vpop.f32.mrf.mxu0
        %v1269 = vadd.f32 0.0, %v1268
        %v1270 = vpop.f32.mrf.mxu0
        %1271 = vdwg.mxu0
        %v1272 = vadd.f32 %v1130, %v1234
        %v1273 = vadd.f32 %v1131, %v1239
        %v1274 = vadd.f32 %v1132, %v1244
        %v1275 = vadd.f32 %v1133, %v1249
        %v1276 = vadd.f32 %v1134, %v1254
        %v1277 = vadd.f32 %v1135, %v1259
        %v1278 = vadd.f32 %v1136, %v1264
        %v1279 = vadd.f32 %v1137, %v1269
        %1280 = vst.msk [vmem:[#allocation4] sm:$0xff] %vm947, %v1272
        %1281 = vst.msk [vmem:[#allocation4 + $0x8] sm:$0xff] %vm947, %v1273
        %1282 = vst.msk [vmem:[#allocation4 + $0x10] sm:$0xff] %vm947, %v1274
        %1283 = vst.msk [vmem:[#allocation4 + $0x18] sm:$0xff] %vm947, %v1275
        %1284 = vst.msk [vmem:[#allocation4 + $0x20] sm:$0xff] %vm947, %v1276
        %1285 = vst.msk [vmem:[#allocation4 + $0x28] sm:$0xff] %vm947, %v1277
        %1286 = vst.msk [vmem:[#allocation4 + $0x30] sm:$0xff] %vm947, %v1278
        %1287 = vst.msk [vmem:[#allocation4 + $0x38] sm:$0xff] %vm947, %v1279
        %v1288 = vld [vmem:[#allocation2 + $0x2] sm:$0xff]
        %v1289 = vld [vmem:[#allocation2 + $0x12] sm:$0xff]
        %v1290 = vld [vmem:[#allocation2 + $0x22] sm:$0xff]
        %v1291 = vld [vmem:[#allocation2 + $0x32] sm:$0xff]
        %v1292 = vld [vmem:[#allocation2 + $0x42] sm:$0xff]
        %v1293 = vld [vmem:[#allocation2 + $0x52] sm:$0xff]
        %v1294 = vld [vmem:[#allocation2 + $0x62] sm:$0xff]
        %v1295 = vld [vmem:[#allocation2 + $0x72] sm:$0xff]
        %v1296 = vld [vmem:[#allocation4] sm:$0xff]
        %v1297 = vld [vmem:[#allocation4 + $0x8] sm:$0xff]
        %v1298 = vld [vmem:[#allocation4 + $0x10] sm:$0xff]
        %v1299 = vld [vmem:[#allocation4 + $0x18] sm:$0xff]
        %v1300 = vld [vmem:[#allocation4 + $0x20] sm:$0xff]
        %v1301 = vld [vmem:[#allocation4 + $0x28] sm:$0xff]
        %v1302 = vld [vmem:[#allocation4 + $0x30] sm:$0xff]
        %v1303 = vld [vmem:[#allocation4 + $0x38] sm:$0xff]
        %s1304 = scalar_lea.vmem %s1, 8
        %v1305 = vld [vmem:[%s1304] sm:$0xf]
        %v1307 = vsel %vm725, %v1288, 0
        %v1310 = vsel %vm725, %v1289, 0
        %v1313 = vsel %vm725, %v1290, 0
        %v1316 = vsel %vm725, %v1291, 0
        %v1319 = vsel %vm725, %v1292, 0
        %v1322 = vsel %vm725, %v1293, 0
        %v1325 = vsel %vm725, %v1294, 0
        %v1328 = vsel %vm725, %v1295, 0
        %v1331 = vsel %vm997, %v1305, 0
        %1333 = vmatprep.subr.mxu0 0.0
        %1334 = vmatpush1.msra.mxu0 0.0
        %1335 = vmatprep.subr.mxu0 0.0
        %1336 = vmatpush1.msra.mxu0 0.0
        %1337 = vmatprep.subr.mxu0 0.0
        %1338 = vmatpush1.msra.mxu0 0.0
        %1339 = vmatprep.subr.mxu0 0.0
        %1340 = vmatpush1.msra.mxu0 0.0
        %1341 = vmatprep.subr.mxu0 0.0
        %1342 = vmatpush1.msra.mxu0 0.0
        %1343 = vmatprep.subr.mxu0 0.0
        %1344 = vmatpush1.msra.mxu0 0.0
        %1345 = vmatprep.subr.mxu0 0.0
        %1346 = vmatpush1.msra.mxu0 0.0
        %1347 = vmatprep.subr.mxu0 0.0
        %1348 = vmatpush1.msra.mxu0 0.0
        %1349 = vmatprep.subr.mxu0 0.0
        %1350 = vmatpush1.msra.mxu0 0.0
        %1351 = vmatprep.subr.mxu0 0.0
        %1352 = vmatpush1.msra.mxu0 0.0
        %1353 = vmatprep.subr.mxu0 0.0
        %1354 = vmatpush1.msra.mxu0 0.0
        %1355 = vmatprep.subr.mxu0 0.0
        %1356 = vmatpush1.msra.mxu0 0.0
        %1357 = vmatprep.subr.mxu0 0.0
        %1358 = vmatpush1.msra.mxu0 0.0
        %1359 = vmatprep.subr.mxu0 0.0
        %1360 = vmatpush1.msra.mxu0 0.0
        %1361 = vmatprep.subr.mxu0 0.0
        %1362 = vmatpush1.msra.mxu0 0.0
        %1363 = vmatprep.subr.mxu0 0.0
        %1364 = vmatpush1.msra.mxu0 %v1331
        %1365 = vmatprep.subr.mxu0 0.0
        %1366 = vmatpush2.msra.mxu0 0.0
        %1367 = vmatprep.subr.mxu0 0.0
        %1368 = vmatpush2.msra.mxu0 0.0
        %1369 = vmatprep.subr.mxu0 0.0
        %1370 = vmatpush2.msra.mxu0 0.0
        %1371 = vmatprep.subr.mxu0 0.0
        %1372 = vmatpush2.msra.mxu0 0.0
        %1373 = vmatprep.subr.mxu0 0.0
        %1374 = vmatpush2.msra.mxu0 0.0
        %1375 = vmatprep.subr.mxu0 0.0
        %1376 = vmatpush2.msra.mxu0 0.0
        %1377 = vmatprep.subr.mxu0 0.0
        %1378 = vmatpush2.msra.mxu0 0.0
        %1379 = vmatprep.subr.mxu0 0.0
        %1380 = vmatpush2.msra.mxu0 0.0
        %1381 = vmatprep.subr.mxu0 0.0
        %1382 = vmatpush2.msra.mxu0 0.0
        %1383 = vmatprep.subr.mxu0 0.0
        %1384 = vmatpush2.msra.mxu0 0.0
        %1385 = vmatprep.subr.mxu0 0.0
        %1386 = vmatpush2.msra.mxu0 0.0
        %1387 = vmatprep.subr.mxu0 0.0
        %1388 = vmatpush2.msra.mxu0 0.0
        %1389 = vmatprep.subr.mxu0 0.0
        %1390 = vmatpush2.msra.mxu0 0.0
        %1391 = vmatprep.subr.mxu0 0.0
        %1392 = vmatpush2.msra.mxu0 0.0
        %1393 = vmatprep.subr.mxu0 0.0
        %1394 = vmatpush2.msra.mxu0 0.0
        %1395 = vmatprep.subr.mxu0 0.0
        %1396 = vmatpush2.msra.mxu0 0.0
        %1397 = vmatprep.mubr.f32.mxu0 0.0
        %1398 = vmatmul.mubr.f32.gmra.mxu0 %v1307
        %v1399 = vpop.f32.mrf.mxu0
        %v1400 = vadd.f32 0.0, %v1399
        %v1401 = vpop.f32.mrf.mxu0
        %1402 = vmatprep.mubr.f32.mxu0 0.0
        %1403 = vmatmul.mubr.f32.gmra.mxu0 %v1310
        %v1404 = vpop.f32.mrf.mxu0
        %v1405 = vadd.f32 0.0, %v1404
        %v1406 = vpop.f32.mrf.mxu0
        %1407 = vmatprep.mubr.f32.mxu0 0.0
        %1408 = vmatmul.mubr.f32.gmra.mxu0 %v1313
        %v1409 = vpop.f32.mrf.mxu0
        %v1410 = vadd.f32 0.0, %v1409
        %v1411 = vpop.f32.mrf.mxu0
        %1412 = vmatprep.mubr.f32.mxu0 0.0
        %1413 = vmatmul.mubr.f32.gmra.mxu0 %v1316
        %v1414 = vpop.f32.mrf.mxu0
        %v1415 = vadd.f32 0.0, %v1414
        %v1416 = vpop.f32.mrf.mxu0
        %1417 = vmatprep.mubr.f32.mxu0 0.0
        %1418 = vmatmul.mubr.f32.gmra.mxu0 %v1319
        %v1419 = vpop.f32.mrf.mxu0
        %v1420 = vadd.f32 0.0, %v1419
        %v1421 = vpop.f32.mrf.mxu0
        %1422 = vmatprep.mubr.f32.mxu0 0.0
        %1423 = vmatmul.mubr.f32.gmra.mxu0 %v1322
        %v1424 = vpop.f32.mrf.mxu0
        %v1425 = vadd.f32 0.0, %v1424
        %v1426 = vpop.f32.mrf.mxu0
        %1427 = vmatprep.mubr.f32.mxu0 0.0
        %1428 = vmatmul.mubr.f32.gmra.mxu0 %v1325
        %v1429 = vpop.f32.mrf.mxu0
        %v1430 = vadd.f32 0.0, %v1429
        %v1431 = vpop.f32.mrf.mxu0
        %1432 = vmatprep.mubr.f32.mxu0 0.0
        %1433 = vmatmul.mubr.f32.gmra.mxu0 %v1328
        %v1434 = vpop.f32.mrf.mxu0
        %v1435 = vadd.f32 0.0, %v1434
        %v1436 = vpop.f32.mrf.mxu0
        %1437 = vdwg.mxu0
        %v1438 = vadd.f32 %v1296, %v1400
        %v1439 = vadd.f32 %v1297, %v1405
        %v1440 = vadd.f32 %v1298, %v1410
        %v1441 = vadd.f32 %v1299, %v1415
        %v1442 = vadd.f32 %v1300, %v1420
        %v1443 = vadd.f32 %v1301, %v1425
        %v1444 = vadd.f32 %v1302, %v1430
        %v1445 = vadd.f32 %v1303, %v1435
        %1446 = vst.msk [vmem:[#allocation4] sm:$0xff] %vm947, %v1438
        %1447 = vst.msk [vmem:[#allocation4 + $0x8] sm:$0xff] %vm947, %v1439
        %1448 = vst.msk [vmem:[#allocation4 + $0x10] sm:$0xff] %vm947, %v1440
        %1449 = vst.msk [vmem:[#allocation4 + $0x18] sm:$0xff] %vm947, %v1441
        %1450 = vst.msk [vmem:[#allocation4 + $0x20] sm:$0xff] %vm947, %v1442
        %1451 = vst.msk [vmem:[#allocation4 + $0x28] sm:$0xff] %vm947, %v1443
        %1452 = vst.msk [vmem:[#allocation4 + $0x30] sm:$0xff] %vm947, %v1444
        %1453 = vst.msk [vmem:[#allocation4 + $0x38] sm:$0xff] %vm947, %v1445
        %v1454 = vld [vmem:[%s938] sm:$0xff]
        %v1455 = vld [vmem:[%s938 + $0x10] sm:$0xff]
        %v1456 = vld [vmem:[%s938 + $0x20] sm:$0xff]
        %v1457 = vld [vmem:[%s938 + $0x30] sm:$0xff]
        %v1458 = vld [vmem:[%s938 + $0x40] sm:$0xff]
        %v1459 = vld [vmem:[%s938 + $0x50] sm:$0xff]
        %v1460 = vld [vmem:[%s938 + $0x60] sm:$0xff]
        %v1461 = vld [vmem:[%s938 + $0x70] sm:$0xff]
        %v1462 = vld [vmem:[#allocation4] sm:$0xff]
        %v1463 = vld [vmem:[#allocation4 + $0x8] sm:$0xff]
        %v1464 = vld [vmem:[#allocation4 + $0x10] sm:$0xff]
        %v1465 = vld [vmem:[#allocation4 + $0x18] sm:$0xff]
        %v1466 = vld [vmem:[#allocation4 + $0x20] sm:$0xff]
        %v1467 = vld [vmem:[#allocation4 + $0x28] sm:$0xff]
        %v1468 = vld [vmem:[#allocation4 + $0x30] sm:$0xff]
        %v1469 = vld [vmem:[#allocation4 + $0x38] sm:$0xff]
        %s1470 = scalar_lea.vmem %s1, 12
        %v1471 = vld [vmem:[%s1470] sm:$0xf]
        %v1473 = vsel %vm725, %v1454, 0
        %v1476 = vsel %vm725, %v1455, 0
        %v1479 = vsel %vm725, %v1456, 0
        %v1482 = vsel %vm725, %v1457, 0
        %v1485 = vsel %vm725, %v1458, 0
        %v1488 = vsel %vm725, %v1459, 0
        %v1491 = vsel %vm725, %v1460, 0
        %v1494 = vsel %vm725, %v1461, 0
        %v1497 = vsel %vm997, %v1471, 0
        %1499 = vmatprep.subr.mxu0 0.0
        %1500 = vmatpush1.msra.mxu0 0.0
        %1501 = vmatprep.subr.mxu0 0.0
        %1502 = vmatpush1.msra.mxu0 0.0
        %1503 = vmatprep.subr.mxu0 0.0
        %1504 = vmatpush1.msra.mxu0 0.0
        %1505 = vmatprep.subr.mxu0 0.0
        %1506 = vmatpush1.msra.mxu0 0.0
        %1507 = vmatprep.subr.mxu0 0.0
        %1508 = vmatpush1.msra.mxu0 0.0
        %1509 = vmatprep.subr.mxu0 0.0
        %1510 = vmatpush1.msra.mxu0 0.0
        %1511 = vmatprep.subr.mxu0 0.0
        %1512 = vmatpush1.msra.mxu0 0.0
        %1513 = vmatprep.subr.mxu0 0.0
        %1514 = vmatpush1.msra.mxu0 0.0
        %1515 = vmatprep.subr.mxu0 0.0
        %1516 = vmatpush1.msra.mxu0 0.0
        %1517 = vmatprep.subr.mxu0 0.0
        %1518 = vmatpush1.msra.mxu0 0.0
        %1519 = vmatprep.subr.mxu0 0.0
        %1520 = vmatpush1.msra.mxu0 0.0
        %1521 = vmatprep.subr.mxu0 0.0
        %1522 = vmatpush1.msra.mxu0 0.0
        %1523 = vmatprep.subr.mxu0 0.0
        %1524 = vmatpush1.msra.mxu0 0.0
        %1525 = vmatprep.subr.mxu0 0.0
        %1526 = vmatpush1.msra.mxu0 0.0
        %1527 = vmatprep.subr.mxu0 0.0
        %1528 = vmatpush1.msra.mxu0 0.0
        %1529 = vmatprep.subr.mxu0 0.0
        %1530 = vmatpush1.msra.mxu0 %v1497
        %1531 = vmatprep.subr.mxu0 0.0
        %1532 = vmatpush2.msra.mxu0 0.0
        %1533 = vmatprep.subr.mxu0 0.0
        %1534 = vmatpush2.msra.mxu0 0.0
        %1535 = vmatprep.subr.mxu0 0.0
        %1536 = vmatpush2.msra.mxu0 0.0
        %1537 = vmatprep.subr.mxu0 0.0
        %1538 = vmatpush2.msra.mxu0 0.0
        %1539 = vmatprep.subr.mxu0 0.0
        %1540 = vmatpush2.msra.mxu0 0.0
        %1541 = vmatprep.subr.mxu0 0.0
        %1542 = vmatpush2.msra.mxu0 0.0
        %1543 = vmatprep.subr.mxu0 0.0
        %1544 = vmatpush2.msra.mxu0 0.0
        %1545 = vmatprep.subr.mxu0 0.0
        %1546 = vmatpush2.msra.mxu0 0.0
        %1547 = vmatprep.subr.mxu0 0.0
        %1548 = vmatpush2.msra.mxu0 0.0
        %1549 = vmatprep.subr.mxu0 0.0
        %1550 = vmatpush2.msra.mxu0 0.0
        %1551 = vmatprep.subr.mxu0 0.0
        %1552 = vmatpush2.msra.mxu0 0.0
        %1553 = vmatprep.subr.mxu0 0.0
        %1554 = vmatpush2.msra.mxu0 0.0
        %1555 = vmatprep.subr.mxu0 0.0
        %1556 = vmatpush2.msra.mxu0 0.0
        %1557 = vmatprep.subr.mxu0 0.0
        %1558 = vmatpush2.msra.mxu0 0.0
        %1559 = vmatprep.subr.mxu0 0.0
        %1560 = vmatpush2.msra.mxu0 0.0
        %1561 = vmatprep.subr.mxu0 0.0
        %1562 = vmatpush2.msra.mxu0 0.0
        %1563 = vmatprep.mubr.f32.mxu0 0.0
        %1564 = vmatmul.mubr.f32.gmra.mxu0 %v1473
        %v1565 = vpop.f32.mrf.mxu0
        %v1566 = vadd.f32 0.0, %v1565
        %v1567 = vpop.f32.mrf.mxu0
        %1568 = vmatprep.mubr.f32.mxu0 0.0
        %1569 = vmatmul.mubr.f32.gmra.mxu0 %v1476
        %v1570 = vpop.f32.mrf.mxu0
        %v1571 = vadd.f32 0.0, %v1570
        %v1572 = vpop.f32.mrf.mxu0
        %1573 = vmatprep.mubr.f32.mxu0 0.0
        %1574 = vmatmul.mubr.f32.gmra.mxu0 %v1479
        %v1575 = vpop.f32.mrf.mxu0
        %v1576 = vadd.f32 0.0, %v1575
        %v1577 = vpop.f32.mrf.mxu0
        %1578 = vmatprep.mubr.f32.mxu0 0.0
        %1579 = vmatmul.mubr.f32.gmra.mxu0 %v1482
        %v1580 = vpop.f32.mrf.mxu0
        %v1581 = vadd.f32 0.0, %v1580
        %v1582 = vpop.f32.mrf.mxu0
        %1583 = vmatprep.mubr.f32.mxu0 0.0
        %1584 = vmatmul.mubr.f32.gmra.mxu0 %v1485
        %v1585 = vpop.f32.mrf.mxu0
        %v1586 = vadd.f32 0.0, %v1585
        %v1587 = vpop.f32.mrf.mxu0
        %1588 = vmatprep.mubr.f32.mxu0 0.0
        %1589 = vmatmul.mubr.f32.gmra.mxu0 %v1488
        %v1590 = vpop.f32.mrf.mxu0
        %v1591 = vadd.f32 0.0, %v1590
        %v1592 = vpop.f32.mrf.mxu0
        %1593 = vmatprep.mubr.f32.mxu0 0.0
        %1594 = vmatmul.mubr.f32.gmra.mxu0 %v1491
        %v1595 = vpop.f32.mrf.mxu0
        %v1596 = vadd.f32 0.0, %v1595
        %v1597 = vpop.f32.mrf.mxu0
        %1598 = vmatprep.mubr.f32.mxu0 0.0
        %1599 = vmatmul.mubr.f32.gmra.mxu0 %v1494
        %v1600 = vpop.f32.mrf.mxu0
        %v1601 = vadd.f32 0.0, %v1600
        %v1602 = vpop.f32.mrf.mxu0
        %1603 = vdwg.mxu0
        %v1604 = vadd.f32 %v1462, %v1566
        %v1605 = vadd.f32 %v1463, %v1571
        %v1606 = vadd.f32 %v1464, %v1576
        %v1607 = vadd.f32 %v1465, %v1581
        %v1608 = vadd.f32 %v1466, %v1586
        %v1609 = vadd.f32 %v1467, %v1591
        %v1610 = vadd.f32 %v1468, %v1596
        %v1611 = vadd.f32 %v1469, %v1601
        %1612 = vst.msk [vmem:[#allocation4] sm:$0xff] %vm947, %v1604
        %1613 = vst.msk [vmem:[#allocation4 + $0x8] sm:$0xff] %vm947, %v1605
        %1614 = vst.msk [vmem:[#allocation4 + $0x10] sm:$0xff] %vm947, %v1606
        %1615 = vst.msk [vmem:[#allocation4 + $0x18] sm:$0xff] %vm947, %v1607
        %1616 = vst.msk [vmem:[#allocation4 + $0x20] sm:$0xff] %vm947, %v1608
        %1617 = vst.msk [vmem:[#allocation4 + $0x28] sm:$0xff] %vm947, %v1609
        %1618 = vst.msk [vmem:[#allocation4 + $0x30] sm:$0xff] %vm947, %v1610
        %1619 = vst.msk [vmem:[#allocation4 + $0x38] sm:$0xff] %vm947, %v1611
        %v1620 = vld [vmem:[%s938 + $0x1] sm:$0xff]
        %v1621 = vld [vmem:[%s938 + $0x11] sm:$0xff]
        %v1622 = vld [vmem:[%s938 + $0x21] sm:$0xff]
        %v1623 = vld [vmem:[%s938 + $0x31] sm:$0xff]
        %v1624 = vld [vmem:[%s938 + $0x41] sm:$0xff]
        %v1625 = vld [vmem:[%s938 + $0x51] sm:$0xff]
        %v1626 = vld [vmem:[%s938 + $0x61] sm:$0xff]
        %v1627 = vld [vmem:[%s938 + $0x71] sm:$0xff]
        %v1628 = vld [vmem:[#allocation4] sm:$0xff]
        %v1629 = vld [vmem:[#allocation4 + $0x8] sm:$0xff]
        %v1630 = vld [vmem:[#allocation4 + $0x10] sm:$0xff]
        %v1631 = vld [vmem:[#allocation4 + $0x18] sm:$0xff]
        %v1632 = vld [vmem:[#allocation4 + $0x20] sm:$0xff]
        %v1633 = vld [vmem:[#allocation4 + $0x28] sm:$0xff]
        %v1634 = vld [vmem:[#allocation4 + $0x30] sm:$0xff]
        %v1635 = vld [vmem:[#allocation4 + $0x38] sm:$0xff]
        %s1636 = scalar_lea.vmem %s1, 16
        %v1637 = vld [vmem:[%s1636] sm:$0xf]
        %v1639 = vsel %vm725, %v1620, 0
        %v1642 = vsel %vm725, %v1621, 0
        %v1645 = vsel %vm725, %v1622, 0
        %v1648 = vsel %vm725, %v1623, 0
        %v1651 = vsel %vm725, %v1624, 0
        %v1654 = vsel %vm725, %v1625, 0
        %v1657 = vsel %vm725, %v1626, 0
        %v1660 = vsel %vm725, %v1627, 0
        %v1663 = vsel %vm997, %v1637, 0
        %1665 = vmatprep.subr.mxu0 0.0
        %1666 = vmatpush1.msra.mxu0 0.0
        %1667 = vmatprep.subr.mxu0 0.0
        %1668 = vmatpush1.msra.mxu0 0.0
        %1669 = vmatprep.subr.mxu0 0.0
        %1670 = vmatpush1.msra.mxu0 0.0
        %1671 = vmatprep.subr.mxu0 0.0
        %1672 = vmatpush1.msra.mxu0 0.0
        %1673 = vmatprep.subr.mxu0 0.0
        %1674 = vmatpush1.msra.mxu0 0.0
        %1675 = vmatprep.subr.mxu0 0.0
        %1676 = vmatpush1.msra.mxu0 0.0
        %1677 = vmatprep.subr.mxu0 0.0
        %1678 = vmatpush1.msra.mxu0 0.0
        %1679 = vmatprep.subr.mxu0 0.0
        %1680 = vmatpush1.msra.mxu0 0.0
        %1681 = vmatprep.subr.mxu0 0.0
        %1682 = vmatpush1.msra.mxu0 0.0
        %1683 = vmatprep.subr.mxu0 0.0
        %1684 = vmatpush1.msra.mxu0 0.0
        %1685 = vmatprep.subr.mxu0 0.0
        %1686 = vmatpush1.msra.mxu0 0.0
        %1687 = vmatprep.subr.mxu0 0.0
        %1688 = vmatpush1.msra.mxu0 0.0
        %1689 = vmatprep.subr.mxu0 0.0
        %1690 = vmatpush1.msra.mxu0 0.0
        %1691 = vmatprep.subr.mxu0 0.0
        %1692 = vmatpush1.msra.mxu0 0.0
        %1693 = vmatprep.subr.mxu0 0.0
        %1694 = vmatpush1.msra.mxu0 0.0
        %1695 = vmatprep.subr.mxu0 0.0
        %1696 = vmatpush1.msra.mxu0 %v1663
        %1697 = vmatprep.subr.mxu0 0.0
        %1698 = vmatpush2.msra.mxu0 0.0
        %1699 = vmatprep.subr.mxu0 0.0
        %1700 = vmatpush2.msra.mxu0 0.0
        %1701 = vmatprep.subr.mxu0 0.0
        %1702 = vmatpush2.msra.mxu0 0.0
        %1703 = vmatprep.subr.mxu0 0.0
        %1704 = vmatpush2.msra.mxu0 0.0
        %1705 = vmatprep.subr.mxu0 0.0
        %1706 = vmatpush2.msra.mxu0 0.0
        %1707 = vmatprep.subr.mxu0 0.0
        %1708 = vmatpush2.msra.mxu0 0.0
        %1709 = vmatprep.subr.mxu0 0.0
        %1710 = vmatpush2.msra.mxu0 0.0
        %1711 = vmatprep.subr.mxu0 0.0
        %1712 = vmatpush2.msra.mxu0 0.0
        %1713 = vmatprep.subr.mxu0 0.0
        %1714 = vmatpush2.msra.mxu0 0.0
        %1715 = vmatprep.subr.mxu0 0.0
        %1716 = vmatpush2.msra.mxu0 0.0
        %1717 = vmatprep.subr.mxu0 0.0
        %1718 = vmatpush2.msra.mxu0 0.0
        %1719 = vmatprep.subr.mxu0 0.0
        %1720 = vmatpush2.msra.mxu0 0.0
        %1721 = vmatprep.subr.mxu0 0.0
        %1722 = vmatpush2.msra.mxu0 0.0
        %1723 = vmatprep.subr.mxu0 0.0
        %1724 = vmatpush2.msra.mxu0 0.0
        %1725 = vmatprep.subr.mxu0 0.0
        %1726 = vmatpush2.msra.mxu0 0.0
        %1727 = vmatprep.subr.mxu0 0.0
        %1728 = vmatpush2.msra.mxu0 0.0
        %1729 = vmatprep.mubr.f32.mxu0 0.0
        %1730 = vmatmul.mubr.f32.gmra.mxu0 %v1639
        %v1731 = vpop.f32.mrf.mxu0
        %v1732 = vadd.f32 0.0, %v1731
        %v1733 = vpop.f32.mrf.mxu0
        %1734 = vmatprep.mubr.f32.mxu0 0.0
        %1735 = vmatmul.mubr.f32.gmra.mxu0 %v1642
        %v1736 = vpop.f32.mrf.mxu0
        %v1737 = vadd.f32 0.0, %v1736
        %v1738 = vpop.f32.mrf.mxu0
        %1739 = vmatprep.mubr.f32.mxu0 0.0
        %1740 = vmatmul.mubr.f32.gmra.mxu0 %v1645
        %v1741 = vpop.f32.mrf.mxu0
        %v1742 = vadd.f32 0.0, %v1741
        %v1743 = vpop.f32.mrf.mxu0
        %1744 = vmatprep.mubr.f32.mxu0 0.0
        %1745 = vmatmul.mubr.f32.gmra.mxu0 %v1648
        %v1746 = vpop.f32.mrf.mxu0
        %v1747 = vadd.f32 0.0, %v1746
        %v1748 = vpop.f32.mrf.mxu0
        %1749 = vmatprep.mubr.f32.mxu0 0.0
        %1750 = vmatmul.mubr.f32.gmra.mxu0 %v1651
        %v1751 = vpop.f32.mrf.mxu0
        %v1752 = vadd.f32 0.0, %v1751
        %v1753 = vpop.f32.mrf.mxu0
        %1754 = vmatprep.mubr.f32.mxu0 0.0
        %1755 = vmatmul.mubr.f32.gmra.mxu0 %v1654
        %v1756 = vpop.f32.mrf.mxu0
        %v1757 = vadd.f32 0.0, %v1756
        %v1758 = vpop.f32.mrf.mxu0
        %1759 = vmatprep.mubr.f32.mxu0 0.0
        %1760 = vmatmul.mubr.f32.gmra.mxu0 %v1657
        %v1761 = vpop.f32.mrf.mxu0
        %v1762 = vadd.f32 0.0, %v1761
        %v1763 = vpop.f32.mrf.mxu0
        %1764 = vmatprep.mubr.f32.mxu0 0.0
        %1765 = vmatmul.mubr.f32.gmra.mxu0 %v1660
        %v1766 = vpop.f32.mrf.mxu0
        %v1767 = vadd.f32 0.0, %v1766
        %v1768 = vpop.f32.mrf.mxu0
        %1769 = vdwg.mxu0
        %v1770 = vadd.f32 %v1628, %v1732
        %v1771 = vadd.f32 %v1629, %v1737
        %v1772 = vadd.f32 %v1630, %v1742
        %v1773 = vadd.f32 %v1631, %v1747
        %v1774 = vadd.f32 %v1632, %v1752
        %v1775 = vadd.f32 %v1633, %v1757
        %v1776 = vadd.f32 %v1634, %v1762
        %v1777 = vadd.f32 %v1635, %v1767
        %1778 = vst.msk [vmem:[#allocation4] sm:$0xff] %vm947, %v1770
        %1779 = vst.msk [vmem:[#allocation4 + $0x8] sm:$0xff] %vm947, %v1771
        %1780 = vst.msk [vmem:[#allocation4 + $0x10] sm:$0xff] %vm947, %v1772
        %1781 = vst.msk [vmem:[#allocation4 + $0x18] sm:$0xff] %vm947, %v1773
        %1782 = vst.msk [vmem:[#allocation4 + $0x20] sm:$0xff] %vm947, %v1774
        %1783 = vst.msk [vmem:[#allocation4 + $0x28] sm:$0xff] %vm947, %v1775
        %1784 = vst.msk [vmem:[#allocation4 + $0x30] sm:$0xff] %vm947, %v1776
        %1785 = vst.msk [vmem:[#allocation4 + $0x38] sm:$0xff] %vm947, %v1777
        %v1786 = vld [vmem:[%s938 + $0x2] sm:$0xff]
        %v1787 = vld [vmem:[%s938 + $0x12] sm:$0xff]
        %v1788 = vld [vmem:[%s938 + $0x22] sm:$0xff]
        %v1789 = vld [vmem:[%s938 + $0x32] sm:$0xff]
        %v1790 = vld [vmem:[%s938 + $0x42] sm:$0xff]
        %v1791 = vld [vmem:[%s938 + $0x52] sm:$0xff]
        %v1792 = vld [vmem:[%s938 + $0x62] sm:$0xff]
        %v1793 = vld [vmem:[%s938 + $0x72] sm:$0xff]
        %v1794 = vld [vmem:[#allocation4] sm:$0xff]
        %v1795 = vld [vmem:[#allocation4 + $0x8] sm:$0xff]
        %v1796 = vld [vmem:[#allocation4 + $0x10] sm:$0xff]
        %v1797 = vld [vmem:[#allocation4 + $0x18] sm:$0xff]
        %v1798 = vld [vmem:[#allocation4 + $0x20] sm:$0xff]
        %v1799 = vld [vmem:[#allocation4 + $0x28] sm:$0xff]
        %v1800 = vld [vmem:[#allocation4 + $0x30] sm:$0xff]
        %v1801 = vld [vmem:[#allocation4 + $0x38] sm:$0xff]
        %s1802 = scalar_lea.vmem %s1, 20
        %v1803 = vld [vmem:[%s1802] sm:$0xf]
        %v1805 = vsel %vm725, %v1786, 0
        %v1808 = vsel %vm725, %v1787, 0
        %v1811 = vsel %vm725, %v1788, 0
        %v1814 = vsel %vm725, %v1789, 0
        %v1817 = vsel %vm725, %v1790, 0
        %v1820 = vsel %vm725, %v1791, 0
        %v1823 = vsel %vm725, %v1792, 0
        %v1826 = vsel %vm725, %v1793, 0
        %v1829 = vsel %vm997, %v1803, 0
        %1831 = vmatprep.subr.mxu0 0.0
        %1832 = vmatpush1.msra.mxu0 0.0
        %1833 = vmatprep.subr.mxu0 0.0
        %1834 = vmatpush1.msra.mxu0 0.0
        %1835 = vmatprep.subr.mxu0 0.0
        %1836 = vmatpush1.msra.mxu0 0.0
        %1837 = vmatprep.subr.mxu0 0.0
        %1838 = vmatpush1.msra.mxu0 0.0
        %1839 = vmatprep.subr.mxu0 0.0
        %1840 = vmatpush1.msra.mxu0 0.0
        %1841 = vmatprep.subr.mxu0 0.0
        %1842 = vmatpush1.msra.mxu0 0.0
        %1843 = vmatprep.subr.mxu0 0.0
        %1844 = vmatpush1.msra.mxu0 0.0
        %1845 = vmatprep.subr.mxu0 0.0
        %1846 = vmatpush1.msra.mxu0 0.0
        %1847 = vmatprep.subr.mxu0 0.0
        %1848 = vmatpush1.msra.mxu0 0.0
        %1849 = vmatprep.subr.mxu0 0.0
        %1850 = vmatpush1.msra.mxu0 0.0
        %1851 = vmatprep.subr.mxu0 0.0
        %1852 = vmatpush1.msra.mxu0 0.0
        %1853 = vmatprep.subr.mxu0 0.0
        %1854 = vmatpush1.msra.mxu0 0.0
        %1855 = vmatprep.subr.mxu0 0.0
        %1856 = vmatpush1.msra.mxu0 0.0
        %1857 = vmatprep.subr.mxu0 0.0
        %1858 = vmatpush1.msra.mxu0 0.0
        %1859 = vmatprep.subr.mxu0 0.0
        %1860 = vmatpush1.msra.mxu0 0.0
        %1861 = vmatprep.subr.mxu0 0.0
        %1862 = vmatpush1.msra.mxu0 %v1829
        %1863 = vmatprep.subr.mxu0 0.0
        %1864 = vmatpush2.msra.mxu0 0.0
        %1865 = vmatprep.subr.mxu0 0.0
        %1866 = vmatpush2.msra.mxu0 0.0
        %1867 = vmatprep.subr.mxu0 0.0
        %1868 = vmatpush2.msra.mxu0 0.0
        %1869 = vmatprep.subr.mxu0 0.0
        %1870 = vmatpush2.msra.mxu0 0.0
        %1871 = vmatprep.subr.mxu0 0.0
        %1872 = vmatpush2.msra.mxu0 0.0
        %1873 = vmatprep.subr.mxu0 0.0
        %1874 = vmatpush2.msra.mxu0 0.0
        %1875 = vmatprep.subr.mxu0 0.0
        %1876 = vmatpush2.msra.mxu0 0.0
        %1877 = vmatprep.subr.mxu0 0.0
        %1878 = vmatpush2.msra.mxu0 0.0
        %1879 = vmatprep.subr.mxu0 0.0
        %1880 = vmatpush2.msra.mxu0 0.0
        %1881 = vmatprep.subr.mxu0 0.0
        %1882 = vmatpush2.msra.mxu0 0.0
        %1883 = vmatprep.subr.mxu0 0.0
        %1884 = vmatpush2.msra.mxu0 0.0
        %1885 = vmatprep.subr.mxu0 0.0
        %1886 = vmatpush2.msra.mxu0 0.0
        %1887 = vmatprep.subr.mxu0 0.0
        %1888 = vmatpush2.msra.mxu0 0.0
        %1889 = vmatprep.subr.mxu0 0.0
        %1890 = vmatpush2.msra.mxu0 0.0
        %1891 = vmatprep.subr.mxu0 0.0
        %1892 = vmatpush2.msra.mxu0 0.0
        %1893 = vmatprep.subr.mxu0 0.0
        %1894 = vmatpush2.msra.mxu0 0.0
        %1895 = vmatprep.mubr.f32.mxu0 0.0
        %1896 = vmatmul.mubr.f32.gmra.mxu0 %v1805
        %v1897 = vpop.f32.mrf.mxu0
        %v1898 = vadd.f32 0.0, %v1897
        %v1899 = vpop.f32.mrf.mxu0
        %1900 = vmatprep.mubr.f32.mxu0 0.0
        %1901 = vmatmul.mubr.f32.gmra.mxu0 %v1808
        %v1902 = vpop.f32.mrf.mxu0
        %v1903 = vadd.f32 0.0, %v1902
        %v1904 = vpop.f32.mrf.mxu0
        %1905 = vmatprep.mubr.f32.mxu0 0.0
        %1906 = vmatmul.mubr.f32.gmra.mxu0 %v1811
        %v1907 = vpop.f32.mrf.mxu0
        %v1908 = vadd.f32 0.0, %v1907
        %v1909 = vpop.f32.mrf.mxu0
        %1910 = vmatprep.mubr.f32.mxu0 0.0
        %1911 = vmatmul.mubr.f32.gmra.mxu0 %v1814
        %v1912 = vpop.f32.mrf.mxu0
        %v1913 = vadd.f32 0.0, %v1912
        %v1914 = vpop.f32.mrf.mxu0
        %1915 = vmatprep.mubr.f32.mxu0 0.0
        %1916 = vmatmul.mubr.f32.gmra.mxu0 %v1817
        %v1917 = vpop.f32.mrf.mxu0
        %v1918 = vadd.f32 0.0, %v1917
        %v1919 = vpop.f32.mrf.mxu0
        %1920 = vmatprep.mubr.f32.mxu0 0.0
        %1921 = vmatmul.mubr.f32.gmra.mxu0 %v1820
        %v1922 = vpop.f32.mrf.mxu0
        %v1923 = vadd.f32 0.0, %v1922
        %v1924 = vpop.f32.mrf.mxu0
        %1925 = vmatprep.mubr.f32.mxu0 0.0
        %1926 = vmatmul.mubr.f32.gmra.mxu0 %v1823
        %v1927 = vpop.f32.mrf.mxu0
        %v1928 = vadd.f32 0.0, %v1927
        %v1929 = vpop.f32.mrf.mxu0
        %1930 = vmatprep.mubr.f32.mxu0 0.0
        %1931 = vmatmul.mubr.f32.gmra.mxu0 %v1826
        %v1932 = vpop.f32.mrf.mxu0
        %v1933 = vadd.f32 0.0, %v1932
        %v1934 = vpop.f32.mrf.mxu0
        %1935 = vdwg.mxu0
        %v1936 = vadd.f32 %v1794, %v1898
        %v1937 = vadd.f32 %v1795, %v1903
        %v1938 = vadd.f32 %v1796, %v1908
        %v1939 = vadd.f32 %v1797, %v1913
        %v1940 = vadd.f32 %v1798, %v1918
        %v1941 = vadd.f32 %v1799, %v1923
        %v1942 = vadd.f32 %v1800, %v1928
        %v1943 = vadd.f32 %v1801, %v1933
        %1944 = vst.msk [vmem:[#allocation4] sm:$0xff] %vm947, %v1936
        %1945 = vst.msk [vmem:[#allocation4 + $0x8] sm:$0xff] %vm947, %v1937
        %1946 = vst.msk [vmem:[#allocation4 + $0x10] sm:$0xff] %vm947, %v1938
        %1947 = vst.msk [vmem:[#allocation4 + $0x18] sm:$0xff] %vm947, %v1939
        %1948 = vst.msk [vmem:[#allocation4 + $0x20] sm:$0xff] %vm947, %v1940
        %1949 = vst.msk [vmem:[#allocation4 + $0x28] sm:$0xff] %vm947, %v1941
        %1950 = vst.msk [vmem:[#allocation4 + $0x30] sm:$0xff] %vm947, %v1942
        %1951 = vst.msk [vmem:[#allocation4 + $0x38] sm:$0xff] %vm947, %v1943
        %s1952 = scalar_lea.vmem [#allocation2], 32
        %v1953 = vld [vmem:[%s1952] sm:$0xff]
        %v1954 = vld [vmem:[%s1952 + $0x10] sm:$0xff]
        %v1955 = vld [vmem:[%s1952 + $0x20] sm:$0xff]
        %v1956 = vld [vmem:[%s1952 + $0x30] sm:$0xff]
        %v1957 = vld [vmem:[%s1952 + $0x40] sm:$0xff]
        %v1958 = vld [vmem:[%s1952 + $0x50] sm:$0xff]
        %v1959 = vld [vmem:[%s1952 + $0x60] sm:$0xff]
        %v1960 = vld [vmem:[%s1952 + $0x70] sm:$0xff]
        %v1961 = vld [vmem:[#allocation4] sm:$0xff]
        %v1962 = vld [vmem:[#allocation4 + $0x8] sm:$0xff]
        %v1963 = vld [vmem:[#allocation4 + $0x10] sm:$0xff]
        %v1964 = vld [vmem:[#allocation4 + $0x18] sm:$0xff]
        %v1965 = vld [vmem:[#allocation4 + $0x20] sm:$0xff]
        %v1966 = vld [vmem:[#allocation4 + $0x28] sm:$0xff]
        %v1967 = vld [vmem:[#allocation4 + $0x30] sm:$0xff]
        %v1968 = vld [vmem:[#allocation4 + $0x38] sm:$0xff]
        %s1969 = scalar_lea.vmem %s1, 24
        %v1970 = vld [vmem:[%s1969] sm:$0xf]
        %v1972 = vsel %vm725, %v1953, 0
        %v1975 = vsel %vm725, %v1954, 0
        %v1978 = vsel %vm725, %v1955, 0
        %v1981 = vsel %vm725, %v1956, 0
        %v1984 = vsel %vm725, %v1957, 0
        %v1987 = vsel %vm725, %v1958, 0
        %v1990 = vsel %vm725, %v1959, 0
        %v1993 = vsel %vm725, %v1960, 0
        %v1996 = vsel %vm997, %v1970, 0
        %1998 = vmatprep.subr.mxu0 0.0
        %1999 = vmatpush1.msra.mxu0 0.0
        %2000 = vmatprep.subr.mxu0 0.0
        %2001 = vmatpush1.msra.mxu0 0.0
        %2002 = vmatprep.subr.mxu0 0.0
        %2003 = vmatpush1.msra.mxu0 0.0
        %2004 = vmatprep.subr.mxu0 0.0
        %2005 = vmatpush1.msra.mxu0 0.0
        %2006 = vmatprep.subr.mxu0 0.0
        %2007 = vmatpush1.msra.mxu0 0.0
        %2008 = vmatprep.subr.mxu0 0.0
        %2009 = vmatpush1.msra.mxu0 0.0
        %2010 = vmatprep.subr.mxu0 0.0
        %2011 = vmatpush1.msra.mxu0 0.0
        %2012 = vmatprep.subr.mxu0 0.0
        %2013 = vmatpush1.msra.mxu0 0.0
        %2014 = vmatprep.subr.mxu0 0.0
        %2015 = vmatpush1.msra.mxu0 0.0
        %2016 = vmatprep.subr.mxu0 0.0
        %2017 = vmatpush1.msra.mxu0 0.0
        %2018 = vmatprep.subr.mxu0 0.0
        %2019 = vmatpush1.msra.mxu0 0.0
        %2020 = vmatprep.subr.mxu0 0.0
        %2021 = vmatpush1.msra.mxu0 0.0
        %2022 = vmatprep.subr.mxu0 0.0
        %2023 = vmatpush1.msra.mxu0 0.0
        %2024 = vmatprep.subr.mxu0 0.0
        %2025 = vmatpush1.msra.mxu0 0.0
        %2026 = vmatprep.subr.mxu0 0.0
        %2027 = vmatpush1.msra.mxu0 0.0
        %2028 = vmatprep.subr.mxu0 0.0
        %2029 = vmatpush1.msra.mxu0 %v1996
        %2030 = vmatprep.subr.mxu0 0.0
        %2031 = vmatpush2.msra.mxu0 0.0
        %2032 = vmatprep.subr.mxu0 0.0
        %2033 = vmatpush2.msra.mxu0 0.0
        %2034 = vmatprep.subr.mxu0 0.0
        %2035 = vmatpush2.msra.mxu0 0.0
        %2036 = vmatprep.subr.mxu0 0.0
        %2037 = vmatpush2.msra.mxu0 0.0
        %2038 = vmatprep.subr.mxu0 0.0
        %2039 = vmatpush2.msra.mxu0 0.0
        %2040 = vmatprep.subr.mxu0 0.0
        %2041 = vmatpush2.msra.mxu0 0.0
        %2042 = vmatprep.subr.mxu0 0.0
        %2043 = vmatpush2.msra.mxu0 0.0
        %2044 = vmatprep.subr.mxu0 0.0
        %2045 = vmatpush2.msra.mxu0 0.0
        %2046 = vmatprep.subr.mxu0 0.0
        %2047 = vmatpush2.msra.mxu0 0.0
        %2048 = vmatprep.subr.mxu0 0.0
        %2049 = vmatpush2.msra.mxu0 0.0
        %2050 = vmatprep.subr.mxu0 0.0
        %2051 = vmatpush2.msra.mxu0 0.0
        %2052 = vmatprep.subr.mxu0 0.0
        %2053 = vmatpush2.msra.mxu0 0.0
        %2054 = vmatprep.subr.mxu0 0.0
        %2055 = vmatpush2.msra.mxu0 0.0
        %2056 = vmatprep.subr.mxu0 0.0
        %2057 = vmatpush2.msra.mxu0 0.0
        %2058 = vmatprep.subr.mxu0 0.0
        %2059 = vmatpush2.msra.mxu0 0.0
        %2060 = vmatprep.subr.mxu0 0.0
        %2061 = vmatpush2.msra.mxu0 0.0
        %2062 = vmatprep.mubr.f32.mxu0 0.0
        %2063 = vmatmul.mubr.f32.gmra.mxu0 %v1972
        %v2064 = vpop.f32.mrf.mxu0
        %v2065 = vadd.f32 0.0, %v2064
        %v2066 = vpop.f32.mrf.mxu0
        %2067 = vmatprep.mubr.f32.mxu0 0.0
        %2068 = vmatmul.mubr.f32.gmra.mxu0 %v1975
        %v2069 = vpop.f32.mrf.mxu0
        %v2070 = vadd.f32 0.0, %v2069
        %v2071 = vpop.f32.mrf.mxu0
        %2072 = vmatprep.mubr.f32.mxu0 0.0
        %2073 = vmatmul.mubr.f32.gmra.mxu0 %v1978
        %v2074 = vpop.f32.mrf.mxu0
        %v2075 = vadd.f32 0.0, %v2074
        %v2076 = vpop.f32.mrf.mxu0
        %2077 = vmatprep.mubr.f32.mxu0 0.0
        %2078 = vmatmul.mubr.f32.gmra.mxu0 %v1981
        %v2079 = vpop.f32.mrf.mxu0
        %v2080 = vadd.f32 0.0, %v2079
        %v2081 = vpop.f32.mrf.mxu0
        %2082 = vmatprep.mubr.f32.mxu0 0.0
        %2083 = vmatmul.mubr.f32.gmra.mxu0 %v1984
        %v2084 = vpop.f32.mrf.mxu0
        %v2085 = vadd.f32 0.0, %v2084
        %v2086 = vpop.f32.mrf.mxu0
        %2087 = vmatprep.mubr.f32.mxu0 0.0
        %2088 = vmatmul.mubr.f32.gmra.mxu0 %v1987
        %v2089 = vpop.f32.mrf.mxu0
        %v2090 = vadd.f32 0.0, %v2089
        %v2091 = vpop.f32.mrf.mxu0
        %2092 = vmatprep.mubr.f32.mxu0 0.0
        %2093 = vmatmul.mubr.f32.gmra.mxu0 %v1990
        %v2094 = vpop.f32.mrf.mxu0
        %v2095 = vadd.f32 0.0, %v2094
        %v2096 = vpop.f32.mrf.mxu0
        %2097 = vmatprep.mubr.f32.mxu0 0.0
        %2098 = vmatmul.mubr.f32.gmra.mxu0 %v1993
        %v2099 = vpop.f32.mrf.mxu0
        %v2100 = vadd.f32 0.0, %v2099
        %v2101 = vpop.f32.mrf.mxu0
        %2102 = vdwg.mxu0
        %v2103 = vadd.f32 %v1961, %v2065
        %v2104 = vadd.f32 %v1962, %v2070
        %v2105 = vadd.f32 %v1963, %v2075
        %v2106 = vadd.f32 %v1964, %v2080
        %v2107 = vadd.f32 %v1965, %v2085
        %v2108 = vadd.f32 %v1966, %v2090
        %v2109 = vadd.f32 %v1967, %v2095
        %v2110 = vadd.f32 %v1968, %v2100
        %2111 = vst.msk [vmem:[#allocation4] sm:$0xff] %vm947, %v2103
        %2112 = vst.msk [vmem:[#allocation4 + $0x8] sm:$0xff] %vm947, %v2104
        %2113 = vst.msk [vmem:[#allocation4 + $0x10] sm:$0xff] %vm947, %v2105
        %2114 = vst.msk [vmem:[#allocation4 + $0x18] sm:$0xff] %vm947, %v2106
        %2115 = vst.msk [vmem:[#allocation4 + $0x20] sm:$0xff] %vm947, %v2107
        %2116 = vst.msk [vmem:[#allocation4 + $0x28] sm:$0xff] %vm947, %v2108
        %2117 = vst.msk [vmem:[#allocation4 + $0x30] sm:$0xff] %vm947, %v2109
        %2118 = vst.msk [vmem:[#allocation4 + $0x38] sm:$0xff] %vm947, %v2110
        %v2119 = vld [vmem:[%s1952 + $0x1] sm:$0xff]
        %v2120 = vld [vmem:[%s1952 + $0x11] sm:$0xff]
        %v2121 = vld [vmem:[%s1952 + $0x21] sm:$0xff]
        %v2122 = vld [vmem:[%s1952 + $0x31] sm:$0xff]
        %v2123 = vld [vmem:[%s1952 + $0x41] sm:$0xff]
        %v2124 = vld [vmem:[%s1952 + $0x51] sm:$0xff]
        %v2125 = vld [vmem:[%s1952 + $0x61] sm:$0xff]
        %v2126 = vld [vmem:[%s1952 + $0x71] sm:$0xff]
        %v2127 = vld [vmem:[#allocation4] sm:$0xff]
        %v2128 = vld [vmem:[#allocation4 + $0x8] sm:$0xff]
        %v2129 = vld [vmem:[#allocation4 + $0x10] sm:$0xff]
        %v2130 = vld [vmem:[#allocation4 + $0x18] sm:$0xff]
        %v2131 = vld [vmem:[#allocation4 + $0x20] sm:$0xff]
        %v2132 = vld [vmem:[#allocation4 + $0x28] sm:$0xff]
        %v2133 = vld [vmem:[#allocation4 + $0x30] sm:$0xff]
        %v2134 = vld [vmem:[#allocation4 + $0x38] sm:$0xff]
        %s2135 = scalar_lea.vmem %s1, 28
        %v2136 = vld [vmem:[%s2135] sm:$0xf]
        %v2138 = vsel %vm725, %v2119, 0
        %v2141 = vsel %vm725, %v2120, 0
        %v2144 = vsel %vm725, %v2121, 0
        %v2147 = vsel %vm725, %v2122, 0
        %v2150 = vsel %vm725, %v2123, 0
        %v2153 = vsel %vm725, %v2124, 0
        %v2156 = vsel %vm725, %v2125, 0
        %v2159 = vsel %vm725, %v2126, 0
        %v2162 = vsel %vm997, %v2136, 0
        %2164 = vmatprep.subr.mxu0 0.0
        %2165 = vmatpush1.msra.mxu0 0.0
        %2166 = vmatprep.subr.mxu0 0.0
        %2167 = vmatpush1.msra.mxu0 0.0
        %2168 = vmatprep.subr.mxu0 0.0
        %2169 = vmatpush1.msra.mxu0 0.0
        %2170 = vmatprep.subr.mxu0 0.0
        %2171 = vmatpush1.msra.mxu0 0.0
        %2172 = vmatprep.subr.mxu0 0.0
        %2173 = vmatpush1.msra.mxu0 0.0
        %2174 = vmatprep.subr.mxu0 0.0
        %2175 = vmatpush1.msra.mxu0 0.0
        %2176 = vmatprep.subr.mxu0 0.0
        %2177 = vmatpush1.msra.mxu0 0.0
        %2178 = vmatprep.subr.mxu0 0.0
        %2179 = vmatpush1.msra.mxu0 0.0
        %2180 = vmatprep.subr.mxu0 0.0
        %2181 = vmatpush1.msra.mxu0 0.0
        %2182 = vmatprep.subr.mxu0 0.0
        %2183 = vmatpush1.msra.mxu0 0.0
        %2184 = vmatprep.subr.mxu0 0.0
        %2185 = vmatpush1.msra.mxu0 0.0
        %2186 = vmatprep.subr.mxu0 0.0
        %2187 = vmatpush1.msra.mxu0 0.0
        %2188 = vmatprep.subr.mxu0 0.0
        %2189 = vmatpush1.msra.mxu0 0.0
        %2190 = vmatprep.subr.mxu0 0.0
        %2191 = vmatpush1.msra.mxu0 0.0
        %2192 = vmatprep.subr.mxu0 0.0
        %2193 = vmatpush1.msra.mxu0 0.0
        %2194 = vmatprep.subr.mxu0 0.0
        %2195 = vmatpush1.msra.mxu0 %v2162
        %2196 = vmatprep.subr.mxu0 0.0
        %2197 = vmatpush2.msra.mxu0 0.0
        %2198 = vmatprep.subr.mxu0 0.0
        %2199 = vmatpush2.msra.mxu0 0.0
        %2200 = vmatprep.subr.mxu0 0.0
        %2201 = vmatpush2.msra.mxu0 0.0
        %2202 = vmatprep.subr.mxu0 0.0
        %2203 = vmatpush2.msra.mxu0 0.0
        %2204 = vmatprep.subr.mxu0 0.0
        %2205 = vmatpush2.msra.mxu0 0.0
        %2206 = vmatprep.subr.mxu0 0.0
        %2207 = vmatpush2.msra.mxu0 0.0
        %2208 = vmatprep.subr.mxu0 0.0
        %2209 = vmatpush2.msra.mxu0 0.0
        %2210 = vmatprep.subr.mxu0 0.0
        %2211 = vmatpush2.msra.mxu0 0.0
        %2212 = vmatprep.subr.mxu0 0.0
        %2213 = vmatpush2.msra.mxu0 0.0
        %2214 = vmatprep.subr.mxu0 0.0
        %2215 = vmatpush2.msra.mxu0 0.0
        %2216 = vmatprep.subr.mxu0 0.0
        %2217 = vmatpush2.msra.mxu0 0.0
        %2218 = vmatprep.subr.mxu0 0.0
        %2219 = vmatpush2.msra.mxu0 0.0
        %2220 = vmatprep.subr.mxu0 0.0
        %2221 = vmatpush2.msra.mxu0 0.0
        %2222 = vmatprep.subr.mxu0 0.0
        %2223 = vmatpush2.msra.mxu0 0.0
        %2224 = vmatprep.subr.mxu0 0.0
        %2225 = vmatpush2.msra.mxu0 0.0
        %2226 = vmatprep.subr.mxu0 0.0
        %2227 = vmatpush2.msra.mxu0 0.0
        %2228 = vmatprep.mubr.f32.mxu0 0.0
        %2229 = vmatmul.mubr.f32.gmra.mxu0 %v2138
        %v2230 = vpop.f32.mrf.mxu0
        %v2231 = vadd.f32 0.0, %v2230
        %v2232 = vpop.f32.mrf.mxu0
        %2233 = vmatprep.mubr.f32.mxu0 0.0
        %2234 = vmatmul.mubr.f32.gmra.mxu0 %v2141
        %v2235 = vpop.f32.mrf.mxu0
        %v2236 = vadd.f32 0.0, %v2235
        %v2237 = vpop.f32.mrf.mxu0
        %2238 = vmatprep.mubr.f32.mxu0 0.0
        %2239 = vmatmul.mubr.f32.gmra.mxu0 %v2144
        %v2240 = vpop.f32.mrf.mxu0
        %v2241 = vadd.f32 0.0, %v2240
        %v2242 = vpop.f32.mrf.mxu0
        %2243 = vmatprep.mubr.f32.mxu0 0.0
        %2244 = vmatmul.mubr.f32.gmra.mxu0 %v2147
        %v2245 = vpop.f32.mrf.mxu0
        %v2246 = vadd.f32 0.0, %v2245
        %v2247 = vpop.f32.mrf.mxu0
        %2248 = vmatprep.mubr.f32.mxu0 0.0
        %2249 = vmatmul.mubr.f32.gmra.mxu0 %v2150
        %v2250 = vpop.f32.mrf.mxu0
        %v2251 = vadd.f32 0.0, %v2250
        %v2252 = vpop.f32.mrf.mxu0
        %2253 = vmatprep.mubr.f32.mxu0 0.0
        %2254 = vmatmul.mubr.f32.gmra.mxu0 %v2153
        %v2255 = vpop.f32.mrf.mxu0
        %v2256 = vadd.f32 0.0, %v2255
        %v2257 = vpop.f32.mrf.mxu0
        %2258 = vmatprep.mubr.f32.mxu0 0.0
        %2259 = vmatmul.mubr.f32.gmra.mxu0 %v2156
        %v2260 = vpop.f32.mrf.mxu0
        %v2261 = vadd.f32 0.0, %v2260
        %v2262 = vpop.f32.mrf.mxu0
        %2263 = vmatprep.mubr.f32.mxu0 0.0
        %2264 = vmatmul.mubr.f32.gmra.mxu0 %v2159
        %v2265 = vpop.f32.mrf.mxu0
        %v2266 = vadd.f32 0.0, %v2265
        %v2267 = vpop.f32.mrf.mxu0
        %2268 = vdwg.mxu0
        %v2269 = vadd.f32 %v2127, %v2231
        %v2270 = vadd.f32 %v2128, %v2236
        %v2271 = vadd.f32 %v2129, %v2241
        %v2272 = vadd.f32 %v2130, %v2246
        %v2273 = vadd.f32 %v2131, %v2251
        %v2274 = vadd.f32 %v2132, %v2256
        %v2275 = vadd.f32 %v2133, %v2261
        %v2276 = vadd.f32 %v2134, %v2266
        %2277 = vst.msk [vmem:[#allocation4] sm:$0xff] %vm947, %v2269
        %2278 = vst.msk [vmem:[#allocation4 + $0x8] sm:$0xff] %vm947, %v2270
        %2279 = vst.msk [vmem:[#allocation4 + $0x10] sm:$0xff] %vm947, %v2271
        %2280 = vst.msk [vmem:[#allocation4 + $0x18] sm:$0xff] %vm947, %v2272
        %2281 = vst.msk [vmem:[#allocation4 + $0x20] sm:$0xff] %vm947, %v2273
        %2282 = vst.msk [vmem:[#allocation4 + $0x28] sm:$0xff] %vm947, %v2274
        %2283 = vst.msk [vmem:[#allocation4 + $0x30] sm:$0xff] %vm947, %v2275
        %2284 = vst.msk [vmem:[#allocation4 + $0x38] sm:$0xff] %vm947, %v2276
        %v2285 = vld [vmem:[%s1952 + $0x2] sm:$0xff]
        %v2286 = vld [vmem:[%s1952 + $0x12] sm:$0xff]
        %v2287 = vld [vmem:[%s1952 + $0x22] sm:$0xff]
        %v2288 = vld [vmem:[%s1952 + $0x32] sm:$0xff]
        %v2289 = vld [vmem:[%s1952 + $0x42] sm:$0xff]
        %v2290 = vld [vmem:[%s1952 + $0x52] sm:$0xff]
        %v2291 = vld [vmem:[%s1952 + $0x62] sm:$0xff]
        %v2292 = vld [vmem:[%s1952 + $0x72] sm:$0xff]
        %v2293 = vld [vmem:[#allocation4] sm:$0xff]
        %v2294 = vld [vmem:[#allocation4 + $0x8] sm:$0xff]
        %v2295 = vld [vmem:[#allocation4 + $0x10] sm:$0xff]
        %v2296 = vld [vmem:[#allocation4 + $0x18] sm:$0xff]
        %v2297 = vld [vmem:[#allocation4 + $0x20] sm:$0xff]
        %v2298 = vld [vmem:[#allocation4 + $0x28] sm:$0xff]
        %v2299 = vld [vmem:[#allocation4 + $0x30] sm:$0xff]
        %v2300 = vld [vmem:[#allocation4 + $0x38] sm:$0xff]
        %s2301 = scalar_lea.vmem %s1, 32
        %v2302 = vld [vmem:[%s2301] sm:$0xf]
        %v2304 = vsel %vm725, %v2285, 0
        %v2307 = vsel %vm725, %v2286, 0
        %v2310 = vsel %vm725, %v2287, 0
        %v2313 = vsel %vm725, %v2288, 0
        %v2316 = vsel %vm725, %v2289, 0
        %v2319 = vsel %vm725, %v2290, 0
        %v2322 = vsel %vm725, %v2291, 0
        %v2325 = vsel %vm725, %v2292, 0
        %v2328 = vsel %vm997, %v2302, 0
        %2330 = vmatprep.subr.mxu0 0.0
        %2331 = vmatpush1.msra.mxu0 0.0
        %2332 = vmatprep.subr.mxu0 0.0
        %2333 = vmatpush1.msra.mxu0 0.0
        %2334 = vmatprep.subr.mxu0 0.0
        %2335 = vmatpush1.msra.mxu0 0.0
        %2336 = vmatprep.subr.mxu0 0.0
        %2337 = vmatpush1.msra.mxu0 0.0
        %2338 = vmatprep.subr.mxu0 0.0
        %2339 = vmatpush1.msra.mxu0 0.0
        %2340 = vmatprep.subr.mxu0 0.0
        %2341 = vmatpush1.msra.mxu0 0.0
        %2342 = vmatprep.subr.mxu0 0.0
        %2343 = vmatpush1.msra.mxu0 0.0
        %2344 = vmatprep.subr.mxu0 0.0
        %2345 = vmatpush1.msra.mxu0 0.0
        %2346 = vmatprep.subr.mxu0 0.0
        %2347 = vmatpush1.msra.mxu0 0.0
        %2348 = vmatprep.subr.mxu0 0.0
        %2349 = vmatpush1.msra.mxu0 0.0
        %2350 = vmatprep.subr.mxu0 0.0
        %2351 = vmatpush1.msra.mxu0 0.0
        %2352 = vmatprep.subr.mxu0 0.0
        %2353 = vmatpush1.msra.mxu0 0.0
        %2354 = vmatprep.subr.mxu0 0.0
        %2355 = vmatpush1.msra.mxu0 0.0
        %2356 = vmatprep.subr.mxu0 0.0
        %2357 = vmatpush1.msra.mxu0 0.0
        %2358 = vmatprep.subr.mxu0 0.0
        %2359 = vmatpush1.msra.mxu0 0.0
        %2360 = vmatprep.subr.mxu0 0.0
        %2361 = vmatpush1.msra.mxu0 %v2328
        %2362 = vmatprep.subr.mxu0 0.0
        %2363 = vmatpush2.msra.mxu0 0.0
        %2364 = vmatprep.subr.mxu0 0.0
        %2365 = vmatpush2.msra.mxu0 0.0
        %2366 = vmatprep.subr.mxu0 0.0
        %2367 = vmatpush2.msra.mxu0 0.0
        %2368 = vmatprep.subr.mxu0 0.0
        %2369 = vmatpush2.msra.mxu0 0.0
        %2370 = vmatprep.subr.mxu0 0.0
        %2371 = vmatpush2.msra.mxu0 0.0
        %2372 = vmatprep.subr.mxu0 0.0
        %2373 = vmatpush2.msra.mxu0 0.0
        %2374 = vmatprep.subr.mxu0 0.0
        %2375 = vmatpush2.msra.mxu0 0.0
        %2376 = vmatprep.subr.mxu0 0.0
        %2377 = vmatpush2.msra.mxu0 0.0
        %2378 = vmatprep.subr.mxu0 0.0
        %2379 = vmatpush2.msra.mxu0 0.0
        %2380 = vmatprep.subr.mxu0 0.0
        %2381 = vmatpush2.msra.mxu0 0.0
        %2382 = vmatprep.subr.mxu0 0.0
        %2383 = vmatpush2.msra.mxu0 0.0
        %2384 = vmatprep.subr.mxu0 0.0
        %2385 = vmatpush2.msra.mxu0 0.0
        %2386 = vmatprep.subr.mxu0 0.0
        %2387 = vmatpush2.msra.mxu0 0.0
        %2388 = vmatprep.subr.mxu0 0.0
        %2389 = vmatpush2.msra.mxu0 0.0
        %2390 = vmatprep.subr.mxu0 0.0
        %2391 = vmatpush2.msra.mxu0 0.0
        %2392 = vmatprep.subr.mxu0 0.0
        %2393 = vmatpush2.msra.mxu0 0.0
        %2394 = vmatprep.mubr.f32.mxu0 0.0
        %2395 = vmatmul.mubr.f32.gmra.mxu0 %v2304
        %v2396 = vpop.f32.mrf.mxu0
        %v2397 = vadd.f32 0.0, %v2396
        %v2398 = vpop.f32.mrf.mxu0
        %2399 = vmatprep.mubr.f32.mxu0 0.0
        %2400 = vmatmul.mubr.f32.gmra.mxu0 %v2307
        %v2401 = vpop.f32.mrf.mxu0
        %v2402 = vadd.f32 0.0, %v2401
        %v2403 = vpop.f32.mrf.mxu0
        %2404 = vmatprep.mubr.f32.mxu0 0.0
        %2405 = vmatmul.mubr.f32.gmra.mxu0 %v2310
        %v2406 = vpop.f32.mrf.mxu0
        %v2407 = vadd.f32 0.0, %v2406
        %v2408 = vpop.f32.mrf.mxu0
        %2409 = vmatprep.mubr.f32.mxu0 0.0
        %2410 = vmatmul.mubr.f32.gmra.mxu0 %v2313
        %v2411 = vpop.f32.mrf.mxu0
        %v2412 = vadd.f32 0.0, %v2411
        %v2413 = vpop.f32.mrf.mxu0
        %2414 = vmatprep.mubr.f32.mxu0 0.0
        %2415 = vmatmul.mubr.f32.gmra.mxu0 %v2316
        %v2416 = vpop.f32.mrf.mxu0
        %v2417 = vadd.f32 0.0, %v2416
        %v2418 = vpop.f32.mrf.mxu0
        %2419 = vmatprep.mubr.f32.mxu0 0.0
        %2420 = vmatmul.mubr.f32.gmra.mxu0 %v2319
        %v2421 = vpop.f32.mrf.mxu0
        %v2422 = vadd.f32 0.0, %v2421
        %v2423 = vpop.f32.mrf.mxu0
        %2424 = vmatprep.mubr.f32.mxu0 0.0
        %2425 = vmatmul.mubr.f32.gmra.mxu0 %v2322
        %v2426 = vpop.f32.mrf.mxu0
        %v2427 = vadd.f32 0.0, %v2426
        %v2428 = vpop.f32.mrf.mxu0
        %2429 = vmatprep.mubr.f32.mxu0 0.0
        %2430 = vmatmul.mubr.f32.gmra.mxu0 %v2325
        %v2431 = vpop.f32.mrf.mxu0
        %v2432 = vadd.f32 0.0, %v2431
        %v2433 = vpop.f32.mrf.mxu0
        %2434 = vdwg.mxu0
        %v2435 = vadd.f32 %v2293, %v2397
        %v2436 = vadd.f32 %v2294, %v2402
        %v2437 = vadd.f32 %v2295, %v2407
        %v2438 = vadd.f32 %v2296, %v2412
        %v2439 = vadd.f32 %v2297, %v2417
        %v2440 = vadd.f32 %v2298, %v2422
        %v2441 = vadd.f32 %v2299, %v2427
        %v2442 = vadd.f32 %v2300, %v2432
        %2443 = vst.msk [vmem:[#allocation4] sm:$0xff] %vm947, %v2435
        %2444 = vst.msk [vmem:[#allocation4 + $0x8] sm:$0xff] %vm947, %v2436
        %2445 = vst.msk [vmem:[#allocation4 + $0x10] sm:$0xff] %vm947, %v2437
        %2446 = vst.msk [vmem:[#allocation4 + $0x18] sm:$0xff] %vm947, %v2438
        %2447 = vst.msk [vmem:[#allocation4 + $0x20] sm:$0xff] %vm947, %v2439
        %2448 = vst.msk [vmem:[#allocation4 + $0x28] sm:$0xff] %vm947, %v2440
        %2449 = vst.msk [vmem:[#allocation4 + $0x30] sm:$0xff] %vm947, %v2441
        %2450 = vst.msk [vmem:[#allocation4 + $0x38] sm:$0xff] %vm947, %v2442
        %v2451 = vld [vmem:[#allocation4] sm:$0xff]
        %v2452 = vld [vmem:[#allocation4 + $0x8] sm:$0xff]
        %v2453 = vld [vmem:[#allocation4 + $0x10] sm:$0xff]
        %v2454 = vld [vmem:[#allocation4 + $0x18] sm:$0xff]
        %v2455 = vld [vmem:[#allocation4 + $0x20] sm:$0xff]
        %v2456 = vld [vmem:[#allocation4 + $0x28] sm:$0xff]
        %v2457 = vld [vmem:[#allocation4 + $0x30] sm:$0xff]
        %v2458 = vld [vmem:[#allocation4 + $0x38] sm:$0xff]
        %v2459 = vld [vmem:[%s2] sm:$0x1]
        %v2461 = vlaneseq
        %v2462 = vshrl.u32 %v2461, 7
        %v2463 = vsub.s32 0, %v2462
        %v2464 = vrot.slane %v2459, %v2463
        %v2466 = vmul.f32 %v2451, %v2464
        %v2467 = vmul.f32 %v2452, %v2464
        %v2468 = vmul.f32 %v2453, %v2464
        %v2469 = vmul.f32 %v2454, %v2464
        %v2470 = vmul.f32 %v2455, %v2464
        %v2471 = vmul.f32 %v2456, %v2464
        %v2472 = vmul.f32 %v2457, %v2464
        %v2473 = vmul.f32 %v2458, %v2464
        %v2474 = vld [vmem:[%s3] sm:$0x1]
        %v2476 = vlaneseq
        %v2477 = vshrl.u32 %v2476, 7
        %v2478 = vsub.s32 0, %v2477
        %v2479 = vrot.slane %v2474, %v2478
        %v2481 = vadd.f32 %v2466, %v2479
        %v2482 = vadd.f32 %v2467, %v2479
        %v2483 = vadd.f32 %v2468, %v2479
        %v2484 = vadd.f32 %v2469, %v2479
        %v2485 = vadd.f32 %v2470, %v2479
        %v2486 = vadd.f32 %v2471, %v2479
        %v2487 = vadd.f32 %v2472, %v2479
        %v2488 = vadd.f32 %v2473, %v2479
        %v2489 = vmax.f32 %v2481, 0.0
        %v2490 = vmax.f32 %v2482, 0.0
        %v2491 = vmax.f32 %v2483, 0.0
        %v2492 = vmax.f32 %v2484, 0.0
        %v2493 = vmax.f32 %v2485, 0.0
        %v2494 = vmax.f32 %v2486, 0.0
        %v2495 = vmax.f32 %v2487, 0.0
        %v2496 = vmax.f32 %v2488, 0.0
        %2497 = vst.msk [vmem:[#allocation3] sm:$0xff] %vm947, 0.0
        %vm2498 = vcmask 58368
        %2499 = vst.msk [vmem:[#allocation3 + $0x8] sm:$0x3] %vm2498, 0.0
        %2500 = vst.msk [vmem:[#allocation3 + $0x10] sm:$0xff] %vm947, 0.0
        %2501 = vst.msk [vmem:[#allocation3 + $0x18] sm:$0x3] %vm2498, 0.0
        %2502 = vst.msk [vmem:[#allocation3 + $0x20] sm:$0xff] %vm947, 0.0
        %2503 = vst.msk [vmem:[#allocation3 + $0x28] sm:$0x3] %vm2498, 0.0
        %2504 = vst.msk [vmem:[#allocation3 + $0x30] sm:$0xff] %vm947, 0.0
        %2505 = vst.msk [vmem:[#allocation3 + $0x38] sm:$0x3] %vm2498, 0.0
        %2506 = vst.msk [vmem:[#allocation3 + $0x40] sm:$0xff] %vm947, 0.0
        %2507 = vst.msk [vmem:[#allocation3 + $0x48] sm:$0x3] %vm2498, 0.0
        %2508 = vst.msk [vmem:[#allocation3 + $0x50] sm:$0xff] %vm947, 0.0
        %2509 = vst.msk [vmem:[#allocation3 + $0x58] sm:$0x3] %vm2498, 0.0
        %2510 = vst.msk [vmem:[#allocation3 + $0x60] sm:$0xff] %vm947, 0.0
        %2511 = vst.msk [vmem:[#allocation3 + $0x68] sm:$0x3] %vm2498, 0.0
        %2512 = vst.msk [vmem:[#allocation3 + $0x70] sm:$0xff] %vm947, 0.0
        %2513 = vst.msk [vmem:[#allocation3 + $0x78] sm:$0x3] %vm2498, 0.0
        %2514 = vst.msk [vmem:[#allocation3 + $0x80] sm:$0xff] %vm947, 0.0
        %2515 = vst.msk [vmem:[#allocation3 + $0x88] sm:$0x3] %vm2498, 0.0
        %2516 = vst.msk [vmem:[#allocation3 + $0x90] sm:$0xff] %vm947, 0.0
        %2517 = vst.msk [vmem:[#allocation3 + $0x98] sm:$0x3] %vm2498, 0.0
        %s2518 = scalar_lea.vmem [#allocation3], 16
        %2519 = vst.msk [vmem:[%s2518 + $0x1] sm:$0xff] %vm947, %v2489
        %2520 = vst.msk [vmem:[%s2518 + $0x11] sm:$0xff] %vm947, %v2490
        %2521 = vst.msk [vmem:[%s2518 + $0x21] sm:$0xff] %vm947, %v2491
        %2522 = vst.msk [vmem:[%s2518 + $0x31] sm:$0xff] %vm947, %v2492
        %2523 = vst.msk [vmem:[%s2518 + $0x41] sm:$0xff] %vm947, %v2493
        %2524 = vst.msk [vmem:[%s2518 + $0x51] sm:$0xff] %vm947, %v2494
        %2525 = vst.msk [vmem:[%s2518 + $0x61] sm:$0xff] %vm947, %v2495
        %2526 = vst.msk [vmem:[%s2518 + $0x71] sm:$0xff] %vm947, %v2496
        %2527 = vst.msk [vmem:[#allocation5] sm:$0xff] %vm947, 0.0
        %2528 = vst.msk [vmem:[#allocation5 + $0x8] sm:$0xff] %vm947, 0.0
        %2529 = vst.msk [vmem:[#allocation5 + $0x10] sm:$0xff] %vm947, 0.0
        %2530 = vst.msk [vmem:[#allocation5 + $0x18] sm:$0xff] %vm947, 0.0
        %2531 = vst.msk [vmem:[#allocation5 + $0x20] sm:$0xff] %vm947, 0.0
        %2532 = vst.msk [vmem:[#allocation5 + $0x28] sm:$0xff] %vm947, 0.0
        %2533 = vst.msk [vmem:[#allocation5 + $0x30] sm:$0xff] %vm947, 0.0
        %2534 = vst.msk [vmem:[#allocation5 + $0x38] sm:$0xff] %vm947, 0.0
        %v2535 = vld [vmem:[#allocation3] sm:$0xff]
        %v2536 = vld [vmem:[#allocation3 + $0x10] sm:$0xff]
        %v2537 = vld [vmem:[#allocation3 + $0x20] sm:$0xff]
        %v2538 = vld [vmem:[#allocation3 + $0x30] sm:$0xff]
        %v2539 = vld [vmem:[#allocation3 + $0x40] sm:$0xff]
        %v2540 = vld [vmem:[#allocation3 + $0x50] sm:$0xff]
        %v2541 = vld [vmem:[#allocation3 + $0x60] sm:$0xff]
        %v2542 = vld [vmem:[#allocation3 + $0x70] sm:$0xff]
        %v2543 = vld [vmem:[#allocation5] sm:$0xff]
        %v2544 = vld [vmem:[#allocation5 + $0x8] sm:$0xff]
        %v2545 = vld [vmem:[#allocation5 + $0x10] sm:$0xff]
        %v2546 = vld [vmem:[#allocation5 + $0x18] sm:$0xff]
        %v2547 = vld [vmem:[#allocation5 + $0x20] sm:$0xff]
        %v2548 = vld [vmem:[#allocation5 + $0x28] sm:$0xff]
        %v2549 = vld [vmem:[#allocation5 + $0x30] sm:$0xff]
        %v2550 = vld [vmem:[#allocation5 + $0x38] sm:$0xff]
        %v2551 = vld [vmem:[%s4] sm:$0xff]
        %v2553 = vsel %vm947, %v2535, 0
        %v2556 = vsel %vm947, %v2536, 0
        %v2559 = vsel %vm947, %v2537, 0
        %v2562 = vsel %vm947, %v2538, 0
        %v2565 = vsel %vm947, %v2539, 0
        %v2568 = vsel %vm947, %v2540, 0
        %v2571 = vsel %vm947, %v2541, 0
        %v2574 = vsel %vm947, %v2542, 0
        %2576 = vmatprep.subr.mxu0 0.0
        %2577 = vmatpush1.msra.mxu0 0.0
        %2578 = vmatprep.subr.mxu0 0.0
        %2579 = vmatpush1.msra.mxu0 0.0
        %2580 = vmatprep.subr.mxu0 0.0
        %2581 = vmatpush1.msra.mxu0 0.0
        %2582 = vmatprep.subr.mxu0 0.0
        %2583 = vmatpush1.msra.mxu0 0.0
        %2584 = vmatprep.subr.mxu0 0.0
        %2585 = vmatpush1.msra.mxu0 0.0
        %2586 = vmatprep.subr.mxu0 0.0
        %2587 = vmatpush1.msra.mxu0 0.0
        %2588 = vmatprep.subr.mxu0 0.0
        %2589 = vmatpush1.msra.mxu0 0.0
        %2590 = vmatprep.subr.mxu0 0.0
        %2591 = vmatpush1.msra.mxu0 0.0
        %2592 = vmatprep.subr.mxu0 0.0
        %2593 = vmatpush1.msra.mxu0 0.0
        %2594 = vmatprep.subr.mxu0 0.0
        %2595 = vmatpush1.msra.mxu0 0.0
        %2596 = vmatprep.subr.mxu0 0.0
        %2597 = vmatpush1.msra.mxu0 0.0
        %2598 = vmatprep.subr.mxu0 0.0
        %2599 = vmatpush1.msra.mxu0 0.0
        %2600 = vmatprep.subr.mxu0 0.0
        %2601 = vmatpush1.msra.mxu0 0.0
        %2602 = vmatprep.subr.mxu0 0.0
        %2603 = vmatpush1.msra.mxu0 0.0
        %2604 = vmatprep.subr.mxu0 0.0
        %2605 = vmatpush1.msra.mxu0 0.0
        %2606 = vmatprep.subr.mxu0 0.0
        %2607 = vmatpush1.msra.mxu0 %v2551
        %2608 = vmatprep.subr.mxu0 0.0
        %2609 = vmatpush2.msra.mxu0 0.0
        %2610 = vmatprep.subr.mxu0 0.0
        %2611 = vmatpush2.msra.mxu0 0.0
        %2612 = vmatprep.subr.mxu0 0.0
        %2613 = vmatpush2.msra.mxu0 0.0
        %2614 = vmatprep.subr.mxu0 0.0
        %2615 = vmatpush2.msra.mxu0 0.0
        %2616 = vmatprep.subr.mxu0 0.0
        %2617 = vmatpush2.msra.mxu0 0.0
        %2618 = vmatprep.subr.mxu0 0.0
        %2619 = vmatpush2.msra.mxu0 0.0
        %2620 = vmatprep.subr.mxu0 0.0
        %2621 = vmatpush2.msra.mxu0 0.0
        %2622 = vmatprep.subr.mxu0 0.0
        %2623 = vmatpush2.msra.mxu0 0.0
        %2624 = vmatprep.subr.mxu0 0.0
        %2625 = vmatpush2.msra.mxu0 0.0
        %2626 = vmatprep.subr.mxu0 0.0
        %2627 = vmatpush2.msra.mxu0 0.0
        %2628 = vmatprep.subr.mxu0 0.0
        %2629 = vmatpush2.msra.mxu0 0.0
        %2630 = vmatprep.subr.mxu0 0.0
        %2631 = vmatpush2.msra.mxu0 0.0
        %2632 = vmatprep.subr.mxu0 0.0
        %2633 = vmatpush2.msra.mxu0 0.0
        %2634 = vmatprep.subr.mxu0 0.0
        %2635 = vmatpush2.msra.mxu0 0.0
        %2636 = vmatprep.subr.mxu0 0.0
        %2637 = vmatpush2.msra.mxu0 0.0
        %2638 = vmatprep.subr.mxu0 0.0
        %2639 = vmatpush2.msra.mxu0 0.0
        %2640 = vmatprep.mubr.f32.mxu0 0.0
        %2641 = vmatmul.mubr.f32.gmra.mxu0 %v2553
        %v2642 = vpop.f32.mrf.mxu0
        %v2643 = vadd.f32 0.0, %v2642
        %v2644 = vpop.f32.mrf.mxu0
        %2645 = vmatprep.mubr.f32.mxu0 0.0
        %2646 = vmatmul.mubr.f32.gmra.mxu0 %v2556
        %v2647 = vpop.f32.mrf.mxu0
        %v2648 = vadd.f32 0.0, %v2647
        %v2649 = vpop.f32.mrf.mxu0
        %2650 = vmatprep.mubr.f32.mxu0 0.0
        %2651 = vmatmul.mubr.f32.gmra.mxu0 %v2559
        %v2652 = vpop.f32.mrf.mxu0
        %v2653 = vadd.f32 0.0, %v2652
        %v2654 = vpop.f32.mrf.mxu0
        %2655 = vmatprep.mubr.f32.mxu0 0.0
        %2656 = vmatmul.mubr.f32.gmra.mxu0 %v2562
        %v2657 = vpop.f32.mrf.mxu0
        %v2658 = vadd.f32 0.0, %v2657
        %v2659 = vpop.f32.mrf.mxu0
        %2660 = vmatprep.mubr.f32.mxu0 0.0
        %2661 = vmatmul.mubr.f32.gmra.mxu0 %v2565
        %v2662 = vpop.f32.mrf.mxu0
        %v2663 = vadd.f32 0.0, %v2662
        %v2664 = vpop.f32.mrf.mxu0
        %2665 = vmatprep.mubr.f32.mxu0 0.0
        %2666 = vmatmul.mubr.f32.gmra.mxu0 %v2568
        %v2667 = vpop.f32.mrf.mxu0
        %v2668 = vadd.f32 0.0, %v2667
        %v2669 = vpop.f32.mrf.mxu0
        %2670 = vmatprep.mubr.f32.mxu0 0.0
        %2671 = vmatmul.mubr.f32.gmra.mxu0 %v2571
        %v2672 = vpop.f32.mrf.mxu0
        %v2673 = vadd.f32 0.0, %v2672
        %v2674 = vpop.f32.mrf.mxu0
        %2675 = vmatprep.mubr.f32.mxu0 0.0
        %2676 = vmatmul.mubr.f32.gmra.mxu0 %v2574
        %v2677 = vpop.f32.mrf.mxu0
        %v2678 = vadd.f32 0.0, %v2677
        %v2679 = vpop.f32.mrf.mxu0
        %2680 = vdwg.mxu0
        %v2681 = vadd.f32 %v2543, %v2643
        %v2682 = vadd.f32 %v2544, %v2648
        %v2683 = vadd.f32 %v2545, %v2653
        %v2684 = vadd.f32 %v2546, %v2658
        %v2685 = vadd.f32 %v2547, %v2663
        %v2686 = vadd.f32 %v2548, %v2668
        %v2687 = vadd.f32 %v2549, %v2673
        %v2688 = vadd.f32 %v2550, %v2678
        %2689 = vst.msk [vmem:[#allocation5] sm:$0xff] %vm947, %v2681
        %2690 = vst.msk [vmem:[#allocation5 + $0x8] sm:$0xff] %vm947, %v2682
        %2691 = vst.msk [vmem:[#allocation5 + $0x10] sm:$0xff] %vm947, %v2683
        %2692 = vst.msk [vmem:[#allocation5 + $0x18] sm:$0xff] %vm947, %v2684
        %2693 = vst.msk [vmem:[#allocation5 + $0x20] sm:$0xff] %vm947, %v2685
        %2694 = vst.msk [vmem:[#allocation5 + $0x28] sm:$0xff] %vm947, %v2686
        %2695 = vst.msk [vmem:[#allocation5 + $0x30] sm:$0xff] %vm947, %v2687
        %2696 = vst.msk [vmem:[#allocation5 + $0x38] sm:$0xff] %vm947, %v2688
        %v2697 = vld [vmem:[#allocation3 + $0x1] sm:$0xff]
        %v2698 = vld [vmem:[#allocation3 + $0x11] sm:$0xff]
        %v2699 = vld [vmem:[#allocation3 + $0x21] sm:$0xff]
        %v2700 = vld [vmem:[#allocation3 + $0x31] sm:$0xff]
        %v2701 = vld [vmem:[#allocation3 + $0x41] sm:$0xff]
        %v2702 = vld [vmem:[#allocation3 + $0x51] sm:$0xff]
        %v2703 = vld [vmem:[#allocation3 + $0x61] sm:$0xff]
        %v2704 = vld [vmem:[#allocation3 + $0x71] sm:$0xff]
        %v2705 = vld [vmem:[#allocation5] sm:$0xff]
        %v2706 = vld [vmem:[#allocation5 + $0x8] sm:$0xff]
        %v2707 = vld [vmem:[#allocation5 + $0x10] sm:$0xff]
        %v2708 = vld [vmem:[#allocation5 + $0x18] sm:$0xff]
        %v2709 = vld [vmem:[#allocation5 + $0x20] sm:$0xff]
        %v2710 = vld [vmem:[#allocation5 + $0x28] sm:$0xff]
        %v2711 = vld [vmem:[#allocation5 + $0x30] sm:$0xff]
        %v2712 = vld [vmem:[#allocation5 + $0x38] sm:$0xff]
        %s2713 = scalar_lea.vmem %s4, 8
        %v2714 = vld [vmem:[%s2713] sm:$0xff]
        %v2716 = vsel %vm947, %v2697, 0
        %v2719 = vsel %vm947, %v2698, 0
        %v2722 = vsel %vm947, %v2699, 0
        %v2725 = vsel %vm947, %v2700, 0
        %v2728 = vsel %vm947, %v2701, 0
        %v2731 = vsel %vm947, %v2702, 0
        %v2734 = vsel %vm947, %v2703, 0
        %v2737 = vsel %vm947, %v2704, 0
        %2739 = vmatprep.subr.mxu0 0.0
        %2740 = vmatpush1.msra.mxu0 0.0
        %2741 = vmatprep.subr.mxu0 0.0
        %2742 = vmatpush1.msra.mxu0 0.0
        %2743 = vmatprep.subr.mxu0 0.0
        %2744 = vmatpush1.msra.mxu0 0.0
        %2745 = vmatprep.subr.mxu0 0.0
        %2746 = vmatpush1.msra.mxu0 0.0
        %2747 = vmatprep.subr.mxu0 0.0
        %2748 = vmatpush1.msra.mxu0 0.0
        %2749 = vmatprep.subr.mxu0 0.0
        %2750 = vmatpush1.msra.mxu0 0.0
        %2751 = vmatprep.subr.mxu0 0.0
        %2752 = vmatpush1.msra.mxu0 0.0
        %2753 = vmatprep.subr.mxu0 0.0
        %2754 = vmatpush1.msra.mxu0 0.0
        %2755 = vmatprep.subr.mxu0 0.0
        %2756 = vmatpush1.msra.mxu0 0.0
        %2757 = vmatprep.subr.mxu0 0.0
        %2758 = vmatpush1.msra.mxu0 0.0
        %2759 = vmatprep.subr.mxu0 0.0
        %2760 = vmatpush1.msra.mxu0 0.0
        %2761 = vmatprep.subr.mxu0 0.0
        %2762 = vmatpush1.msra.mxu0 0.0
        %2763 = vmatprep.subr.mxu0 0.0
        %2764 = vmatpush1.msra.mxu0 0.0
        %2765 = vmatprep.subr.mxu0 0.0
        %2766 = vmatpush1.msra.mxu0 0.0
        %2767 = vmatprep.subr.mxu0 0.0
        %2768 = vmatpush1.msra.mxu0 0.0
        %2769 = vmatprep.subr.mxu0 0.0
        %2770 = vmatpush1.msra.mxu0 %v2714
        %2771 = vmatprep.subr.mxu0 0.0
        %2772 = vmatpush2.msra.mxu0 0.0
        %2773 = vmatprep.subr.mxu0 0.0
        %2774 = vmatpush2.msra.mxu0 0.0
        %2775 = vmatprep.subr.mxu0 0.0
        %2776 = vmatpush2.msra.mxu0 0.0
        %2777 = vmatprep.subr.mxu0 0.0
        %2778 = vmatpush2.msra.mxu0 0.0
        %2779 = vmatprep.subr.mxu0 0.0
        %2780 = vmatpush2.msra.mxu0 0.0
        %2781 = vmatprep.subr.mxu0 0.0
        %2782 = vmatpush2.msra.mxu0 0.0
        %2783 = vmatprep.subr.mxu0 0.0
        %2784 = vmatpush2.msra.mxu0 0.0
        %2785 = vmatprep.subr.mxu0 0.0
        %2786 = vmatpush2.msra.mxu0 0.0
        %2787 = vmatprep.subr.mxu0 0.0
        %2788 = vmatpush2.msra.mxu0 0.0
        %2789 = vmatprep.subr.mxu0 0.0
        %2790 = vmatpush2.msra.mxu0 0.0
        %2791 = vmatprep.subr.mxu0 0.0
        %2792 = vmatpush2.msra.mxu0 0.0
        %2793 = vmatprep.subr.mxu0 0.0
        %2794 = vmatpush2.msra.mxu0 0.0
        %2795 = vmatprep.subr.mxu0 0.0
        %2796 = vmatpush2.msra.mxu0 0.0
        %2797 = vmatprep.subr.mxu0 0.0
        %2798 = vmatpush2.msra.mxu0 0.0
        %2799 = vmatprep.subr.mxu0 0.0
        %2800 = vmatpush2.msra.mxu0 0.0
        %2801 = vmatprep.subr.mxu0 0.0
        %2802 = vmatpush2.msra.mxu0 0.0
        %2803 = vmatprep.mubr.f32.mxu0 0.0
        %2804 = vmatmul.mubr.f32.gmra.mxu0 %v2716
        %v2805 = vpop.f32.mrf.mxu0
        %v2806 = vadd.f32 0.0, %v2805
        %v2807 = vpop.f32.mrf.mxu0
        %2808 = vmatprep.mubr.f32.mxu0 0.0
        %2809 = vmatmul.mubr.f32.gmra.mxu0 %v2719
        %v2810 = vpop.f32.mrf.mxu0
        %v2811 = vadd.f32 0.0, %v2810
        %v2812 = vpop.f32.mrf.mxu0
        %2813 = vmatprep.mubr.f32.mxu0 0.0
        %2814 = vmatmul.mubr.f32.gmra.mxu0 %v2722
        %v2815 = vpop.f32.mrf.mxu0
        %v2816 = vadd.f32 0.0, %v2815
        %v2817 = vpop.f32.mrf.mxu0
        %2818 = vmatprep.mubr.f32.mxu0 0.0
        %2819 = vmatmul.mubr.f32.gmra.mxu0 %v2725
        %v2820 = vpop.f32.mrf.mxu0
        %v2821 = vadd.f32 0.0, %v2820
        %v2822 = vpop.f32.mrf.mxu0
        %2823 = vmatprep.mubr.f32.mxu0 0.0
        %2824 = vmatmul.mubr.f32.gmra.mxu0 %v2728
        %v2825 = vpop.f32.mrf.mxu0
        %v2826 = vadd.f32 0.0, %v2825
        %v2827 = vpop.f32.mrf.mxu0
        %2828 = vmatprep.mubr.f32.mxu0 0.0
        %2829 = vmatmul.mubr.f32.gmra.mxu0 %v2731
        %v2830 = vpop.f32.mrf.mxu0
        %v2831 = vadd.f32 0.0, %v2830
        %v2832 = vpop.f32.mrf.mxu0
        %2833 = vmatprep.mubr.f32.mxu0 0.0
        %2834 = vmatmul.mubr.f32.gmra.mxu0 %v2734
        %v2835 = vpop.f32.mrf.mxu0
        %v2836 = vadd.f32 0.0, %v2835
        %v2837 = vpop.f32.mrf.mxu0
        %2838 = vmatprep.mubr.f32.mxu0 0.0
        %2839 = vmatmul.mubr.f32.gmra.mxu0 %v2737
        %v2840 = vpop.f32.mrf.mxu0
        %v2841 = vadd.f32 0.0, %v2840
        %v2842 = vpop.f32.mrf.mxu0
        %2843 = vdwg.mxu0
        %v2844 = vadd.f32 %v2705, %v2806
        %v2845 = vadd.f32 %v2706, %v2811
        %v2846 = vadd.f32 %v2707, %v2816
        %v2847 = vadd.f32 %v2708, %v2821
        %v2848 = vadd.f32 %v2709, %v2826
        %v2849 = vadd.f32 %v2710, %v2831
        %v2850 = vadd.f32 %v2711, %v2836
        %v2851 = vadd.f32 %v2712, %v2841
        %2852 = vst.msk [vmem:[#allocation5] sm:$0xff] %vm947, %v2844
        %2853 = vst.msk [vmem:[#allocation5 + $0x8] sm:$0xff] %vm947, %v2845
        %2854 = vst.msk [vmem:[#allocation5 + $0x10] sm:$0xff] %vm947, %v2846
        %2855 = vst.msk [vmem:[#allocation5 + $0x18] sm:$0xff] %vm947, %v2847
        %2856 = vst.msk [vmem:[#allocation5 + $0x20] sm:$0xff] %vm947, %v2848
        %2857 = vst.msk [vmem:[#allocation5 + $0x28] sm:$0xff] %vm947, %v2849
        %2858 = vst.msk [vmem:[#allocation5 + $0x30] sm:$0xff] %vm947, %v2850
        %2859 = vst.msk [vmem:[#allocation5 + $0x38] sm:$0xff] %vm947, %v2851
        %v2860 = vld [vmem:[#allocation3 + $0x2] sm:$0xff]
        %v2861 = vld [vmem:[#allocation3 + $0x12] sm:$0xff]
        %v2862 = vld [vmem:[#allocation3 + $0x22] sm:$0xff]
        %v2863 = vld [vmem:[#allocation3 + $0x32] sm:$0xff]
        %v2864 = vld [vmem:[#allocation3 + $0x42] sm:$0xff]
        %v2865 = vld [vmem:[#allocation3 + $0x52] sm:$0xff]
        %v2866 = vld [vmem:[#allocation3 + $0x62] sm:$0xff]
        %v2867 = vld [vmem:[#allocation3 + $0x72] sm:$0xff]
        %v2868 = vld [vmem:[#allocation5] sm:$0xff]
        %v2869 = vld [vmem:[#allocation5 + $0x8] sm:$0xff]
        %v2870 = vld [vmem:[#allocation5 + $0x10] sm:$0xff]
        %v2871 = vld [vmem:[#allocation5 + $0x18] sm:$0xff]
        %v2872 = vld [vmem:[#allocation5 + $0x20] sm:$0xff]
        %v2873 = vld [vmem:[#allocation5 + $0x28] sm:$0xff]
        %v2874 = vld [vmem:[#allocation5 + $0x30] sm:$0xff]
        %v2875 = vld [vmem:[#allocation5 + $0x38] sm:$0xff]
        %s2876 = scalar_lea.vmem %s4, 16
        %v2877 = vld [vmem:[%s2876] sm:$0xff]
        %v2879 = vsel %vm947, %v2860, 0
        %v2882 = vsel %vm947, %v2861, 0
        %v2885 = vsel %vm947, %v2862, 0
        %v2888 = vsel %vm947, %v2863, 0
        %v2891 = vsel %vm947, %v2864, 0
        %v2894 = vsel %vm947, %v2865, 0
        %v2897 = vsel %vm947, %v2866, 0
        %v2900 = vsel %vm947, %v2867, 0
        %2902 = vmatprep.subr.mxu0 0.0
        %2903 = vmatpush1.msra.mxu0 0.0
        %2904 = vmatprep.subr.mxu0 0.0
        %2905 = vmatpush1.msra.mxu0 0.0
        %2906 = vmatprep.subr.mxu0 0.0
        %2907 = vmatpush1.msra.mxu0 0.0
        %2908 = vmatprep.subr.mxu0 0.0
        %2909 = vmatpush1.msra.mxu0 0.0
        %2910 = vmatprep.subr.mxu0 0.0
        %2911 = vmatpush1.msra.mxu0 0.0
        %2912 = vmatprep.subr.mxu0 0.0
        %2913 = vmatpush1.msra.mxu0 0.0
        %2914 = vmatprep.subr.mxu0 0.0
        %2915 = vmatpush1.msra.mxu0 0.0
        %2916 = vmatprep.subr.mxu0 0.0
        %2917 = vmatpush1.msra.mxu0 0.0
        %2918 = vmatprep.subr.mxu0 0.0
        %2919 = vmatpush1.msra.mxu0 0.0
        %2920 = vmatprep.subr.mxu0 0.0
        %2921 = vmatpush1.msra.mxu0 0.0
        %2922 = vmatprep.subr.mxu0 0.0
        %2923 = vmatpush1.msra.mxu0 0.0
        %2924 = vmatprep.subr.mxu0 0.0
        %2925 = vmatpush1.msra.mxu0 0.0
        %2926 = vmatprep.subr.mxu0 0.0
        %2927 = vmatpush1.msra.mxu0 0.0
        %2928 = vmatprep.subr.mxu0 0.0
        %2929 = vmatpush1.msra.mxu0 0.0
        %2930 = vmatprep.subr.mxu0 0.0
        %2931 = vmatpush1.msra.mxu0 0.0
        %2932 = vmatprep.subr.mxu0 0.0
        %2933 = vmatpush1.msra.mxu0 %v2877
        %2934 = vmatprep.subr.mxu0 0.0
        %2935 = vmatpush2.msra.mxu0 0.0
        %2936 = vmatprep.subr.mxu0 0.0
        %2937 = vmatpush2.msra.mxu0 0.0
        %2938 = vmatprep.subr.mxu0 0.0
        %2939 = vmatpush2.msra.mxu0 0.0
        %2940 = vmatprep.subr.mxu0 0.0
        %2941 = vmatpush2.msra.mxu0 0.0
        %2942 = vmatprep.subr.mxu0 0.0
        %2943 = vmatpush2.msra.mxu0 0.0
        %2944 = vmatprep.subr.mxu0 0.0
        %2945 = vmatpush2.msra.mxu0 0.0
        %2946 = vmatprep.subr.mxu0 0.0
        %2947 = vmatpush2.msra.mxu0 0.0
        %2948 = vmatprep.subr.mxu0 0.0
        %2949 = vmatpush2.msra.mxu0 0.0
        %2950 = vmatprep.subr.mxu0 0.0
        %2951 = vmatpush2.msra.mxu0 0.0
        %2952 = vmatprep.subr.mxu0 0.0
        %2953 = vmatpush2.msra.mxu0 0.0
        %2954 = vmatprep.subr.mxu0 0.0
        %2955 = vmatpush2.msra.mxu0 0.0
        %2956 = vmatprep.subr.mxu0 0.0
        %2957 = vmatpush2.msra.mxu0 0.0
        %2958 = vmatprep.subr.mxu0 0.0
        %2959 = vmatpush2.msra.mxu0 0.0
        %2960 = vmatprep.subr.mxu0 0.0
        %2961 = vmatpush2.msra.mxu0 0.0
        %2962 = vmatprep.subr.mxu0 0.0
        %2963 = vmatpush2.msra.mxu0 0.0
        %2964 = vmatprep.subr.mxu0 0.0
        %2965 = vmatpush2.msra.mxu0 0.0
        %2966 = vmatprep.mubr.f32.mxu0 0.0
        %2967 = vmatmul.mubr.f32.gmra.mxu0 %v2879
        %v2968 = vpop.f32.mrf.mxu0
        %v2969 = vadd.f32 0.0, %v2968
        %v2970 = vpop.f32.mrf.mxu0
        %2971 = vmatprep.mubr.f32.mxu0 0.0
        %2972 = vmatmul.mubr.f32.gmra.mxu0 %v2882
        %v2973 = vpop.f32.mrf.mxu0
        %v2974 = vadd.f32 0.0, %v2973
        %v2975 = vpop.f32.mrf.mxu0
        %2976 = vmatprep.mubr.f32.mxu0 0.0
        %2977 = vmatmul.mubr.f32.gmra.mxu0 %v2885
        %v2978 = vpop.f32.mrf.mxu0
        %v2979 = vadd.f32 0.0, %v2978
        %v2980 = vpop.f32.mrf.mxu0
        %2981 = vmatprep.mubr.f32.mxu0 0.0
        %2982 = vmatmul.mubr.f32.gmra.mxu0 %v2888
        %v2983 = vpop.f32.mrf.mxu0
        %v2984 = vadd.f32 0.0, %v2983
        %v2985 = vpop.f32.mrf.mxu0
        %2986 = vmatprep.mubr.f32.mxu0 0.0
        %2987 = vmatmul.mubr.f32.gmra.mxu0 %v2891
        %v2988 = vpop.f32.mrf.mxu0
        %v2989 = vadd.f32 0.0, %v2988
        %v2990 = vpop.f32.mrf.mxu0
        %2991 = vmatprep.mubr.f32.mxu0 0.0
        %2992 = vmatmul.mubr.f32.gmra.mxu0 %v2894
        %v2993 = vpop.f32.mrf.mxu0
        %v2994 = vadd.f32 0.0, %v2993
        %v2995 = vpop.f32.mrf.mxu0
        %2996 = vmatprep.mubr.f32.mxu0 0.0
        %2997 = vmatmul.mubr.f32.gmra.mxu0 %v2897
        %v2998 = vpop.f32.mrf.mxu0
        %v2999 = vadd.f32 0.0, %v2998
        %v3000 = vpop.f32.mrf.mxu0
        %3001 = vmatprep.mubr.f32.mxu0 0.0
        %3002 = vmatmul.mubr.f32.gmra.mxu0 %v2900
        %v3003 = vpop.f32.mrf.mxu0
        %v3004 = vadd.f32 0.0, %v3003
        %v3005 = vpop.f32.mrf.mxu0
        %3006 = vdwg.mxu0
        %v3007 = vadd.f32 %v2868, %v2969
        %v3008 = vadd.f32 %v2869, %v2974
        %v3009 = vadd.f32 %v2870, %v2979
        %v3010 = vadd.f32 %v2871, %v2984
        %v3011 = vadd.f32 %v2872, %v2989
        %v3012 = vadd.f32 %v2873, %v2994
        %v3013 = vadd.f32 %v2874, %v2999
        %v3014 = vadd.f32 %v2875, %v3004
        %3015 = vst.msk [vmem:[#allocation5] sm:$0xff] %vm947, %v3007
        %3016 = vst.msk [vmem:[#allocation5 + $0x8] sm:$0xff] %vm947, %v3008
        %3017 = vst.msk [vmem:[#allocation5 + $0x10] sm:$0xff] %vm947, %v3009
        %3018 = vst.msk [vmem:[#allocation5 + $0x18] sm:$0xff] %vm947, %v3010
        %3019 = vst.msk [vmem:[#allocation5 + $0x20] sm:$0xff] %vm947, %v3011
        %3020 = vst.msk [vmem:[#allocation5 + $0x28] sm:$0xff] %vm947, %v3012
        %3021 = vst.msk [vmem:[#allocation5 + $0x30] sm:$0xff] %vm947, %v3013
        %3022 = vst.msk [vmem:[#allocation5 + $0x38] sm:$0xff] %vm947, %v3014
        %v3023 = vld [vmem:[%s2518] sm:$0xff]
        %v3024 = vld [vmem:[%s2518 + $0x10] sm:$0xff]
        %v3025 = vld [vmem:[%s2518 + $0x20] sm:$0xff]
        %v3026 = vld [vmem:[%s2518 + $0x30] sm:$0xff]
        %v3027 = vld [vmem:[%s2518 + $0x40] sm:$0xff]
        %v3028 = vld [vmem:[%s2518 + $0x50] sm:$0xff]
        %v3029 = vld [vmem:[%s2518 + $0x60] sm:$0xff]
        %v3030 = vld [vmem:[%s2518 + $0x70] sm:$0xff]
        %v3031 = vld [vmem:[#allocation5] sm:$0xff]
        %v3032 = vld [vmem:[#allocation5 + $0x8] sm:$0xff]
        %v3033 = vld [vmem:[#allocation5 + $0x10] sm:$0xff]
        %v3034 = vld [vmem:[#allocation5 + $0x18] sm:$0xff]
        %v3035 = vld [vmem:[#allocation5 + $0x20] sm:$0xff]
        %v3036 = vld [vmem:[#allocation5 + $0x28] sm:$0xff]
        %v3037 = vld [vmem:[#allocation5 + $0x30] sm:$0xff]
        %v3038 = vld [vmem:[#allocation5 + $0x38] sm:$0xff]
        %s3039 = scalar_lea.vmem %s4, 24
        %v3040 = vld [vmem:[%s3039] sm:$0xff]
        %v3042 = vsel %vm947, %v3023, 0
        %v3045 = vsel %vm947, %v3024, 0
        %v3048 = vsel %vm947, %v3025, 0
        %v3051 = vsel %vm947, %v3026, 0
        %v3054 = vsel %vm947, %v3027, 0
        %v3057 = vsel %vm947, %v3028, 0
        %v3060 = vsel %vm947, %v3029, 0
        %v3063 = vsel %vm947, %v3030, 0
        %3065 = vmatprep.subr.mxu0 0.0
        %3066 = vmatpush1.msra.mxu0 0.0
        %3067 = vmatprep.subr.mxu0 0.0
        %3068 = vmatpush1.msra.mxu0 0.0
        %3069 = vmatprep.subr.mxu0 0.0
        %3070 = vmatpush1.msra.mxu0 0.0
        %3071 = vmatprep.subr.mxu0 0.0
        %3072 = vmatpush1.msra.mxu0 0.0
        %3073 = vmatprep.subr.mxu0 0.0
        %3074 = vmatpush1.msra.mxu0 0.0
        %3075 = vmatprep.subr.mxu0 0.0
        %3076 = vmatpush1.msra.mxu0 0.0
        %3077 = vmatprep.subr.mxu0 0.0
        %3078 = vmatpush1.msra.mxu0 0.0
        %3079 = vmatprep.subr.mxu0 0.0
        %3080 = vmatpush1.msra.mxu0 0.0
        %3081 = vmatprep.subr.mxu0 0.0
        %3082 = vmatpush1.msra.mxu0 0.0
        %3083 = vmatprep.subr.mxu0 0.0
        %3084 = vmatpush1.msra.mxu0 0.0
        %3085 = vmatprep.subr.mxu0 0.0
        %3086 = vmatpush1.msra.mxu0 0.0
        %3087 = vmatprep.subr.mxu0 0.0
        %3088 = vmatpush1.msra.mxu0 0.0
        %3089 = vmatprep.subr.mxu0 0.0
        %3090 = vmatpush1.msra.mxu0 0.0
        %3091 = vmatprep.subr.mxu0 0.0
        %3092 = vmatpush1.msra.mxu0 0.0
        %3093 = vmatprep.subr.mxu0 0.0
        %3094 = vmatpush1.msra.mxu0 0.0
        %3095 = vmatprep.subr.mxu0 0.0
        %3096 = vmatpush1.msra.mxu0 %v3040
        %3097 = vmatprep.subr.mxu0 0.0
        %3098 = vmatpush2.msra.mxu0 0.0
        %3099 = vmatprep.subr.mxu0 0.0
        %3100 = vmatpush2.msra.mxu0 0.0
        %3101 = vmatprep.subr.mxu0 0.0
        %3102 = vmatpush2.msra.mxu0 0.0
        %3103 = vmatprep.subr.mxu0 0.0
        %3104 = vmatpush2.msra.mxu0 0.0
        %3105 = vmatprep.subr.mxu0 0.0
        %3106 = vmatpush2.msra.mxu0 0.0
        %3107 = vmatprep.subr.mxu0 0.0
        %3108 = vmatpush2.msra.mxu0 0.0
        %3109 = vmatprep.subr.mxu0 0.0
        %3110 = vmatpush2.msra.mxu0 0.0
        %3111 = vmatprep.subr.mxu0 0.0
        %3112 = vmatpush2.msra.mxu0 0.0
        %3113 = vmatprep.subr.mxu0 0.0
        %3114 = vmatpush2.msra.mxu0 0.0
        %3115 = vmatprep.subr.mxu0 0.0
        %3116 = vmatpush2.msra.mxu0 0.0
        %3117 = vmatprep.subr.mxu0 0.0
        %3118 = vmatpush2.msra.mxu0 0.0
        %3119 = vmatprep.subr.mxu0 0.0
        %3120 = vmatpush2.msra.mxu0 0.0
        %3121 = vmatprep.subr.mxu0 0.0
        %3122 = vmatpush2.msra.mxu0 0.0
        %3123 = vmatprep.subr.mxu0 0.0
        %3124 = vmatpush2.msra.mxu0 0.0
        %3125 = vmatprep.subr.mxu0 0.0
        %3126 = vmatpush2.msra.mxu0 0.0
        %3127 = vmatprep.subr.mxu0 0.0
        %3128 = vmatpush2.msra.mxu0 0.0
        %3129 = vmatprep.mubr.f32.mxu0 0.0
        %3130 = vmatmul.mubr.f32.gmra.mxu0 %v3042
        %v3131 = vpop.f32.mrf.mxu0
        %v3132 = vadd.f32 0.0, %v3131
        %v3133 = vpop.f32.mrf.mxu0
        %3134 = vmatprep.mubr.f32.mxu0 0.0
        %3135 = vmatmul.mubr.f32.gmra.mxu0 %v3045
        %v3136 = vpop.f32.mrf.mxu0
        %v3137 = vadd.f32 0.0, %v3136
        %v3138 = vpop.f32.mrf.mxu0
        %3139 = vmatprep.mubr.f32.mxu0 0.0
        %3140 = vmatmul.mubr.f32.gmra.mxu0 %v3048
        %v3141 = vpop.f32.mrf.mxu0
        %v3142 = vadd.f32 0.0, %v3141
        %v3143 = vpop.f32.mrf.mxu0
        %3144 = vmatprep.mubr.f32.mxu0 0.0
        %3145 = vmatmul.mubr.f32.gmra.mxu0 %v3051
        %v3146 = vpop.f32.mrf.mxu0
        %v3147 = vadd.f32 0.0, %v3146
        %v3148 = vpop.f32.mrf.mxu0
        %3149 = vmatprep.mubr.f32.mxu0 0.0
        %3150 = vmatmul.mubr.f32.gmra.mxu0 %v3054
        %v3151 = vpop.f32.mrf.mxu0
        %v3152 = vadd.f32 0.0, %v3151
        %v3153 = vpop.f32.mrf.mxu0
        %3154 = vmatprep.mubr.f32.mxu0 0.0
        %3155 = vmatmul.mubr.f32.gmra.mxu0 %v3057
        %v3156 = vpop.f32.mrf.mxu0
        %v3157 = vadd.f32 0.0, %v3156
        %v3158 = vpop.f32.mrf.mxu0
        %3159 = vmatprep.mubr.f32.mxu0 0.0
        %3160 = vmatmul.mubr.f32.gmra.mxu0 %v3060
        %v3161 = vpop.f32.mrf.mxu0
        %v3162 = vadd.f32 0.0, %v3161
        %v3163 = vpop.f32.mrf.mxu0
        %3164 = vmatprep.mubr.f32.mxu0 0.0
        %3165 = vmatmul.mubr.f32.gmra.mxu0 %v3063
        %v3166 = vpop.f32.mrf.mxu0
        %v3167 = vadd.f32 0.0, %v3166
        %v3168 = vpop.f32.mrf.mxu0
        %3169 = vdwg.mxu0
        %v3170 = vadd.f32 %v3031, %v3132
        %v3171 = vadd.f32 %v3032, %v3137
        %v3172 = vadd.f32 %v3033, %v3142
        %v3173 = vadd.f32 %v3034, %v3147
        %v3174 = vadd.f32 %v3035, %v3152
        %v3175 = vadd.f32 %v3036, %v3157
        %v3176 = vadd.f32 %v3037, %v3162
        %v3177 = vadd.f32 %v3038, %v3167
        %3178 = vst.msk [vmem:[#allocation5] sm:$0xff] %vm947, %v3170
        %3179 = vst.msk [vmem:[#allocation5 + $0x8] sm:$0xff] %vm947, %v3171
        %3180 = vst.msk [vmem:[#allocation5 + $0x10] sm:$0xff] %vm947, %v3172
        %3181 = vst.msk [vmem:[#allocation5 + $0x18] sm:$0xff] %vm947, %v3173
        %3182 = vst.msk [vmem:[#allocation5 + $0x20] sm:$0xff] %vm947, %v3174
        %3183 = vst.msk [vmem:[#allocation5 + $0x28] sm:$0xff] %vm947, %v3175
        %3184 = vst.msk [vmem:[#allocation5 + $0x30] sm:$0xff] %vm947, %v3176
        %3185 = vst.msk [vmem:[#allocation5 + $0x38] sm:$0xff] %vm947, %v3177
        %v3186 = vld [vmem:[%s2518 + $0x1] sm:$0xff]
        %v3187 = vld [vmem:[%s2518 + $0x11] sm:$0xff]
        %v3188 = vld [vmem:[%s2518 + $0x21] sm:$0xff]
        %v3189 = vld [vmem:[%s2518 + $0x31] sm:$0xff]
        %v3190 = vld [vmem:[%s2518 + $0x41] sm:$0xff]
        %v3191 = vld [vmem:[%s2518 + $0x51] sm:$0xff]
        %v3192 = vld [vmem:[%s2518 + $0x61] sm:$0xff]
        %v3193 = vld [vmem:[%s2518 + $0x71] sm:$0xff]
        %v3194 = vld [vmem:[#allocation5] sm:$0xff]
        %v3195 = vld [vmem:[#allocation5 + $0x8] sm:$0xff]
        %v3196 = vld [vmem:[#allocation5 + $0x10] sm:$0xff]
        %v3197 = vld [vmem:[#allocation5 + $0x18] sm:$0xff]
        %v3198 = vld [vmem:[#allocation5 + $0x20] sm:$0xff]
        %v3199 = vld [vmem:[#allocation5 + $0x28] sm:$0xff]
        %v3200 = vld [vmem:[#allocation5 + $0x30] sm:$0xff]
        %v3201 = vld [vmem:[#allocation5 + $0x38] sm:$0xff]
        %s3202 = scalar_lea.vmem %s4, 32
        %v3203 = vld [vmem:[%s3202] sm:$0xff]
        %v3205 = vsel %vm947, %v3186, 0
        %v3208 = vsel %vm947, %v3187, 0
        %v3211 = vsel %vm947, %v3188, 0
        %v3214 = vsel %vm947, %v3189, 0
        %v3217 = vsel %vm947, %v3190, 0
        %v3220 = vsel %vm947, %v3191, 0
        %v3223 = vsel %vm947, %v3192, 0
        %v3226 = vsel %vm947, %v3193, 0
        %3228 = vmatprep.subr.mxu0 0.0
        %3229 = vmatpush1.msra.mxu0 0.0
        %3230 = vmatprep.subr.mxu0 0.0
        %3231 = vmatpush1.msra.mxu0 0.0
        %3232 = vmatprep.subr.mxu0 0.0
        %3233 = vmatpush1.msra.mxu0 0.0
        %3234 = vmatprep.subr.mxu0 0.0
        %3235 = vmatpush1.msra.mxu0 0.0
        %3236 = vmatprep.subr.mxu0 0.0
        %3237 = vmatpush1.msra.mxu0 0.0
        %3238 = vmatprep.subr.mxu0 0.0
        %3239 = vmatpush1.msra.mxu0 0.0
        %3240 = vmatprep.subr.mxu0 0.0
        %3241 = vmatpush1.msra.mxu0 0.0
        %3242 = vmatprep.subr.mxu0 0.0
        %3243 = vmatpush1.msra.mxu0 0.0
        %3244 = vmatprep.subr.mxu0 0.0
        %3245 = vmatpush1.msra.mxu0 0.0
        %3246 = vmatprep.subr.mxu0 0.0
        %3247 = vmatpush1.msra.mxu0 0.0
        %3248 = vmatprep.subr.mxu0 0.0
        %3249 = vmatpush1.msra.mxu0 0.0
        %3250 = vmatprep.subr.mxu0 0.0
        %3251 = vmatpush1.msra.mxu0 0.0
        %3252 = vmatprep.subr.mxu0 0.0
        %3253 = vmatpush1.msra.mxu0 0.0
        %3254 = vmatprep.subr.mxu0 0.0
        %3255 = vmatpush1.msra.mxu0 0.0
        %3256 = vmatprep.subr.mxu0 0.0
        %3257 = vmatpush1.msra.mxu0 0.0
        %3258 = vmatprep.subr.mxu0 0.0
        %3259 = vmatpush1.msra.mxu0 %v3203
        %3260 = vmatprep.subr.mxu0 0.0
        %3261 = vmatpush2.msra.mxu0 0.0
        %3262 = vmatprep.subr.mxu0 0.0
        %3263 = vmatpush2.msra.mxu0 0.0
        %3264 = vmatprep.subr.mxu0 0.0
        %3265 = vmatpush2.msra.mxu0 0.0
        %3266 = vmatprep.subr.mxu0 0.0
        %3267 = vmatpush2.msra.mxu0 0.0
        %3268 = vmatprep.subr.mxu0 0.0
        %3269 = vmatpush2.msra.mxu0 0.0
        %3270 = vmatprep.subr.mxu0 0.0
        %3271 = vmatpush2.msra.mxu0 0.0
        %3272 = vmatprep.subr.mxu0 0.0
        %3273 = vmatpush2.msra.mxu0 0.0
        %3274 = vmatprep.subr.mxu0 0.0
        %3275 = vmatpush2.msra.mxu0 0.0
        %3276 = vmatprep.subr.mxu0 0.0
        %3277 = vmatpush2.msra.mxu0 0.0
        %3278 = vmatprep.subr.mxu0 0.0
        %3279 = vmatpush2.msra.mxu0 0.0
        %3280 = vmatprep.subr.mxu0 0.0
        %3281 = vmatpush2.msra.mxu0 0.0
        %3282 = vmatprep.subr.mxu0 0.0
        %3283 = vmatpush2.msra.mxu0 0.0
        %3284 = vmatprep.subr.mxu0 0.0
        %3285 = vmatpush2.msra.mxu0 0.0
        %3286 = vmatprep.subr.mxu0 0.0
        %3287 = vmatpush2.msra.mxu0 0.0
        %3288 = vmatprep.subr.mxu0 0.0
        %3289 = vmatpush2.msra.mxu0 0.0
        %3290 = vmatprep.subr.mxu0 0.0
        %3291 = vmatpush2.msra.mxu0 0.0
        %3292 = vmatprep.mubr.f32.mxu0 0.0
        %3293 = vmatmul.mubr.f32.gmra.mxu0 %v3205
        %v3294 = vpop.f32.mrf.mxu0
        %v3295 = vadd.f32 0.0, %v3294
        %v3296 = vpop.f32.mrf.mxu0
        %3297 = vmatprep.mubr.f32.mxu0 0.0
        %3298 = vmatmul.mubr.f32.gmra.mxu0 %v3208
        %v3299 = vpop.f32.mrf.mxu0
        %v3300 = vadd.f32 0.0, %v3299
        %v3301 = vpop.f32.mrf.mxu0
        %3302 = vmatprep.mubr.f32.mxu0 0.0
        %3303 = vmatmul.mubr.f32.gmra.mxu0 %v3211
        %v3304 = vpop.f32.mrf.mxu0
        %v3305 = vadd.f32 0.0, %v3304
        %v3306 = vpop.f32.mrf.mxu0
        %3307 = vmatprep.mubr.f32.mxu0 0.0
        %3308 = vmatmul.mubr.f32.gmra.mxu0 %v3214
        %v3309 = vpop.f32.mrf.mxu0
        %v3310 = vadd.f32 0.0, %v3309
        %v3311 = vpop.f32.mrf.mxu0
        %3312 = vmatprep.mubr.f32.mxu0 0.0
        %3313 = vmatmul.mubr.f32.gmra.mxu0 %v3217
        %v3314 = vpop.f32.mrf.mxu0
        %v3315 = vadd.f32 0.0, %v3314
        %v3316 = vpop.f32.mrf.mxu0
        %3317 = vmatprep.mubr.f32.mxu0 0.0
        %3318 = vmatmul.mubr.f32.gmra.mxu0 %v3220
        %v3319 = vpop.f32.mrf.mxu0
        %v3320 = vadd.f32 0.0, %v3319
        %v3321 = vpop.f32.mrf.mxu0
        %3322 = vmatprep.mubr.f32.mxu0 0.0
        %3323 = vmatmul.mubr.f32.gmra.mxu0 %v3223
        %v3324 = vpop.f32.mrf.mxu0
        %v3325 = vadd.f32 0.0, %v3324
        %v3326 = vpop.f32.mrf.mxu0
        %3327 = vmatprep.mubr.f32.mxu0 0.0
        %3328 = vmatmul.mubr.f32.gmra.mxu0 %v3226
        %v3329 = vpop.f32.mrf.mxu0
        %v3330 = vadd.f32 0.0, %v3329
        %v3331 = vpop.f32.mrf.mxu0
        %3332 = vdwg.mxu0
        %v3333 = vadd.f32 %v3194, %v3295
        %v3334 = vadd.f32 %v3195, %v3300
        %v3335 = vadd.f32 %v3196, %v3305
        %v3336 = vadd.f32 %v3197, %v3310
        %v3337 = vadd.f32 %v3198, %v3315
        %v3338 = vadd.f32 %v3199, %v3320
        %v3339 = vadd.f32 %v3200, %v3325
        %v3340 = vadd.f32 %v3201, %v3330
        %3341 = vst.msk [vmem:[#allocation5] sm:$0xff] %vm947, %v3333
        %3342 = vst.msk [vmem:[#allocation5 + $0x8] sm:$0xff] %vm947, %v3334
        %3343 = vst.msk [vmem:[#allocation5 + $0x10] sm:$0xff] %vm947, %v3335
        %3344 = vst.msk [vmem:[#allocation5 + $0x18] sm:$0xff] %vm947, %v3336
        %3345 = vst.msk [vmem:[#allocation5 + $0x20] sm:$0xff] %vm947, %v3337
        %3346 = vst.msk [vmem:[#allocation5 + $0x28] sm:$0xff] %vm947, %v3338
        %3347 = vst.msk [vmem:[#allocation5 + $0x30] sm:$0xff] %vm947, %v3339
        %3348 = vst.msk [vmem:[#allocation5 + $0x38] sm:$0xff] %vm947, %v3340
        %v3349 = vld [vmem:[%s2518 + $0x2] sm:$0xff]
        %v3350 = vld [vmem:[%s2518 + $0x12] sm:$0xff]
        %v3351 = vld [vmem:[%s2518 + $0x22] sm:$0xff]
        %v3352 = vld [vmem:[%s2518 + $0x32] sm:$0xff]
        %v3353 = vld [vmem:[%s2518 + $0x42] sm:$0xff]
        %v3354 = vld [vmem:[%s2518 + $0x52] sm:$0xff]
        %v3355 = vld [vmem:[%s2518 + $0x62] sm:$0xff]
        %v3356 = vld [vmem:[%s2518 + $0x72] sm:$0xff]
        %v3357 = vld [vmem:[#allocation5] sm:$0xff]
        %v3358 = vld [vmem:[#allocation5 + $0x8] sm:$0xff]
        %v3359 = vld [vmem:[#allocation5 + $0x10] sm:$0xff]
        %v3360 = vld [vmem:[#allocation5 + $0x18] sm:$0xff]
        %v3361 = vld [vmem:[#allocation5 + $0x20] sm:$0xff]
        %v3362 = vld [vmem:[#allocation5 + $0x28] sm:$0xff]
        %v3363 = vld [vmem:[#allocation5 + $0x30] sm:$0xff]
        %v3364 = vld [vmem:[#allocation5 + $0x38] sm:$0xff]
        %s3365 = scalar_lea.vmem %s4, 40
        %v3366 = vld [vmem:[%s3365] sm:$0xff]
        %v3368 = vsel %vm947, %v3349, 0
        %v3371 = vsel %vm947, %v3350, 0
        %v3374 = vsel %vm947, %v3351, 0
        %v3377 = vsel %vm947, %v3352, 0
        %v3380 = vsel %vm947, %v3353, 0
        %v3383 = vsel %vm947, %v3354, 0
        %v3386 = vsel %vm947, %v3355, 0
        %v3389 = vsel %vm947, %v3356, 0
        %3391 = vmatprep.subr.mxu0 0.0
        %3392 = vmatpush1.msra.mxu0 0.0
        %3393 = vmatprep.subr.mxu0 0.0
        %3394 = vmatpush1.msra.mxu0 0.0
        %3395 = vmatprep.subr.mxu0 0.0
        %3396 = vmatpush1.msra.mxu0 0.0
        %3397 = vmatprep.subr.mxu0 0.0
        %3398 = vmatpush1.msra.mxu0 0.0
        %3399 = vmatprep.subr.mxu0 0.0
        %3400 = vmatpush1.msra.mxu0 0.0
        %3401 = vmatprep.subr.mxu0 0.0
        %3402 = vmatpush1.msra.mxu0 0.0
        %3403 = vmatprep.subr.mxu0 0.0
        %3404 = vmatpush1.msra.mxu0 0.0
        %3405 = vmatprep.subr.mxu0 0.0
        %3406 = vmatpush1.msra.mxu0 0.0
        %3407 = vmatprep.subr.mxu0 0.0
        %3408 = vmatpush1.msra.mxu0 0.0
        %3409 = vmatprep.subr.mxu0 0.0
        %3410 = vmatpush1.msra.mxu0 0.0
        %3411 = vmatprep.subr.mxu0 0.0
        %3412 = vmatpush1.msra.mxu0 0.0
        %3413 = vmatprep.subr.mxu0 0.0
        %3414 = vmatpush1.msra.mxu0 0.0
        %3415 = vmatprep.subr.mxu0 0.0
        %3416 = vmatpush1.msra.mxu0 0.0
        %3417 = vmatprep.subr.mxu0 0.0
        %3418 = vmatpush1.msra.mxu0 0.0
        %3419 = vmatprep.subr.mxu0 0.0
        %3420 = vmatpush1.msra.mxu0 0.0
        %3421 = vmatprep.subr.mxu0 0.0
        %3422 = vmatpush1.msra.mxu0 %v3366
        %3423 = vmatprep.subr.mxu0 0.0
        %3424 = vmatpush2.msra.mxu0 0.0
        %3425 = vmatprep.subr.mxu0 0.0
        %3426 = vmatpush2.msra.mxu0 0.0
        %3427 = vmatprep.subr.mxu0 0.0
        %3428 = vmatpush2.msra.mxu0 0.0
        %3429 = vmatprep.subr.mxu0 0.0
        %3430 = vmatpush2.msra.mxu0 0.0
        %3431 = vmatprep.subr.mxu0 0.0
        %3432 = vmatpush2.msra.mxu0 0.0
        %3433 = vmatprep.subr.mxu0 0.0
        %3434 = vmatpush2.msra.mxu0 0.0
        %3435 = vmatprep.subr.mxu0 0.0
        %3436 = vmatpush2.msra.mxu0 0.0
        %3437 = vmatprep.subr.mxu0 0.0
        %3438 = vmatpush2.msra.mxu0 0.0
        %3439 = vmatprep.subr.mxu0 0.0
        %3440 = vmatpush2.msra.mxu0 0.0
        %3441 = vmatprep.subr.mxu0 0.0
        %3442 = vmatpush2.msra.mxu0 0.0
        %3443 = vmatprep.subr.mxu0 0.0
        %3444 = vmatpush2.msra.mxu0 0.0
        %3445 = vmatprep.subr.mxu0 0.0
        %3446 = vmatpush2.msra.mxu0 0.0
        %3447 = vmatprep.subr.mxu0 0.0
        %3448 = vmatpush2.msra.mxu0 0.0
        %3449 = vmatprep.subr.mxu0 0.0
        %3450 = vmatpush2.msra.mxu0 0.0
        %3451 = vmatprep.subr.mxu0 0.0
        %3452 = vmatpush2.msra.mxu0 0.0
        %3453 = vmatprep.subr.mxu0 0.0
        %3454 = vmatpush2.msra.mxu0 0.0
        %3455 = vmatprep.mubr.f32.mxu0 0.0
        %3456 = vmatmul.mubr.f32.gmra.mxu0 %v3368
        %v3457 = vpop.f32.mrf.mxu0
        %v3458 = vadd.f32 0.0, %v3457
        %v3459 = vpop.f32.mrf.mxu0
        %3460 = vmatprep.mubr.f32.mxu0 0.0
        %3461 = vmatmul.mubr.f32.gmra.mxu0 %v3371
        %v3462 = vpop.f32.mrf.mxu0
        %v3463 = vadd.f32 0.0, %v3462
        %v3464 = vpop.f32.mrf.mxu0
        %3465 = vmatprep.mubr.f32.mxu0 0.0
        %3466 = vmatmul.mubr.f32.gmra.mxu0 %v3374
        %v3467 = vpop.f32.mrf.mxu0
        %v3468 = vadd.f32 0.0, %v3467
        %v3469 = vpop.f32.mrf.mxu0
        %3470 = vmatprep.mubr.f32.mxu0 0.0
        %3471 = vmatmul.mubr.f32.gmra.mxu0 %v3377
        %v3472 = vpop.f32.mrf.mxu0
        %v3473 = vadd.f32 0.0, %v3472
        %v3474 = vpop.f32.mrf.mxu0
        %3475 = vmatprep.mubr.f32.mxu0 0.0
        %3476 = vmatmul.mubr.f32.gmra.mxu0 %v3380
        %v3477 = vpop.f32.mrf.mxu0
        %v3478 = vadd.f32 0.0, %v3477
        %v3479 = vpop.f32.mrf.mxu0
        %3480 = vmatprep.mubr.f32.mxu0 0.0
        %3481 = vmatmul.mubr.f32.gmra.mxu0 %v3383
        %v3482 = vpop.f32.mrf.mxu0
        %v3483 = vadd.f32 0.0, %v3482
        %v3484 = vpop.f32.mrf.mxu0
        %3485 = vmatprep.mubr.f32.mxu0 0.0
        %3486 = vmatmul.mubr.f32.gmra.mxu0 %v3386
        %v3487 = vpop.f32.mrf.mxu0
        %v3488 = vadd.f32 0.0, %v3487
        %v3489 = vpop.f32.mrf.mxu0
        %3490 = vmatprep.mubr.f32.mxu0 0.0
        %3491 = vmatmul.mubr.f32.gmra.mxu0 %v3389
        %v3492 = vpop.f32.mrf.mxu0
        %v3493 = vadd.f32 0.0, %v3492
        %v3494 = vpop.f32.mrf.mxu0
        %3495 = vdwg.mxu0
        %v3496 = vadd.f32 %v3357, %v3458
        %v3497 = vadd.f32 %v3358, %v3463
        %v3498 = vadd.f32 %v3359, %v3468
        %v3499 = vadd.f32 %v3360, %v3473
        %v3500 = vadd.f32 %v3361, %v3478
        %v3501 = vadd.f32 %v3362, %v3483
        %v3502 = vadd.f32 %v3363, %v3488
        %v3503 = vadd.f32 %v3364, %v3493
        %3504 = vst.msk [vmem:[#allocation5] sm:$0xff] %vm947, %v3496
        %3505 = vst.msk [vmem:[#allocation5 + $0x8] sm:$0xff] %vm947, %v3497
        %3506 = vst.msk [vmem:[#allocation5 + $0x10] sm:$0xff] %vm947, %v3498
        %3507 = vst.msk [vmem:[#allocation5 + $0x18] sm:$0xff] %vm947, %v3499
        %3508 = vst.msk [vmem:[#allocation5 + $0x20] sm:$0xff] %vm947, %v3500
        %3509 = vst.msk [vmem:[#allocation5 + $0x28] sm:$0xff] %vm947, %v3501
        %3510 = vst.msk [vmem:[#allocation5 + $0x30] sm:$0xff] %vm947, %v3502
        %3511 = vst.msk [vmem:[#allocation5 + $0x38] sm:$0xff] %vm947, %v3503
        %s3512 = scalar_lea.vmem [#allocation3], 32
        %v3513 = vld [vmem:[%s3512] sm:$0xff]
        %v3514 = vld [vmem:[%s3512 + $0x10] sm:$0xff]
        %v3515 = vld [vmem:[%s3512 + $0x20] sm:$0xff]
        %v3516 = vld [vmem:[%s3512 + $0x30] sm:$0xff]
        %v3517 = vld [vmem:[%s3512 + $0x40] sm:$0xff]
        %v3518 = vld [vmem:[%s3512 + $0x50] sm:$0xff]
        %v3519 = vld [vmem:[%s3512 + $0x60] sm:$0xff]
        %v3520 = vld [vmem:[%s3512 + $0x70] sm:$0xff]
        %v3521 = vld [vmem:[#allocation5] sm:$0xff]
        %v3522 = vld [vmem:[#allocation5 + $0x8] sm:$0xff]
        %v3523 = vld [vmem:[#allocation5 + $0x10] sm:$0xff]
        %v3524 = vld [vmem:[#allocation5 + $0x18] sm:$0xff]
        %v3525 = vld [vmem:[#allocation5 + $0x20] sm:$0xff]
        %v3526 = vld [vmem:[#allocation5 + $0x28] sm:$0xff]
        %v3527 = vld [vmem:[#allocation5 + $0x30] sm:$0xff]
        %v3528 = vld [vmem:[#allocation5 + $0x38] sm:$0xff]
        %s3529 = scalar_lea.vmem %s4, 48
        %v3530 = vld [vmem:[%s3529] sm:$0xff]
        %v3532 = vsel %vm947, %v3513, 0
        %v3535 = vsel %vm947, %v3514, 0
        %v3538 = vsel %vm947, %v3515, 0
        %v3541 = vsel %vm947, %v3516, 0
        %v3544 = vsel %vm947, %v3517, 0
        %v3547 = vsel %vm947, %v3518, 0
        %v3550 = vsel %vm947, %v3519, 0
        %v3553 = vsel %vm947, %v3520, 0
        %3555 = vmatprep.subr.mxu0 0.0
        %3556 = vmatpush1.msra.mxu0 0.0
        %3557 = vmatprep.subr.mxu0 0.0
        %3558 = vmatpush1.msra.mxu0 0.0
        %3559 = vmatprep.subr.mxu0 0.0
        %3560 = vmatpush1.msra.mxu0 0.0
        %3561 = vmatprep.subr.mxu0 0.0
        %3562 = vmatpush1.msra.mxu0 0.0
        %3563 = vmatprep.subr.mxu0 0.0
        %3564 = vmatpush1.msra.mxu0 0.0
        %3565 = vmatprep.subr.mxu0 0.0
        %3566 = vmatpush1.msra.mxu0 0.0
        %3567 = vmatprep.subr.mxu0 0.0
        %3568 = vmatpush1.msra.mxu0 0.0
        %3569 = vmatprep.subr.mxu0 0.0
        %3570 = vmatpush1.msra.mxu0 0.0
        %3571 = vmatprep.subr.mxu0 0.0
        %3572 = vmatpush1.msra.mxu0 0.0
        %3573 = vmatprep.subr.mxu0 0.0
        %3574 = vmatpush1.msra.mxu0 0.0
        %3575 = vmatprep.subr.mxu0 0.0
        %3576 = vmatpush1.msra.mxu0 0.0
        %3577 = vmatprep.subr.mxu0 0.0
        %3578 = vmatpush1.msra.mxu0 0.0
        %3579 = vmatprep.subr.mxu0 0.0
        %3580 = vmatpush1.msra.mxu0 0.0
        %3581 = vmatprep.subr.mxu0 0.0
        %3582 = vmatpush1.msra.mxu0 0.0
        %3583 = vmatprep.subr.mxu0 0.0
        %3584 = vmatpush1.msra.mxu0 0.0
        %3585 = vmatprep.subr.mxu0 0.0
        %3586 = vmatpush1.msra.mxu0 %v3530
        %3587 = vmatprep.subr.mxu0 0.0
        %3588 = vmatpush2.msra.mxu0 0.0
        %3589 = vmatprep.subr.mxu0 0.0
        %3590 = vmatpush2.msra.mxu0 0.0
        %3591 = vmatprep.subr.mxu0 0.0
        %3592 = vmatpush2.msra.mxu0 0.0
        %3593 = vmatprep.subr.mxu0 0.0
        %3594 = vmatpush2.msra.mxu0 0.0
        %3595 = vmatprep.subr.mxu0 0.0
        %3596 = vmatpush2.msra.mxu0 0.0
        %3597 = vmatprep.subr.mxu0 0.0
        %3598 = vmatpush2.msra.mxu0 0.0
        %3599 = vmatprep.subr.mxu0 0.0
        %3600 = vmatpush2.msra.mxu0 0.0
        %3601 = vmatprep.subr.mxu0 0.0
        %3602 = vmatpush2.msra.mxu0 0.0
        %3603 = vmatprep.subr.mxu0 0.0
        %3604 = vmatpush2.msra.mxu0 0.0
        %3605 = vmatprep.subr.mxu0 0.0
        %3606 = vmatpush2.msra.mxu0 0.0
        %3607 = vmatprep.subr.mxu0 0.0
        %3608 = vmatpush2.msra.mxu0 0.0
        %3609 = vmatprep.subr.mxu0 0.0
        %3610 = vmatpush2.msra.mxu0 0.0
        %3611 = vmatprep.subr.mxu0 0.0
        %3612 = vmatpush2.msra.mxu0 0.0
        %3613 = vmatprep.subr.mxu0 0.0
        %3614 = vmatpush2.msra.mxu0 0.0
        %3615 = vmatprep.subr.mxu0 0.0
        %3616 = vmatpush2.msra.mxu0 0.0
        %3617 = vmatprep.subr.mxu0 0.0
        %3618 = vmatpush2.msra.mxu0 0.0
        %3619 = vmatprep.mubr.f32.mxu0 0.0
        %3620 = vmatmul.mubr.f32.gmra.mxu0 %v3532
        %v3621 = vpop.f32.mrf.mxu0
        %v3622 = vadd.f32 0.0, %v3621
        %v3623 = vpop.f32.mrf.mxu0
        %3624 = vmatprep.mubr.f32.mxu0 0.0
        %3625 = vmatmul.mubr.f32.gmra.mxu0 %v3535
        %v3626 = vpop.f32.mrf.mxu0
        %v3627 = vadd.f32 0.0, %v3626
        %v3628 = vpop.f32.mrf.mxu0
        %3629 = vmatprep.mubr.f32.mxu0 0.0
        %3630 = vmatmul.mubr.f32.gmra.mxu0 %v3538
        %v3631 = vpop.f32.mrf.mxu0
        %v3632 = vadd.f32 0.0, %v3631
        %v3633 = vpop.f32.mrf.mxu0
        %3634 = vmatprep.mubr.f32.mxu0 0.0
        %3635 = vmatmul.mubr.f32.gmra.mxu0 %v3541
        %v3636 = vpop.f32.mrf.mxu0
        %v3637 = vadd.f32 0.0, %v3636
        %v3638 = vpop.f32.mrf.mxu0
        %3639 = vmatprep.mubr.f32.mxu0 0.0
        %3640 = vmatmul.mubr.f32.gmra.mxu0 %v3544
        %v3641 = vpop.f32.mrf.mxu0
        %v3642 = vadd.f32 0.0, %v3641
        %v3643 = vpop.f32.mrf.mxu0
        %3644 = vmatprep.mubr.f32.mxu0 0.0
        %3645 = vmatmul.mubr.f32.gmra.mxu0 %v3547
        %v3646 = vpop.f32.mrf.mxu0
        %v3647 = vadd.f32 0.0, %v3646
        %v3648 = vpop.f32.mrf.mxu0
        %3649 = vmatprep.mubr.f32.mxu0 0.0
        %3650 = vmatmul.mubr.f32.gmra.mxu0 %v3550
        %v3651 = vpop.f32.mrf.mxu0
        %v3652 = vadd.f32 0.0, %v3651
        %v3653 = vpop.f32.mrf.mxu0
        %3654 = vmatprep.mubr.f32.mxu0 0.0
        %3655 = vmatmul.mubr.f32.gmra.mxu0 %v3553
        %v3656 = vpop.f32.mrf.mxu0
        %v3657 = vadd.f32 0.0, %v3656
        %v3658 = vpop.f32.mrf.mxu0
        %3659 = vdwg.mxu0
        %v3660 = vadd.f32 %v3521, %v3622
        %v3661 = vadd.f32 %v3522, %v3627
        %v3662 = vadd.f32 %v3523, %v3632
        %v3663 = vadd.f32 %v3524, %v3637
        %v3664 = vadd.f32 %v3525, %v3642
        %v3665 = vadd.f32 %v3526, %v3647
        %v3666 = vadd.f32 %v3527, %v3652
        %v3667 = vadd.f32 %v3528, %v3657
        %3668 = vst.msk [vmem:[#allocation5] sm:$0xff] %vm947, %v3660
        %3669 = vst.msk [vmem:[#allocation5 + $0x8] sm:$0xff] %vm947, %v3661
        %3670 = vst.msk [vmem:[#allocation5 + $0x10] sm:$0xff] %vm947, %v3662
        %3671 = vst.msk [vmem:[#allocation5 + $0x18] sm:$0xff] %vm947, %v3663
        %3672 = vst.msk [vmem:[#allocation5 + $0x20] sm:$0xff] %vm947, %v3664
        %3673 = vst.msk [vmem:[#allocation5 + $0x28] sm:$0xff] %vm947, %v3665
        %3674 = vst.msk [vmem:[#allocation5 + $0x30] sm:$0xff] %vm947, %v3666
        %3675 = vst.msk [vmem:[#allocation5 + $0x38] sm:$0xff] %vm947, %v3667
        %v3676 = vld [vmem:[%s3512 + $0x1] sm:$0xff]
        %v3677 = vld [vmem:[%s3512 + $0x11] sm:$0xff]
        %v3678 = vld [vmem:[%s3512 + $0x21] sm:$0xff]
        %v3679 = vld [vmem:[%s3512 + $0x31] sm:$0xff]
        %v3680 = vld [vmem:[%s3512 + $0x41] sm:$0xff]
        %v3681 = vld [vmem:[%s3512 + $0x51] sm:$0xff]
        %v3682 = vld [vmem:[%s3512 + $0x61] sm:$0xff]
        %v3683 = vld [vmem:[%s3512 + $0x71] sm:$0xff]
        %v3684 = vld [vmem:[#allocation5] sm:$0xff]
        %v3685 = vld [vmem:[#allocation5 + $0x8] sm:$0xff]
        %v3686 = vld [vmem:[#allocation5 + $0x10] sm:$0xff]
        %v3687 = vld [vmem:[#allocation5 + $0x18] sm:$0xff]
        %v3688 = vld [vmem:[#allocation5 + $0x20] sm:$0xff]
        %v3689 = vld [vmem:[#allocation5 + $0x28] sm:$0xff]
        %v3690 = vld [vmem:[#allocation5 + $0x30] sm:$0xff]
        %v3691 = vld [vmem:[#allocation5 + $0x38] sm:$0xff]
        %s3692 = scalar_lea.vmem %s4, 56
        %v3693 = vld [vmem:[%s3692] sm:$0xff]
        %v3695 = vsel %vm947, %v3676, 0
        %v3698 = vsel %vm947, %v3677, 0
        %v3701 = vsel %vm947, %v3678, 0
        %v3704 = vsel %vm947, %v3679, 0
        %v3707 = vsel %vm947, %v3680, 0
        %v3710 = vsel %vm947, %v3681, 0
        %v3713 = vsel %vm947, %v3682, 0
        %v3716 = vsel %vm947, %v3683, 0
        %3718 = vmatprep.subr.mxu0 0.0
        %3719 = vmatpush1.msra.mxu0 0.0
        %3720 = vmatprep.subr.mxu0 0.0
        %3721 = vmatpush1.msra.mxu0 0.0
        %3722 = vmatprep.subr.mxu0 0.0
        %3723 = vmatpush1.msra.mxu0 0.0
        %3724 = vmatprep.subr.mxu0 0.0
        %3725 = vmatpush1.msra.mxu0 0.0
        %3726 = vmatprep.subr.mxu0 0.0
        %3727 = vmatpush1.msra.mxu0 0.0
        %3728 = vmatprep.subr.mxu0 0.0
        %3729 = vmatpush1.msra.mxu0 0.0
        %3730 = vmatprep.subr.mxu0 0.0
        %3731 = vmatpush1.msra.mxu0 0.0
        %3732 = vmatprep.subr.mxu0 0.0
        %3733 = vmatpush1.msra.mxu0 0.0
        %3734 = vmatprep.subr.mxu0 0.0
        %3735 = vmatpush1.msra.mxu0 0.0
        %3736 = vmatprep.subr.mxu0 0.0
        %3737 = vmatpush1.msra.mxu0 0.0
        %3738 = vmatprep.subr.mxu0 0.0
        %3739 = vmatpush1.msra.mxu0 0.0
        %3740 = vmatprep.subr.mxu0 0.0
        %3741 = vmatpush1.msra.mxu0 0.0
        %3742 = vmatprep.subr.mxu0 0.0
        %3743 = vmatpush1.msra.mxu0 0.0
        %3744 = vmatprep.subr.mxu0 0.0
        %3745 = vmatpush1.msra.mxu0 0.0
        %3746 = vmatprep.subr.mxu0 0.0
        %3747 = vmatpush1.msra.mxu0 0.0
        %3748 = vmatprep.subr.mxu0 0.0
        %3749 = vmatpush1.msra.mxu0 %v3693
        %3750 = vmatprep.subr.mxu0 0.0
        %3751 = vmatpush2.msra.mxu0 0.0
        %3752 = vmatprep.subr.mxu0 0.0
        %3753 = vmatpush2.msra.mxu0 0.0
        %3754 = vmatprep.subr.mxu0 0.0
        %3755 = vmatpush2.msra.mxu0 0.0
        %3756 = vmatprep.subr.mxu0 0.0
        %3757 = vmatpush2.msra.mxu0 0.0
        %3758 = vmatprep.subr.mxu0 0.0
        %3759 = vmatpush2.msra.mxu0 0.0
        %3760 = vmatprep.subr.mxu0 0.0
        %3761 = vmatpush2.msra.mxu0 0.0
        %3762 = vmatprep.subr.mxu0 0.0
        %3763 = vmatpush2.msra.mxu0 0.0
        %3764 = vmatprep.subr.mxu0 0.0
        %3765 = vmatpush2.msra.mxu0 0.0
        %3766 = vmatprep.subr.mxu0 0.0
        %3767 = vmatpush2.msra.mxu0 0.0
        %3768 = vmatprep.subr.mxu0 0.0
        %3769 = vmatpush2.msra.mxu0 0.0
        %3770 = vmatprep.subr.mxu0 0.0
        %3771 = vmatpush2.msra.mxu0 0.0
        %3772 = vmatprep.subr.mxu0 0.0
        %3773 = vmatpush2.msra.mxu0 0.0
        %3774 = vmatprep.subr.mxu0 0.0
        %3775 = vmatpush2.msra.mxu0 0.0
        %3776 = vmatprep.subr.mxu0 0.0
        %3777 = vmatpush2.msra.mxu0 0.0
        %3778 = vmatprep.subr.mxu0 0.0
        %3779 = vmatpush2.msra.mxu0 0.0
        %3780 = vmatprep.subr.mxu0 0.0
        %3781 = vmatpush2.msra.mxu0 0.0
        %3782 = vmatprep.mubr.f32.mxu0 0.0
        %3783 = vmatmul.mubr.f32.gmra.mxu0 %v3695
        %v3784 = vpop.f32.mrf.mxu0
        %v3785 = vadd.f32 0.0, %v3784
        %v3786 = vpop.f32.mrf.mxu0
        %3787 = vmatprep.mubr.f32.mxu0 0.0
        %3788 = vmatmul.mubr.f32.gmra.mxu0 %v3698
        %v3789 = vpop.f32.mrf.mxu0
        %v3790 = vadd.f32 0.0, %v3789
        %v3791 = vpop.f32.mrf.mxu0
        %3792 = vmatprep.mubr.f32.mxu0 0.0
        %3793 = vmatmul.mubr.f32.gmra.mxu0 %v3701
        %v3794 = vpop.f32.mrf.mxu0
        %v3795 = vadd.f32 0.0, %v3794
        %v3796 = vpop.f32.mrf.mxu0
        %3797 = vmatprep.mubr.f32.mxu0 0.0
        %3798 = vmatmul.mubr.f32.gmra.mxu0 %v3704
        %v3799 = vpop.f32.mrf.mxu0
        %v3800 = vadd.f32 0.0, %v3799
        %v3801 = vpop.f32.mrf.mxu0
        %3802 = vmatprep.mubr.f32.mxu0 0.0
        %3803 = vmatmul.mubr.f32.gmra.mxu0 %v3707
        %v3804 = vpop.f32.mrf.mxu0
        %v3805 = vadd.f32 0.0, %v3804
        %v3806 = vpop.f32.mrf.mxu0
        %3807 = vmatprep.mubr.f32.mxu0 0.0
        %3808 = vmatmul.mubr.f32.gmra.mxu0 %v3710
        %v3809 = vpop.f32.mrf.mxu0
        %v3810 = vadd.f32 0.0, %v3809
        %v3811 = vpop.f32.mrf.mxu0
        %3812 = vmatprep.mubr.f32.mxu0 0.0
        %3813 = vmatmul.mubr.f32.gmra.mxu0 %v3713
        %v3814 = vpop.f32.mrf.mxu0
        %v3815 = vadd.f32 0.0, %v3814
        %v3816 = vpop.f32.mrf.mxu0
        %3817 = vmatprep.mubr.f32.mxu0 0.0
        %3818 = vmatmul.mubr.f32.gmra.mxu0 %v3716
        %v3819 = vpop.f32.mrf.mxu0
        %v3820 = vadd.f32 0.0, %v3819
        %v3821 = vpop.f32.mrf.mxu0
        %3822 = vdwg.mxu0
        %v3823 = vadd.f32 %v3684, %v3785
        %v3824 = vadd.f32 %v3685, %v3790
        %v3825 = vadd.f32 %v3686, %v3795
        %v3826 = vadd.f32 %v3687, %v3800
        %v3827 = vadd.f32 %v3688, %v3805
        %v3828 = vadd.f32 %v3689, %v3810
        %v3829 = vadd.f32 %v3690, %v3815
        %v3830 = vadd.f32 %v3691, %v3820
        %3831 = vst.msk [vmem:[#allocation5] sm:$0xff] %vm947, %v3823
        %3832 = vst.msk [vmem:[#allocation5 + $0x8] sm:$0xff] %vm947, %v3824
        %3833 = vst.msk [vmem:[#allocation5 + $0x10] sm:$0xff] %vm947, %v3825
        %3834 = vst.msk [vmem:[#allocation5 + $0x18] sm:$0xff] %vm947, %v3826
        %3835 = vst.msk [vmem:[#allocation5 + $0x20] sm:$0xff] %vm947, %v3827
        %3836 = vst.msk [vmem:[#allocation5 + $0x28] sm:$0xff] %vm947, %v3828
        %3837 = vst.msk [vmem:[#allocation5 + $0x30] sm:$0xff] %vm947, %v3829
        %3838 = vst.msk [vmem:[#allocation5 + $0x38] sm:$0xff] %vm947, %v3830
        %v3839 = vld [vmem:[%s3512 + $0x2] sm:$0xff]
        %v3840 = vld [vmem:[%s3512 + $0x12] sm:$0xff]
        %v3841 = vld [vmem:[%s3512 + $0x22] sm:$0xff]
        %v3842 = vld [vmem:[%s3512 + $0x32] sm:$0xff]
        %v3843 = vld [vmem:[%s3512 + $0x42] sm:$0xff]
        %v3844 = vld [vmem:[%s3512 + $0x52] sm:$0xff]
        %v3845 = vld [vmem:[%s3512 + $0x62] sm:$0xff]
        %v3846 = vld [vmem:[%s3512 + $0x72] sm:$0xff]
        %v3847 = vld [vmem:[#allocation5] sm:$0xff]
        %v3848 = vld [vmem:[#allocation5 + $0x8] sm:$0xff]
        %v3849 = vld [vmem:[#allocation5 + $0x10] sm:$0xff]
        %v3850 = vld [vmem:[#allocation5 + $0x18] sm:$0xff]
        %v3851 = vld [vmem:[#allocation5 + $0x20] sm:$0xff]
        %v3852 = vld [vmem:[#allocation5 + $0x28] sm:$0xff]
        %v3853 = vld [vmem:[#allocation5 + $0x30] sm:$0xff]
        %v3854 = vld [vmem:[#allocation5 + $0x38] sm:$0xff]
        %s3855 = scalar_lea.vmem %s4, 64
        %v3856 = vld [vmem:[%s3855] sm:$0xff]
        %v3858 = vsel %vm947, %v3839, 0
        %v3861 = vsel %vm947, %v3840, 0
        %v3864 = vsel %vm947, %v3841, 0
        %v3867 = vsel %vm947, %v3842, 0
        %v3870 = vsel %vm947, %v3843, 0
        %v3873 = vsel %vm947, %v3844, 0
        %v3876 = vsel %vm947, %v3845, 0
        %v3879 = vsel %vm947, %v3846, 0
        %3881 = vmatprep.subr.mxu0 0.0
        %3882 = vmatpush1.msra.mxu0 0.0
        %3883 = vmatprep.subr.mxu0 0.0
        %3884 = vmatpush1.msra.mxu0 0.0
        %3885 = vmatprep.subr.mxu0 0.0
        %3886 = vmatpush1.msra.mxu0 0.0
        %3887 = vmatprep.subr.mxu0 0.0
        %3888 = vmatpush1.msra.mxu0 0.0
        %3889 = vmatprep.subr.mxu0 0.0
        %3890 = vmatpush1.msra.mxu0 0.0
        %3891 = vmatprep.subr.mxu0 0.0
        %3892 = vmatpush1.msra.mxu0 0.0
        %3893 = vmatprep.subr.mxu0 0.0
        %3894 = vmatpush1.msra.mxu0 0.0
        %3895 = vmatprep.subr.mxu0 0.0
        %3896 = vmatpush1.msra.mxu0 0.0
        %3897 = vmatprep.subr.mxu0 0.0
        %3898 = vmatpush1.msra.mxu0 0.0
        %3899 = vmatprep.subr.mxu0 0.0
        %3900 = vmatpush1.msra.mxu0 0.0
        %3901 = vmatprep.subr.mxu0 0.0
        %3902 = vmatpush1.msra.mxu0 0.0
        %3903 = vmatprep.subr.mxu0 0.0
        %3904 = vmatpush1.msra.mxu0 0.0
        %3905 = vmatprep.subr.mxu0 0.0
        %3906 = vmatpush1.msra.mxu0 0.0
        %3907 = vmatprep.subr.mxu0 0.0
        %3908 = vmatpush1.msra.mxu0 0.0
        %3909 = vmatprep.subr.mxu0 0.0
        %3910 = vmatpush1.msra.mxu0 0.0
        %3911 = vmatprep.subr.mxu0 0.0
        %3912 = vmatpush1.msra.mxu0 %v3856
        %3913 = vmatprep.subr.mxu0 0.0
        %3914 = vmatpush2.msra.mxu0 0.0
        %3915 = vmatprep.subr.mxu0 0.0
        %3916 = vmatpush2.msra.mxu0 0.0
        %3917 = vmatprep.subr.mxu0 0.0
        %3918 = vmatpush2.msra.mxu0 0.0
        %3919 = vmatprep.subr.mxu0 0.0
        %3920 = vmatpush2.msra.mxu0 0.0
        %3921 = vmatprep.subr.mxu0 0.0
        %3922 = vmatpush2.msra.mxu0 0.0
        %3923 = vmatprep.subr.mxu0 0.0
        %3924 = vmatpush2.msra.mxu0 0.0
        %3925 = vmatprep.subr.mxu0 0.0
        %3926 = vmatpush2.msra.mxu0 0.0
        %3927 = vmatprep.subr.mxu0 0.0
        %3928 = vmatpush2.msra.mxu0 0.0
        %3929 = vmatprep.subr.mxu0 0.0
        %3930 = vmatpush2.msra.mxu0 0.0
        %3931 = vmatprep.subr.mxu0 0.0
        %3932 = vmatpush2.msra.mxu0 0.0
        %3933 = vmatprep.subr.mxu0 0.0
        %3934 = vmatpush2.msra.mxu0 0.0
        %3935 = vmatprep.subr.mxu0 0.0
        %3936 = vmatpush2.msra.mxu0 0.0
        %3937 = vmatprep.subr.mxu0 0.0
        %3938 = vmatpush2.msra.mxu0 0.0
        %3939 = vmatprep.subr.mxu0 0.0
        %3940 = vmatpush2.msra.mxu0 0.0
        %3941 = vmatprep.subr.mxu0 0.0
        %3942 = vmatpush2.msra.mxu0 0.0
        %3943 = vmatprep.subr.mxu0 0.0
        %3944 = vmatpush2.msra.mxu0 0.0
        %3945 = vmatprep.mubr.f32.mxu0 0.0
        %3946 = vmatmul.mubr.f32.gmra.mxu0 %v3858
        %v3947 = vpop.f32.mrf.mxu0
        %v3948 = vadd.f32 0.0, %v3947
        %v3949 = vpop.f32.mrf.mxu0
        %3950 = vmatprep.mubr.f32.mxu0 0.0
        %3951 = vmatmul.mubr.f32.gmra.mxu0 %v3861
        %v3952 = vpop.f32.mrf.mxu0
        %v3953 = vadd.f32 0.0, %v3952
        %v3954 = vpop.f32.mrf.mxu0
        %3955 = vmatprep.mubr.f32.mxu0 0.0
        %3956 = vmatmul.mubr.f32.gmra.mxu0 %v3864
        %v3957 = vpop.f32.mrf.mxu0
        %v3958 = vadd.f32 0.0, %v3957
        %v3959 = vpop.f32.mrf.mxu0
        %3960 = vmatprep.mubr.f32.mxu0 0.0
        %3961 = vmatmul.mubr.f32.gmra.mxu0 %v3867
        %v3962 = vpop.f32.mrf.mxu0
        %v3963 = vadd.f32 0.0, %v3962
        %v3964 = vpop.f32.mrf.mxu0
        %3965 = vmatprep.mubr.f32.mxu0 0.0
        %3966 = vmatmul.mubr.f32.gmra.mxu0 %v3870
        %v3967 = vpop.f32.mrf.mxu0
        %v3968 = vadd.f32 0.0, %v3967
        %v3969 = vpop.f32.mrf.mxu0
        %3970 = vmatprep.mubr.f32.mxu0 0.0
        %3971 = vmatmul.mubr.f32.gmra.mxu0 %v3873
        %v3972 = vpop.f32.mrf.mxu0
        %v3973 = vadd.f32 0.0, %v3972
        %v3974 = vpop.f32.mrf.mxu0
        %3975 = vmatprep.mubr.f32.mxu0 0.0
        %3976 = vmatmul.mubr.f32.gmra.mxu0 %v3876
        %v3977 = vpop.f32.mrf.mxu0
        %v3978 = vadd.f32 0.0, %v3977
        %v3979 = vpop.f32.mrf.mxu0
        %3980 = vmatprep.mubr.f32.mxu0 0.0
        %3981 = vmatmul.mubr.f32.gmra.mxu0 %v3879
        %v3982 = vpop.f32.mrf.mxu0
        %v3983 = vadd.f32 0.0, %v3982
        %v3984 = vpop.f32.mrf.mxu0
        %3985 = vdwg.mxu0
        %v3986 = vadd.f32 %v3847, %v3948
        %v3987 = vadd.f32 %v3848, %v3953
        %v3988 = vadd.f32 %v3849, %v3958
        %v3989 = vadd.f32 %v3850, %v3963
        %v3990 = vadd.f32 %v3851, %v3968
        %v3991 = vadd.f32 %v3852, %v3973
        %v3992 = vadd.f32 %v3853, %v3978
        %v3993 = vadd.f32 %v3854, %v3983
        %3994 = vst.msk [vmem:[#allocation5] sm:$0xff] %vm947, %v3986
        %3995 = vst.msk [vmem:[#allocation5 + $0x8] sm:$0xff] %vm947, %v3987
        %3996 = vst.msk [vmem:[#allocation5 + $0x10] sm:$0xff] %vm947, %v3988
        %3997 = vst.msk [vmem:[#allocation5 + $0x18] sm:$0xff] %vm947, %v3989
        %3998 = vst.msk [vmem:[#allocation5 + $0x20] sm:$0xff] %vm947, %v3990
        %3999 = vst.msk [vmem:[#allocation5 + $0x28] sm:$0xff] %vm947, %v3991
        %4000 = vst.msk [vmem:[#allocation5 + $0x30] sm:$0xff] %vm947, %v3992
        %4001 = vst.msk [vmem:[#allocation5 + $0x38] sm:$0xff] %vm947, %v3993
        %v4002 = vld [vmem:[#allocation5] sm:$0xff]
        %v4003 = vld [vmem:[#allocation5 + $0x8] sm:$0xff]
        %v4004 = vld [vmem:[#allocation5 + $0x10] sm:$0xff]
        %v4005 = vld [vmem:[#allocation5 + $0x18] sm:$0xff]
        %v4006 = vld [vmem:[#allocation5 + $0x20] sm:$0xff]
        %v4007 = vld [vmem:[#allocation5 + $0x28] sm:$0xff]
        %v4008 = vld [vmem:[#allocation5 + $0x30] sm:$0xff]
        %v4009 = vld [vmem:[#allocation5 + $0x38] sm:$0xff]
        %v4010 = vld [vmem:[%s5] sm:$0x1]
        %v4012 = vlaneseq
        %v4013 = vshrl.u32 %v4012, 7
        %v4014 = vsub.s32 0, %v4013
        %v4015 = vrot.slane %v4010, %v4014
        %v4017 = vmul.f32 %v4002, %v4015
        %v4018 = vmul.f32 %v4003, %v4015
        %v4019 = vmul.f32 %v4004, %v4015
        %v4020 = vmul.f32 %v4005, %v4015
        %v4021 = vmul.f32 %v4006, %v4015
        %v4022 = vmul.f32 %v4007, %v4015
        %v4023 = vmul.f32 %v4008, %v4015
        %v4024 = vmul.f32 %v4009, %v4015
        %v4025 = vld [vmem:[%s6] sm:$0x1]
        %v4027 = vlaneseq
        %v4028 = vshrl.u32 %v4027, 7
        %v4029 = vsub.s32 0, %v4028
        %v4030 = vrot.slane %v4025, %v4029
        %v4032 = vadd.f32 %v4017, %v4030
        %v4033 = vadd.f32 %v4018, %v4030
        %v4034 = vadd.f32 %v4019, %v4030
        %v4035 = vadd.f32 %v4020, %v4030
        %v4036 = vadd.f32 %v4021, %v4030
        %v4037 = vadd.f32 %v4022, %v4030
        %v4038 = vadd.f32 %v4023, %v4030
        %v4039 = vadd.f32 %v4024, %v4030
        %v4040 = vmax.f32 %v4032, 0.0
        %v4041 = vmax.f32 %v4033, 0.0
        %v4042 = vmax.f32 %v4034, 0.0
        %v4043 = vmax.f32 %v4035, 0.0
        %v4044 = vmax.f32 %v4036, 0.0
        %v4045 = vmax.f32 %v4037, 0.0
        %v4046 = vmax.f32 %v4038, 0.0
        %v4047 = vmax.f32 %v4039, 0.0
        %4048 = vst.msk [vmem:[%s271] sm:$0xff] %vm947, %v4040
        %4049 = vst.msk [vmem:[%s271 + $0x8] sm:$0xff] %vm947, %v4041
        %4050 = vst.msk [vmem:[%s271 + $0x10] sm:$0xff] %vm947, %v4042
        %4051 = vst.msk [vmem:[%s271 + $0x18] sm:$0xff] %vm947, %v4043
        %4052 = vst.msk [vmem:[%s271 + $0x20] sm:$0xff] %vm947, %v4044
        %4053 = vst.msk [vmem:[%s271 + $0x28] sm:$0xff] %vm947, %v4045
        %4054 = vst.msk [vmem:[%s271 + $0x30] sm:$0xff] %vm947, %v4046
        %4055 = vst.msk [vmem:[%s271 + $0x38] sm:$0xff] %vm947, %v4047
        %s4056 = sand.u32 %s181, 1
        %s4057 = scalar_lea.sflag [#allocation7], %s4056
        %s4058 = sand.u32 %s181, 1
        %s4059 = smul.addr %s4058, 64
        %s4060 = scalar_lea.vmem [#allocation6], %s4059
        // Predicated region
        $region49: #{tpu_custom_call.1} parent=47 // pred_check
          %p4061 = pneg %p191
        $region50: #{tpu_custom_call.1} parent=47 // pred_check_branch
          %4063 = sbr.rel (%p4061) target = $region52
        $region51: #{tpu_custom_call.1} parent=47 // pred_region
          %s4065 = ssub.s32 1024, 1024
          %4066 = vsyncadd %s4057, %s4065
          %s4067 = smul.addr %s21, 8
          %s4068 = smul.addr %s4067, 128
          %s4069 = scalar_lea.hbm %s7, %s4068
          %s4070 = sshll.u32 %s4060, 4
          %s4071 = int_to_ptr.vmem [resolvable:$true] %s4070
          %4076 = dma.vmem_to_hbm [thread:$0]  %s4071, 1024, %s4069, %s4057, 128, 128, 8
        $region52: #{tpu_custom_call.1} parent=47 // pred_fallthru
          _
      $region48: #{tpu_custom_call.1} parent=5 // pred_fallthru
        _
      %p4077 = scmp.le.s32.totalorder 2, %s16
      // Predicated region
      $region53: #{tpu_custom_call.1} parent=5 // pred_check
        %p4078 = pneg %p4077
      $region54: #{tpu_custom_call.1} parent=5 // pred_check_branch
        %4080 = sbr.rel (%p4078) target = $region56
      $region55: #{tpu_custom_call.1} parent=5 // pred_region
        %s4081 = ssub.s32 %s16, 2
        // Predicated region
        $region57: #{tpu_custom_call.1} parent=55 // pred_check
          %p4082 = pneg %p197
        $region58: #{tpu_custom_call.1} parent=55 // pred_check_branch
          %4084 = sbr.rel (%p4082) target = $region60
        $region59: #{tpu_custom_call.1} parent=55 // pred_region
          %s4085 = sand.u32 %s182, 1
          %s4086 = scalar_lea.sflag [#allocation7], %s4085
          %s4087 = sand.u32 %s182, 1
          %s4088 = smul.addr %s4087, 64
          %s4089 = scalar_lea.vmem [#allocation6], %s4088
          %4090 = dma.done %s4086, 1024
        $region60: #{tpu_custom_call.1} parent=55 // pred_fallthru
          _
      $region56: #{tpu_custom_call.1} parent=5 // pred_fallthru
        _
    $region6: #{tpu_custom_call.1} parent=1 // loop_footer
      %s20 = sadd.s32 1, %s16
    $region7: #{tpu_custom_call.1} parent=1 // loop_footer_branch
      %15 = sbr.rel target = $region3
    $region8: #{tpu_custom_call.1} parent=1 // loop_exit
      _
    %4091 = vsyncpa [#allocation7], 1
    %s4092 = scalar_lea.sflag [#allocation7], 1
    %4093 = vsyncpa %s4092, 1

</llo_original>
